<compile_context>
chip_gen: v7x
topology: tpu7x:2x2x1
jax: 0.10.0
libtpu: 0.0.40
codegen_flags: <defaults>
</compile_context>

<pallas_src>
import math
import jax
import jax.numpy as jnp
from jax.experimental import pallas as pl
from jax.experimental.pallas import tpu as pltpu

# ------------------------- static configuration -------------------------
IN_DIM   = 4
HIDDEN   = 32                       # args.hidden  -> d_model
OUT_DIM  = 3
N_LAYERS = 2                        # args.layer
BATCH    = 2
SEQ      = 8
D_STATE  = 16                       # MambaConfig default
EXPAND   = 2                        # MambaConfig default expand_factor
D_CONV   = 4                        # MambaConfig default
D_INNER  = EXPAND * HIDDEN          # 64
DT_RANK  = math.ceil(HIDDEN / 16)   # 2
RMS_EPS  = 1e-5
ROWS     = BATCH * SEQ              # 16


def _sigmoid(x):
    return 1.0 / (1.0 + jnp.exp(-x))


def _silu(x):
    return x * _sigmoid(x)


def _softplus(x):
    return jnp.where(x > 20.0, x, jnp.log(1.0 + jnp.exp(jnp.minimum(x, 20.0))))


# ------------------------------- kernel --------------------------------
def net_kernel(x_ref, w_in_ref, b_in_ref,
               rms_w_ref, in_proj_w_ref, conv_w_ref, conv_b_ref,
               xproj_w_ref, dt_b_ref, a_t_ref, d_ref, out_proj_w_ref,
               w_out_ref, b_out_ref,
               o_ref):
    R = ROWS
    x = x_ref[...]                                                    # (R, IN_DIM)
    # input projection: Linear(in_dim, hidden)
    h = jnp.dot(x, w_in_ref[...], preferred_element_type=jnp.float32) + b_in_ref[...]

    # position-within-sequence (rows are ordered (batch, t)); used to keep the
    # depthwise conv causal and per-sequence after batch folding.
    pos = jax.lax.broadcasted_iota(jnp.int32, (R, D_INNER), 0) % SEQ

    for l in range(N_LAYERS):                                         # static unroll
        residual = h
        # ----- RMSNorm (per row, exact under batch folding) -----
        var = jnp.mean(h * h, axis=-1, keepdims=True)
        xn = h * jax.lax.rsqrt(var + RMS_EPS) * rms_w_ref[l:l + 1, :]
        # ----- in_proj -> split into x / z -----
        xz = jnp.dot(xn, in_proj_w_ref[l], preferred_element_type=jnp.float32)
        xin, z = xz[:, :D_INNER], xz[:, D_INNER:]
        # ----- causal depthwise conv1d, fully in registers -----
        wc = conv_w_ref[l]                                            # (D_CONV, D_INNER)
        acc = xin * wc[D_CONV - 1:D_CONV, :]                          # shift 0 tap
        for s in range(1, D_CONV):
            shifted = jnp.concatenate(
                [jnp.zeros((s, D_INNER), jnp.float32), xin[:R - s, :]], axis=0)
            shifted = jnp.where(pos >= s, shifted, 0.0)               # no cross-batch leak
            acc = acc + shifted * wc[D_CONV - 1 - s:D_CONV - s, :]
        xc = _silu(acc + conv_b_ref[l:l + 1, :])                      # (R, D_INNER)
        # ----- fused x_proj (+ dt_proj): one matmul -> delta, B, C -----
        dbc = jnp.dot(xc, xproj_w_ref[l], preferred_element_type=jnp.float32)
        delta = _softplus(dbc[:, :D_INNER] + dt_b_ref[l:l + 1, :])    # (R, D_INNER)
        Bm = dbc[:, D_INNER:D_INNER + D_STATE]                        # (R, D_STATE)
        Cm = dbc[:, D_INNER + D_STATE:]                               # (R, D_STATE)

        a_t = a_t_ref[l]                                              # (D_STATE, D_INNER), = A^T
        dx = delta * xc                                               # (R, D_INNER)

        # ----- selective scan: sequential in t, batched EUP/VPU prep per batch -----
        y_parts = []
        for b in range(BATCH):                                        # static unroll
            sl = slice(b * SEQ, (b + 1) * SEQ)
            delta_b = delta[sl, :]                                    # (SEQ, D_INNER)
            dx_b = dx[sl, :]
            Bm_b = Bm[sl, :]                                          # (SEQ, D_STATE)
            Cm_b = Cm[sl, :]
            # all timesteps at once (one big exp / multiply):
            dA = jnp.exp(delta_b[:, None, :] * a_t[None, :, :])       # (SEQ, D_STATE, D_INNER)
            dBx = dx_b[:, None, :] * Bm_b[:, :, None]                 # (SEQ, D_STATE, D_INNER)
            Cc = Cm_b[:, :, None]                                     # (SEQ, D_STATE, 1)

            h_state = jnp.zeros((D_STATE, D_INNER), jnp.float32)
            ys = []
            for t in range(SEQ):                                      # static unroll
                h_state = dA[t] * h_state + dBx[t]
                ys.append(jnp.sum(h_state * Cc[t], axis=0, keepdims=True))  # (1, D_INNER)
            y_parts.append(jnp.concatenate(ys, axis=0))               # (SEQ, D_INNER)
        y = jnp.concatenate(y_parts, axis=0)                          # (R, D_INNER)
        y = y + d_ref[l:l + 1, :] * xc
        # ----- gate + out_proj + residual -----
        y = y * _silu(z)
        h = jnp.dot(y, out_proj_w_ref[l],
                    preferred_element_type=jnp.float32) + residual

    # output projection + sigmoid
    out = jnp.dot(h, w_out_ref[...], preferred_element_type=jnp.float32) + b_out_ref[...]
    o_ref[...] = _sigmoid(out)


# ------------------------------ wrapper ---------------------------------
def net_forward(x, params):
    (w_in, b_in, rms_w, in_proj_w, conv_w, conv_b, x_proj_w,
     dt_w, dt_b, a_log, d_vec, out_proj_w, w_out, b_out) = params
    B, S, _ = x.shape

    # host-side precompute: fuse dt_proj into x_proj (exact), and A = -exp(A_log)^T
    xproj_fused = jnp.concatenate(
        [jnp.einsum('lkr,lrd->lkd', x_proj_w[:, :, :DT_RANK], dt_w),
         x_proj_w[:, :, DT_RANK:]], axis=-1)                          # (L, D_INNER, D_INNER+2*D_STATE)
    a_t = -jnp.exp(jnp.transpose(a_log, (0, 2, 1)))                   # (L, D_STATE, D_INNER)

    x2 = x.reshape(B * S, IN_DIM)

    def full(arr):
        nd = arr.ndim
        return pl.BlockSpec(arr.shape, lambda i, _nd=nd: (0,) * _nd)

    out = pl.pallas_call(
        net_kernel,
        out_shape=jax.ShapeDtypeStruct((B * S, OUT_DIM), jnp.float32),
        grid_spec=pltpu.PrefetchScalarGridSpec(
            num_scalar_prefetch=0,
            grid=(1,),
            in_specs=[
                full(x2), full(w_in), full(b_in), full(rms_w), full(in_proj_w),
                full(conv_w), full(conv_b), full(xproj_fused), full(dt_b),
                full(a_t), full(d_vec), full(out_proj_w), full(w_out), full(b_out),
            ],
            out_specs=pl.BlockSpec((B * S, OUT_DIM), lambda i: (0, 0)),
        ),
        compiler_params=pltpu.CompilerParams(dimension_semantics=("arbitrary",)),
    )(x2, w_in, b_in, rms_w, in_proj_w, conv_w, conv_b,
      xproj_fused, dt_b, a_t, d_vec, out_proj_w, w_out, b_out)
    return out.reshape(-1)                      # torch .flatten()


# --------------------------- pure-JAX reference ---------------------------
def net_reference(x, params):
    (w_in, b_in, rms_w, in_proj_w, conv_w, conv_b, x_proj_w,
     dt_w, dt_b, a_log, d_vec, out_proj_w, w_out, b_out) = params
    h = x @ w_in + b_in
    for l in range(N_LAYERS):
        residual = h
        xn = h * jax.lax.rsqrt(jnp.mean(h * h, -1, keepdims=True) + RMS_EPS) * rms_w[l]
        xz = xn @ in_proj_w[l]
        xin, z = xz[..., :D_INNER], xz[..., D_INNER:]
        xp = jnp.pad(xin, ((0, 0), (D_CONV - 1, 0), (0, 0)))
        xc = sum(xp[:, k:k + SEQ, :] * conv_w[l, k] for k in range(D_CONV)) + conv_b[l]
        xc = _silu(xc)
        dbc = xc @ x_proj_w[l]
        delta_in = dbc[..., :DT_RANK]
        Bm = dbc[..., DT_RANK:DT_RANK + D_STATE]
        Cm = dbc[..., DT_RANK + D_STATE:]
        delta = _softplus(delta_in @ dt_w[l] + dt_b[l])
        A = -jnp.exp(a_log[l])
        dA = jnp.exp(delta[..., None] * A)
        dBx = delta[..., None] * Bm[:, :, None, :] * xc[..., None]
        hst = jnp.zeros((x.shape[0], D_INNER, D_STATE), jnp.float32)
        ys = []
        for t in range(SEQ):
            hst = dA[:, t] * hst + dBx[:, t]
            ys.append(jnp.sum(hst * Cm[:, t][:, None, :], axis=-1))
        y = jnp.stack(ys, axis=1) + d_vec[l] * xc
        y = y * _silu(z)
        h = y @ out_proj_w[l] + residual
    out = _sigmoid(h @ w_out + b_out)
    return out.reshape(-1)


# ------------------------- deterministic params --------------------------
def init_params(key):
    ks = jax.random.split(key, 8)

    def lin(k, fan_in, shape):
        return jax.random.normal(k, shape, jnp.float32) / jnp.sqrt(float(fan_in))

    w_in = lin(ks[0], IN_DIM, (IN_DIM, HIDDEN))
    b_in = jnp.zeros((1, HIDDEN), jnp.float32)
    rms_w = jnp.ones((N_LAYERS, HIDDEN), jnp.float32)
    in_proj_w = lin(ks[1], HIDDEN, (N_LAYERS, HIDDEN, 2 * D_INNER))
    conv_w = lin(ks[2], D_CONV, (N_LAYERS, D_CONV, D_INNER))
    conv_b = jnp.zeros((N_LAYERS, D_INNER), jnp.float32)
    x_proj_w = lin(ks[3], D_INNER, (N_LAYERS, D_INNER, DT_RANK + 2 * D_STATE))
    dt_w = lin(ks[4], DT_RANK, (N_LAYERS, DT_RANK, D_INNER))
    # standard Mamba dt-bias init: inverse softplus of dt ~ U[1e-3, 1e-1] (log-uniform)
    dt = jnp.exp(jax.random.uniform(ks[5], (N_LAYERS, D_INNER), jnp.float32) *
                 (jnp.log(0.1) - jnp.log(1e-3)) + jnp.log(1e-3))
    dt_b = dt + jnp.log(-jnp.expm1(-dt))
    a_log = jnp.log(jnp.broadcast_to(
        jnp.arange(1, D_STATE + 1, dtype=jnp.float32), (N_LAYERS, D_INNER, D_STATE)))
    d_vec = jnp.ones((N_LAYERS, D_INNER), jnp.float32)
    out_proj_w = lin(ks[6], D_INNER, (N_LAYERS, D_INNER, HIDDEN))
    w_out = lin(ks[7], HIDDEN, (HIDDEN, OUT_DIM))
    b_out = jnp.zeros((1, OUT_DIM), jnp.float32)
    return (w_in, b_in, rms_w, in_proj_w, conv_w, conv_b, x_proj_w,
            dt_w, dt_b, a_log, d_vec, out_proj_w, w_out, b_out)


if __name__ == "__main__":
    key = jax.random.PRNGKey(0)
    kx, kp = jax.random.split(key)
    x = jax.random.normal(kx, (BATCH, SEQ, IN_DIM), jnp.float32)
    params = init_params(kp)

    out = jax.block_until_ready(jax.jit(net_forward)(x, params))
    ref = jax.block_until_ready(net_reference(x, params))

    assert out.shape == (BATCH * SEQ * OUT_DIM,), out.shape
    if not bool(jnp.allclose(out, ref, atol=2e-3, rtol=2e-3)):
        raise AssertionError("Pallas kernel disagrees with JAX reference")
    print("KERNEL_OK")
</pallas_src>

<mosaic_0001>
module attributes {stable_mosaic.version = 11 : i64} {
  func.func @net_kernel(%arg0: i32, %arg1: memref<16x4xf32, #tpu.memory_space<vmem>>, %arg2: memref<4x32xf32, #tpu.memory_space<vmem>>, %arg3: memref<1x32xf32, #tpu.memory_space<vmem>>, %arg4: memref<2x32xf32, #tpu.memory_space<vmem>>, %arg5: memref<2x32x128xf32, #tpu.memory_space<vmem>>, %arg6: memref<2x4x64xf32, #tpu.memory_space<vmem>>, %arg7: memref<2x64xf32, #tpu.memory_space<vmem>>, %arg8: memref<2x64x96xf32, #tpu.memory_space<vmem>>, %arg9: memref<2x64xf32, #tpu.memory_space<vmem>>, %arg10: memref<2x16x64xf32, #tpu.memory_space<vmem>>, %arg11: memref<2x64xf32, #tpu.memory_space<vmem>>, %arg12: memref<2x64x32xf32, #tpu.memory_space<vmem>>, %arg13: memref<32x3xf32, #tpu.memory_space<vmem>>, %arg14: memref<1x3xf32, #tpu.memory_space<vmem>>, %arg15: memref<16x3xf32, #tpu.memory_space<vmem>>) attributes {dimension_semantics = [#tpu.dimension_semantics<arbitrary>], iteration_bounds = array<i64: 1>, scalar_prefetch = 0 : i64, scratch_operands = 0 : i64, tpu.core_type = #tpu.core_type<tc>, window_params = [{pipeline_mode = #tpu.pipeline_mode<synchronous>, transform_indices = @transform_0, window_bounds = array<i64: 16, 4>}, {pipeline_mode = #tpu.pipeline_mode<synchronous>, transform_indices = @transform_1, window_bounds = array<i64: 4, 32>}, {pipeline_mode = #tpu.pipeline_mode<synchronous>, transform_indices = @transform_2, window_bounds = array<i64: 1, 32>}, {pipeline_mode = #tpu.pipeline_mode<synchronous>, transform_indices = @transform_3, window_bounds = array<i64: 2, 32>}, {pipeline_mode = #tpu.pipeline_mode<synchronous>, transform_indices = @transform_4, window_bounds = array<i64: 2, 32, 128>}, {pipeline_mode = #tpu.pipeline_mode<synchronous>, transform_indices = @transform_5, window_bounds = array<i64: 2, 4, 64>}, {pipeline_mode = #tpu.pipeline_mode<synchronous>, transform_indices = @transform_6, window_bounds = array<i64: 2, 64>}, {pipeline_mode = #tpu.pipeline_mode<synchronous>, transform_indices = @transform_7, window_bounds = array<i64: 2, 64, 96>}, {pipeline_mode = #tpu.pipeline_mode<synchronous>, transform_indices = @transform_8, window_bounds = array<i64: 2, 64>}, {pipeline_mode = #tpu.pipeline_mode<synchronous>, transform_indices = @transform_9, window_bounds = array<i64: 2, 16, 64>}, {pipeline_mode = #tpu.pipeline_mode<synchronous>, transform_indices = @transform_10, window_bounds = array<i64: 2, 64>}, {pipeline_mode = #tpu.pipeline_mode<synchronous>, transform_indices = @transform_11, window_bounds = array<i64: 2, 64, 32>}, {pipeline_mode = #tpu.pipeline_mode<synchronous>, transform_indices = @transform_12, window_bounds = array<i64: 32, 3>}, {pipeline_mode = #tpu.pipeline_mode<synchronous>, transform_indices = @transform_13, window_bounds = array<i64: 1, 3>}, {pipeline_mode = #tpu.pipeline_mode<synchronous>, transform_indices = @transform_14, window_bounds = array<i64: 16, 3>}]} {
    %c0 = arith.constant 0 : index
    %c0_0 = arith.constant 0 : index
    %0 = vector.load %arg1[%c0, %c0_0] : memref<16x4xf32, #tpu.memory_space<vmem>>, vector<16x4xf32>
    %c0_1 = arith.constant 0 : index
    %c0_2 = arith.constant 0 : index
    %1 = vector.load %arg2[%c0_1, %c0_2] : memref<4x32xf32, #tpu.memory_space<vmem>>, vector<4x32xf32>
    %cst = arith.constant dense<0.000000e+00> : vector<16x32xf32>
    %2 = tpu.matmul %0, %1, %cst {dimension_numbers = #tpu.dot_dimension_numbers<[1], [0], [0], [1], [0, 0, 1, 1], [], []>} : vector<16x4xf32>, vector<4x32xf32>, vector<16x32xf32> -> vector<16x32xf32>
    %c0_3 = arith.constant 0 : index
    %c0_4 = arith.constant 0 : index
    %3 = vector.load %arg3[%c0_3, %c0_4] : memref<1x32xf32, #tpu.memory_space<vmem>>, vector<1x32xf32>
    %4 = vector.broadcast %3 : vector<1x32xf32> to vector<16x32xf32>
    %5 = arith.addf %2, %4 : vector<16x32xf32>
    %6 = tpu.iota {dimensions = array<i32: 0>} : vector<16x64xi32>
    %c8_i32 = arith.constant 8 : i32
    %c0_i32 = arith.constant 0 : i32
    %7 = arith.cmpi eq, %c8_i32, %c0_i32 : i32
    %c1_i32 = arith.constant 1 : i32
    %8 = arith.select %7, %c1_i32, %c8_i32 : i32
    %9 = vector.broadcast %8 : i32 to vector<16x64xi32>
    %10 = arith.remsi %6, %9 : vector<16x64xi32>
    %c0_i32_5 = arith.constant 0 : i32
    %11 = vector.broadcast %c0_i32_5 : i32 to vector<16x64xi32>
    %12 = arith.cmpi ne, %10, %11 : vector<16x64xi32>
    %c0_i32_6 = arith.constant 0 : i32
    %13 = vector.broadcast %c0_i32_6 : i32 to vector<16x64xi32>
    %14 = arith.cmpi slt, %10, %13 : vector<16x64xi32>
    %c0_i32_7 = arith.constant 0 : i32
    %15 = arith.cmpi slt, %8, %c0_i32_7 : i32
    %16 = vector.broadcast %15 : i1 to vector<16x64xi1>
    %17 = vector.broadcast %16 : vector<16x64xi1> to vector<16x64xi1>
    %18 = arith.xori %14, %17 : vector<16x64xi1>
    %19 = arith.andi %18, %12 : vector<16x64xi1>
    %20 = vector.broadcast %8 : i32 to vector<16x64xi32>
    %21 = arith.addi %10, %20 : vector<16x64xi32>
    %22 = arith.select %19, %21, %10 : vector<16x64xi1>, vector<16x64xi32>
    %23 = arith.mulf %5, %5 : vector<16x32xf32>
    %cst_8 = arith.constant dense<0.000000e+00> : vector<16xf32>
    %24 = vector.multi_reduction <add>, %23, %cst_8 [1] : vector<16x32xf32> to vector<16xf32>
    %25 = vector.shape_cast %24 : vector<16xf32> to vector<16x1xf32>
    %cst_9 = arith.constant 3.200000e+01 : f32
    %26 = vector.broadcast %cst_9 : f32 to vector<16x1xf32>
    %27 = arith.divf %25, %26 : vector<16x1xf32>
    %cst_10 = arith.constant 9.99999974E-6 : f32
    %28 = vector.broadcast %cst_10 : f32 to vector<16x1xf32>
    %29 = arith.addf %27, %28 : vector<16x1xf32>
    %30 = math.rsqrt %29 : vector<16x1xf32>
    %31 = vector.broadcast %30 : vector<16x1xf32> to vector<16x32xf32>
    %32 = arith.mulf %5, %31 : vector<16x32xf32>
    %c0_11 = arith.constant 0 : index
    %c0_12 = arith.constant 0 : index
    %33 = vector.load %arg4[%c0_11, %c0_12] : memref<2x32xf32, #tpu.memory_space<vmem>>, vector<1x32xf32>
    %34 = vector.broadcast %33 : vector<1x32xf32> to vector<16x32xf32>
    %35 = arith.mulf %32, %34 : vector<16x32xf32>
    %c0_13 = arith.constant 0 : index
    %c0_14 = arith.constant 0 : index
    %c0_15 = arith.constant 0 : index
    %36 = vector.load %arg5[%c0_13, %c0_14, %c0_15] : memref<2x32x128xf32, #tpu.memory_space<vmem>>, vector<1x32x128xf32>
    %37 = vector.shape_cast %36 : vector<1x32x128xf32> to vector<32x128xf32>
    %cst_16 = arith.constant dense<0.000000e+00> : vector<16x128xf32>
    %38 = tpu.matmul %35, %37, %cst_16 {dimension_numbers = #tpu.dot_dimension_numbers<[1], [0], [0], [1], [0, 0, 1, 1], [], []>} : vector<16x32xf32>, vector<32x128xf32>, vector<16x128xf32> -> vector<16x128xf32>
    %39 = vector.extract_strided_slice %38 {offsets = [0, 0], sizes = [16, 64], strides = [1, 1]} : vector<16x128xf32> to vector<16x64xf32>
    %40 = vector.extract_strided_slice %38 {offsets = [0, 64], sizes = [16, 64], strides = [1, 1]} : vector<16x128xf32> to vector<16x64xf32>
    %c0_17 = arith.constant 0 : index
    %c0_18 = arith.constant 0 : index
    %c0_19 = arith.constant 0 : index
    %41 = vector.load %arg6[%c0_17, %c0_18, %c0_19] : memref<2x4x64xf32, #tpu.memory_space<vmem>>, vector<1x4x64xf32>
    %42 = vector.shape_cast %41 : vector<1x4x64xf32> to vector<4x64xf32>
    %43 = vector.extract_strided_slice %42 {offsets = [3, 0], sizes = [1, 64], strides = [1, 1]} : vector<4x64xf32> to vector<1x64xf32>
    %44 = vector.broadcast %43 : vector<1x64xf32> to vector<16x64xf32>
    %45 = arith.mulf %39, %44 : vector<16x64xf32>
    %cst_20 = arith.constant 0.000000e+00 : f32
    %46 = vector.broadcast %cst_20 : f32 to vector<1x64xf32>
    %47 = vector.extract_strided_slice %39 {offsets = [0, 0], sizes = [15, 64], strides = [1, 1]} : vector<16x64xf32> to vector<15x64xf32>
    %48 = tpu.concatenate %46, %47 in 0 : vector<1x64xf32>, vector<15x64xf32> -> vector<16x64xf32>
    %c1_i32_21 = arith.constant 1 : i32
    %49 = vector.broadcast %c1_i32_21 : i32 to vector<16x64xi32>
    %50 = arith.cmpi sge, %22, %49 : vector<16x64xi32>
    %cst_22 = arith.constant 0.000000e+00 : f32
    %51 = vector.broadcast %cst_22 : f32 to vector<16x64xf32>
    %52 = arith.select %50, %48, %51 : vector<16x64xi1>, vector<16x64xf32>
    %53 = vector.extract_strided_slice %42 {offsets = [2, 0], sizes = [1, 64], strides = [1, 1]} : vector<4x64xf32> to vector<1x64xf32>
    %54 = vector.broadcast %53 : vector<1x64xf32> to vector<16x64xf32>
    %55 = arith.mulf %52, %54 : vector<16x64xf32>
    %56 = arith.addf %45, %55 : vector<16x64xf32>
    %cst_23 = arith.constant 0.000000e+00 : f32
    %57 = vector.broadcast %cst_23 : f32 to vector<2x64xf32>
    %58 = vector.extract_strided_slice %39 {offsets = [0, 0], sizes = [14, 64], strides = [1, 1]} : vector<16x64xf32> to vector<14x64xf32>
    %59 = tpu.concatenate %57, %58 in 0 : vector<2x64xf32>, vector<14x64xf32> -> vector<16x64xf32>
    %c2_i32 = arith.constant 2 : i32
    %60 = vector.broadcast %c2_i32 : i32 to vector<16x64xi32>
    %61 = arith.cmpi sge, %22, %60 : vector<16x64xi32>
    %cst_24 = arith.constant 0.000000e+00 : f32
    %62 = vector.broadcast %cst_24 : f32 to vector<16x64xf32>
    %63 = arith.select %61, %59, %62 : vector<16x64xi1>, vector<16x64xf32>
    %64 = vector.extract_strided_slice %42 {offsets = [1, 0], sizes = [1, 64], strides = [1, 1]} : vector<4x64xf32> to vector<1x64xf32>
    %65 = vector.broadcast %64 : vector<1x64xf32> to vector<16x64xf32>
    %66 = arith.mulf %63, %65 : vector<16x64xf32>
    %67 = arith.addf %56, %66 : vector<16x64xf32>
    %cst_25 = arith.constant 0.000000e+00 : f32
    %68 = vector.broadcast %cst_25 : f32 to vector<3x64xf32>
    %69 = vector.extract_strided_slice %39 {offsets = [0, 0], sizes = [13, 64], strides = [1, 1]} : vector<16x64xf32> to vector<13x64xf32>
    %70 = tpu.concatenate %68, %69 in 0 : vector<3x64xf32>, vector<13x64xf32> -> vector<16x64xf32>
    %c3_i32 = arith.constant 3 : i32
    %71 = vector.broadcast %c3_i32 : i32 to vector<16x64xi32>
    %72 = arith.cmpi sge, %22, %71 : vector<16x64xi32>
    %cst_26 = arith.constant 0.000000e+00 : f32
    %73 = vector.broadcast %cst_26 : f32 to vector<16x64xf32>
    %74 = arith.select %72, %70, %73 : vector<16x64xi1>, vector<16x64xf32>
    %75 = vector.extract_strided_slice %42 {offsets = [0, 0], sizes = [1, 64], strides = [1, 1]} : vector<4x64xf32> to vector<1x64xf32>
    %76 = vector.broadcast %75 : vector<1x64xf32> to vector<16x64xf32>
    %77 = arith.mulf %74, %76 : vector<16x64xf32>
    %78 = arith.addf %67, %77 : vector<16x64xf32>
    %c0_27 = arith.constant 0 : index
    %c0_28 = arith.constant 0 : index
    %79 = vector.load %arg7[%c0_27, %c0_28] : memref<2x64xf32, #tpu.memory_space<vmem>>, vector<1x64xf32>
    %80 = vector.broadcast %79 : vector<1x64xf32> to vector<16x64xf32>
    %81 = arith.addf %78, %80 : vector<16x64xf32>
    %cst_29 = arith.constant 0.000000e+00 : f32
    %82 = vector.broadcast %cst_29 : f32 to vector<16x64xf32>
    %83 = arith.subf %82, %81 : vector<16x64xf32>
    %84 = math.exp %83 : vector<16x64xf32>
    %cst_30 = arith.constant 1.000000e+00 : f32
    %85 = vector.broadcast %cst_30 : f32 to vector<16x64xf32>
    %86 = arith.addf %85, %84 : vector<16x64xf32>
    %cst_31 = arith.constant 1.000000e+00 : f32
    %87 = vector.broadcast %cst_31 : f32 to vector<16x64xf32>
    %88 = arith.divf %87, %86 : vector<16x64xf32>
    %89 = arith.mulf %81, %88 : vector<16x64xf32>
    %c0_32 = arith.constant 0 : index
    %c0_33 = arith.constant 0 : index
    %c0_34 = arith.constant 0 : index
    %90 = vector.load %arg8[%c0_32, %c0_33, %c0_34] : memref<2x64x96xf32, #tpu.memory_space<vmem>>, vector<1x64x96xf32>
    %91 = vector.shape_cast %90 : vector<1x64x96xf32> to vector<64x96xf32>
    %cst_35 = arith.constant dense<0.000000e+00> : vector<16x96xf32>
    %92 = tpu.matmul %89, %91, %cst_35 {dimension_numbers = #tpu.dot_dimension_numbers<[1], [0], [0], [1], [0, 0, 1, 1], [], []>} : vector<16x64xf32>, vector<64x96xf32>, vector<16x96xf32> -> vector<16x96xf32>
    %93 = vector.extract_strided_slice %92 {offsets = [0, 0], sizes = [16, 64], strides = [1, 1]} : vector<16x96xf32> to vector<16x64xf32>
    %c0_36 = arith.constant 0 : index
    %c0_37 = arith.constant 0 : index
    %94 = vector.load %arg9[%c0_36, %c0_37] : memref<2x64xf32, #tpu.memory_space<vmem>>, vector<1x64xf32>
    %95 = vector.broadcast %94 : vector<1x64xf32> to vector<16x64xf32>
    %96 = arith.addf %93, %95 : vector<16x64xf32>
    %cst_38 = arith.constant 2.000000e+01 : f32
    %97 = vector.broadcast %cst_38 : f32 to vector<16x64xf32>
    %98 = arith.cmpf ogt, %96, %97 : vector<16x64xf32>
    %cst_39 = arith.constant 2.000000e+01 : f32
    %99 = vector.broadcast %cst_39 : f32 to vector<16x64xf32>
    %100 = arith.minimumf %96, %99 : vector<16x64xf32>
    %101 = math.exp %100 : vector<16x64xf32>
    %cst_40 = arith.constant 1.000000e+00 : f32
    %102 = vector.broadcast %cst_40 : f32 to vector<16x64xf32>
    %103 = arith.addf %102, %101 : vector<16x64xf32>
    %104 = math.log %103 : vector<16x64xf32>
    %105 = arith.select %98, %96, %104 : vector<16x64xi1>, vector<16x64xf32>
    %106 = vector.extract_strided_slice %92 {offsets = [0, 64], sizes = [16, 16], strides = [1, 1]} : vector<16x96xf32> to vector<16x16xf32>
    %107 = vector.extract_strided_slice %92 {offsets = [0, 80], sizes = [16, 16], strides = [1, 1]} : vector<16x96xf32> to vector<16x16xf32>
    %c0_41 = arith.constant 0 : index
    %c0_42 = arith.constant 0 : index
    %c0_43 = arith.constant 0 : index
    %108 = vector.load %arg10[%c0_41, %c0_42, %c0_43] : memref<2x16x64xf32, #tpu.memory_space<vmem>>, vector<1x16x64xf32>
    %109 = vector.shape_cast %108 : vector<1x16x64xf32> to vector<16x64xf32>
    %110 = arith.mulf %105, %89 : vector<16x64xf32>
    %111 = vector.extract_strided_slice %105 {offsets = [0, 0], sizes = [8, 64], strides = [1, 1]} : vector<16x64xf32> to vector<8x64xf32>
    %112 = vector.extract_strided_slice %110 {offsets = [0, 0], sizes = [8, 64], strides = [1, 1]} : vector<16x64xf32> to vector<8x64xf32>
    %113 = vector.extract_strided_slice %106 {offsets = [0, 0], sizes = [8, 16], strides = [1, 1]} : vector<16x16xf32> to vector<8x16xf32>
    %114 = vector.extract_strided_slice %107 {offsets = [0, 0], sizes = [8, 16], strides = [1, 1]} : vector<16x16xf32> to vector<8x16xf32>
    %115 = vector.shape_cast %111 : vector<8x64xf32> to vector<8x1x64xf32>
    %116 = vector.shape_cast %109 : vector<16x64xf32> to vector<1x16x64xf32>
    %117 = vector.broadcast %115 : vector<8x1x64xf32> to vector<8x16x64xf32>
    %118 = vector.broadcast %116 : vector<1x16x64xf32> to vector<8x16x64xf32>
    %119 = arith.mulf %117, %118 : vector<8x16x64xf32>
    %120 = math.exp %119 : vector<8x16x64xf32>
    %121 = vector.shape_cast %112 : vector<8x64xf32> to vector<8x1x64xf32>
    %122 = vector.shape_cast %113 : vector<8x16xf32> to vector<8x16x1xf32>
    %123 = vector.broadcast %121 : vector<8x1x64xf32> to vector<8x16x64xf32>
    %124 = vector.broadcast %122 : vector<8x16x1xf32> to vector<8x16x64xf32>
    %125 = arith.mulf %123, %124 : vector<8x16x64xf32>
    %126 = vector.shape_cast %114 : vector<8x16xf32> to vector<8x16x1xf32>
    %cst_44 = arith.constant 0.000000e+00 : f32
    %127 = vector.broadcast %cst_44 : f32 to vector<16x64xf32>
    %128 = vector.extract_strided_slice %120 {offsets = [0, 0, 0], sizes = [1, 16, 64], strides = [1, 1, 1]} : vector<8x16x64xf32> to vector<1x16x64xf32>
    %129 = vector.shape_cast %128 : vector<1x16x64xf32> to vector<16x64xf32>
    %130 = arith.mulf %129, %127 : vector<16x64xf32>
    %131 = vector.extract_strided_slice %125 {offsets = [0, 0, 0], sizes = [1, 16, 64], strides = [1, 1, 1]} : vector<8x16x64xf32> to vector<1x16x64xf32>
    %132 = vector.shape_cast %131 : vector<1x16x64xf32> to vector<16x64xf32>
    %133 = arith.addf %130, %132 : vector<16x64xf32>
    %134 = vector.extract_strided_slice %126 {offsets = [0, 0, 0], sizes = [1, 16, 1], strides = [1, 1, 1]} : vector<8x16x1xf32> to vector<1x16x1xf32>
    %135 = vector.shape_cast %134 : vector<1x16x1xf32> to vector<16x1xf32>
    %136 = vector.broadcast %135 : vector<16x1xf32> to vector<16x64xf32>
    %137 = arith.mulf %133, %136 : vector<16x64xf32>
    %cst_45 = arith.constant dense<0.000000e+00> : vector<64xf32>
    %138 = vector.multi_reduction <add>, %137, %cst_45 [0] : vector<16x64xf32> to vector<64xf32>
    %139 = vector.shape_cast %138 : vector<64xf32> to vector<1x64xf32>
    %140 = vector.extract_strided_slice %120 {offsets = [1, 0, 0], sizes = [1, 16, 64], strides = [1, 1, 1]} : vector<8x16x64xf32> to vector<1x16x64xf32>
    %141 = vector.shape_cast %140 : vector<1x16x64xf32> to vector<16x64xf32>
    %142 = arith.mulf %141, %133 : vector<16x64xf32>
    %143 = vector.extract_strided_slice %125 {offsets = [1, 0, 0], sizes = [1, 16, 64], strides = [1, 1, 1]} : vector<8x16x64xf32> to vector<1x16x64xf32>
    %144 = vector.shape_cast %143 : vector<1x16x64xf32> to vector<16x64xf32>
    %145 = arith.addf %142, %144 : vector<16x64xf32>
    %146 = vector.extract_strided_slice %126 {offsets = [1, 0, 0], sizes = [1, 16, 1], strides = [1, 1, 1]} : vector<8x16x1xf32> to vector<1x16x1xf32>
    %147 = vector.shape_cast %146 : vector<1x16x1xf32> to vector<16x1xf32>
    %148 = vector.broadcast %147 : vector<16x1xf32> to vector<16x64xf32>
    %149 = arith.mulf %145, %148 : vector<16x64xf32>
    %cst_46 = arith.constant dense<0.000000e+00> : vector<64xf32>
    %150 = vector.multi_reduction <add>, %149, %cst_46 [0] : vector<16x64xf32> to vector<64xf32>
    %151 = vector.shape_cast %150 : vector<64xf32> to vector<1x64xf32>
    %152 = vector.extract_strided_slice %120 {offsets = [2, 0, 0], sizes = [1, 16, 64], strides = [1, 1, 1]} : vector<8x16x64xf32> to vector<1x16x64xf32>
    %153 = vector.shape_cast %152 : vector<1x16x64xf32> to vector<16x64xf32>
    %154 = arith.mulf %153, %145 : vector<16x64xf32>
    %155 = vector.extract_strided_slice %125 {offsets = [2, 0, 0], sizes = [1, 16, 64], strides = [1, 1, 1]} : vector<8x16x64xf32> to vector<1x16x64xf32>
    %156 = vector.shape_cast %155 : vector<1x16x64xf32> to vector<16x64xf32>
    %157 = arith.addf %154, %156 : vector<16x64xf32>
    %158 = vector.extract_strided_slice %126 {offsets = [2, 0, 0], sizes = [1, 16, 1], strides = [1, 1, 1]} : vector<8x16x1xf32> to vector<1x16x1xf32>
    %159 = vector.shape_cast %158 : vector<1x16x1xf32> to vector<16x1xf32>
    %160 = vector.broadcast %159 : vector<16x1xf32> to vector<16x64xf32>
    %161 = arith.mulf %157, %160 : vector<16x64xf32>
    %cst_47 = arith.constant dense<0.000000e+00> : vector<64xf32>
    %162 = vector.multi_reduction <add>, %161, %cst_47 [0] : vector<16x64xf32> to vector<64xf32>
    %163 = vector.shape_cast %162 : vector<64xf32> to vector<1x64xf32>
    %164 = vector.extract_strided_slice %120 {offsets = [3, 0, 0], sizes = [1, 16, 64], strides = [1, 1, 1]} : vector<8x16x64xf32> to vector<1x16x64xf32>
    %165 = vector.shape_cast %164 : vector<1x16x64xf32> to vector<16x64xf32>
    %166 = arith.mulf %165, %157 : vector<16x64xf32>
    %167 = vector.extract_strided_slice %125 {offsets = [3, 0, 0], sizes = [1, 16, 64], strides = [1, 1, 1]} : vector<8x16x64xf32> to vector<1x16x64xf32>
    %168 = vector.shape_cast %167 : vector<1x16x64xf32> to vector<16x64xf32>
    %169 = arith.addf %166, %168 : vector<16x64xf32>
    %170 = vector.extract_strided_slice %126 {offsets = [3, 0, 0], sizes = [1, 16, 1], strides = [1, 1, 1]} : vector<8x16x1xf32> to vector<1x16x1xf32>
    %171 = vector.shape_cast %170 : vector<1x16x1xf32> to vector<16x1xf32>
    %172 = vector.broadcast %171 : vector<16x1xf32> to vector<16x64xf32>
    %173 = arith.mulf %169, %172 : vector<16x64xf32>
    %cst_48 = arith.constant dense<0.000000e+00> : vector<64xf32>
    %174 = vector.multi_reduction <add>, %173, %cst_48 [0] : vector<16x64xf32> to vector<64xf32>
    %175 = vector.shape_cast %174 : vector<64xf32> to vector<1x64xf32>
    %176 = vector.extract_strided_slice %120 {offsets = [4, 0, 0], sizes = [1, 16, 64], strides = [1, 1, 1]} : vector<8x16x64xf32> to vector<1x16x64xf32>
    %177 = vector.shape_cast %176 : vector<1x16x64xf32> to vector<16x64xf32>
    %178 = arith.mulf %177, %169 : vector<16x64xf32>
    %179 = vector.extract_strided_slice %125 {offsets = [4, 0, 0], sizes = [1, 16, 64], strides = [1, 1, 1]} : vector<8x16x64xf32> to vector<1x16x64xf32>
    %180 = vector.shape_cast %179 : vector<1x16x64xf32> to vector<16x64xf32>
    %181 = arith.addf %178, %180 : vector<16x64xf32>
    %182 = vector.extract_strided_slice %126 {offsets = [4, 0, 0], sizes = [1, 16, 1], strides = [1, 1, 1]} : vector<8x16x1xf32> to vector<1x16x1xf32>
    %183 = vector.shape_cast %182 : vector<1x16x1xf32> to vector<16x1xf32>
    %184 = vector.broadcast %183 : vector<16x1xf32> to vector<16x64xf32>
    %185 = arith.mulf %181, %184 : vector<16x64xf32>
    %cst_49 = arith.constant dense<0.000000e+00> : vector<64xf32>
    %186 = vector.multi_reduction <add>, %185, %cst_49 [0] : vector<16x64xf32> to vector<64xf32>
    %187 = vector.shape_cast %186 : vector<64xf32> to vector<1x64xf32>
    %188 = vector.extract_strided_slice %120 {offsets = [5, 0, 0], sizes = [1, 16, 64], strides = [1, 1, 1]} : vector<8x16x64xf32> to vector<1x16x64xf32>
    %189 = vector.shape_cast %188 : vector<1x16x64xf32> to vector<16x64xf32>
    %190 = arith.mulf %189, %181 : vector<16x64xf32>
    %191 = vector.extract_strided_slice %125 {offsets = [5, 0, 0], sizes = [1, 16, 64], strides = [1, 1, 1]} : vector<8x16x64xf32> to vector<1x16x64xf32>
    %192 = vector.shape_cast %191 : vector<1x16x64xf32> to vector<16x64xf32>
    %193 = arith.addf %190, %192 : vector<16x64xf32>
    %194 = vector.extract_strided_slice %126 {offsets = [5, 0, 0], sizes = [1, 16, 1], strides = [1, 1, 1]} : vector<8x16x1xf32> to vector<1x16x1xf32>
    %195 = vector.shape_cast %194 : vector<1x16x1xf32> to vector<16x1xf32>
    %196 = vector.broadcast %195 : vector<16x1xf32> to vector<16x64xf32>
    %197 = arith.mulf %193, %196 : vector<16x64xf32>
    %cst_50 = arith.constant dense<0.000000e+00> : vector<64xf32>
    %198 = vector.multi_reduction <add>, %197, %cst_50 [0] : vector<16x64xf32> to vector<64xf32>
    %199 = vector.shape_cast %198 : vector<64xf32> to vector<1x64xf32>
    %200 = vector.extract_strided_slice %120 {offsets = [6, 0, 0], sizes = [1, 16, 64], strides = [1, 1, 1]} : vector<8x16x64xf32> to vector<1x16x64xf32>
    %201 = vector.shape_cast %200 : vector<1x16x64xf32> to vector<16x64xf32>
    %202 = arith.mulf %201, %193 : vector<16x64xf32>
    %203 = vector.extract_strided_slice %125 {offsets = [6, 0, 0], sizes = [1, 16, 64], strides = [1, 1, 1]} : vector<8x16x64xf32> to vector<1x16x64xf32>
    %204 = vector.shape_cast %203 : vector<1x16x64xf32> to vector<16x64xf32>
    %205 = arith.addf %202, %204 : vector<16x64xf32>
    %206 = vector.extract_strided_slice %126 {offsets = [6, 0, 0], sizes = [1, 16, 1], strides = [1, 1, 1]} : vector<8x16x1xf32> to vector<1x16x1xf32>
    %207 = vector.shape_cast %206 : vector<1x16x1xf32> to vector<16x1xf32>
    %208 = vector.broadcast %207 : vector<16x1xf32> to vector<16x64xf32>
    %209 = arith.mulf %205, %208 : vector<16x64xf32>
    %cst_51 = arith.constant dense<0.000000e+00> : vector<64xf32>
    %210 = vector.multi_reduction <add>, %209, %cst_51 [0] : vector<16x64xf32> to vector<64xf32>
    %211 = vector.shape_cast %210 : vector<64xf32> to vector<1x64xf32>
    %212 = vector.extract_strided_slice %120 {offsets = [7, 0, 0], sizes = [1, 16, 64], strides = [1, 1, 1]} : vector<8x16x64xf32> to vector<1x16x64xf32>
    %213 = vector.shape_cast %212 : vector<1x16x64xf32> to vector<16x64xf32>
    %214 = arith.mulf %213, %205 : vector<16x64xf32>
    %215 = vector.extract_strided_slice %125 {offsets = [7, 0, 0], sizes = [1, 16, 64], strides = [1, 1, 1]} : vector<8x16x64xf32> to vector<1x16x64xf32>
    %216 = vector.shape_cast %215 : vector<1x16x64xf32> to vector<16x64xf32>
    %217 = arith.addf %214, %216 : vector<16x64xf32>
    %218 = vector.extract_strided_slice %126 {offsets = [7, 0, 0], sizes = [1, 16, 1], strides = [1, 1, 1]} : vector<8x16x1xf32> to vector<1x16x1xf32>
    %219 = vector.shape_cast %218 : vector<1x16x1xf32> to vector<16x1xf32>
    %220 = vector.broadcast %219 : vector<16x1xf32> to vector<16x64xf32>
    %221 = arith.mulf %217, %220 : vector<16x64xf32>
    %cst_52 = arith.constant dense<0.000000e+00> : vector<64xf32>
    %222 = vector.multi_reduction <add>, %221, %cst_52 [0] : vector<16x64xf32> to vector<64xf32>
    %223 = vector.shape_cast %222 : vector<64xf32> to vector<1x64xf32>
    %224 = tpu.concatenate %139, %151, %163, %175, %187, %199, %211, %223 in 0 : vector<1x64xf32>, vector<1x64xf32>, vector<1x64xf32>, vector<1x64xf32>, vector<1x64xf32>, vector<1x64xf32>, vector<1x64xf32>, vector<1x64xf32> -> vector<8x64xf32>
    %225 = vector.extract_strided_slice %105 {offsets = [8, 0], sizes = [8, 64], strides = [1, 1]} : vector<16x64xf32> to vector<8x64xf32>
    %226 = vector.extract_strided_slice %110 {offsets = [8, 0], sizes = [8, 64], strides = [1, 1]} : vector<16x64xf32> to vector<8x64xf32>
    %227 = vector.extract_strided_slice %106 {offsets = [8, 0], sizes = [8, 16], strides = [1, 1]} : vector<16x16xf32> to vector<8x16xf32>
    %228 = vector.extract_strided_slice %107 {offsets = [8, 0], sizes = [8, 16], strides = [1, 1]} : vector<16x16xf32> to vector<8x16xf32>
    %229 = vector.shape_cast %225 : vector<8x64xf32> to vector<8x1x64xf32>
    %230 = vector.shape_cast %109 : vector<16x64xf32> to vector<1x16x64xf32>
    %231 = vector.broadcast %229 : vector<8x1x64xf32> to vector<8x16x64xf32>
    %232 = vector.broadcast %230 : vector<1x16x64xf32> to vector<8x16x64xf32>
    %233 = arith.mulf %231, %232 : vector<8x16x64xf32>
    %234 = math.exp %233 : vector<8x16x64xf32>
    %235 = vector.shape_cast %226 : vector<8x64xf32> to vector<8x1x64xf32>
    %236 = vector.shape_cast %227 : vector<8x16xf32> to vector<8x16x1xf32>
    %237 = vector.broadcast %235 : vector<8x1x64xf32> to vector<8x16x64xf32>
    %238 = vector.broadcast %236 : vector<8x16x1xf32> to vector<8x16x64xf32>
    %239 = arith.mulf %237, %238 : vector<8x16x64xf32>
    %240 = vector.shape_cast %228 : vector<8x16xf32> to vector<8x16x1xf32>
    %cst_53 = arith.constant 0.000000e+00 : f32
    %241 = vector.broadcast %cst_53 : f32 to vector<16x64xf32>
    %242 = vector.extract_strided_slice %234 {offsets = [0, 0, 0], sizes = [1, 16, 64], strides = [1, 1, 1]} : vector<8x16x64xf32> to vector<1x16x64xf32>
    %243 = vector.shape_cast %242 : vector<1x16x64xf32> to vector<16x64xf32>
    %244 = arith.mulf %243, %241 : vector<16x64xf32>
    %245 = vector.extract_strided_slice %239 {offsets = [0, 0, 0], sizes = [1, 16, 64], strides = [1, 1, 1]} : vector<8x16x64xf32> to vector<1x16x64xf32>
    %246 = vector.shape_cast %245 : vector<1x16x64xf32> to vector<16x64xf32>
    %247 = arith.addf %244, %246 : vector<16x64xf32>
    %248 = vector.extract_strided_slice %240 {offsets = [0, 0, 0], sizes = [1, 16, 1], strides = [1, 1, 1]} : vector<8x16x1xf32> to vector<1x16x1xf32>
    %249 = vector.shape_cast %248 : vector<1x16x1xf32> to vector<16x1xf32>
    %250 = vector.broadcast %249 : vector<16x1xf32> to vector<16x64xf32>
    %251 = arith.mulf %247, %250 : vector<16x64xf32>
    %cst_54 = arith.constant dense<0.000000e+00> : vector<64xf32>
    %252 = vector.multi_reduction <add>, %251, %cst_54 [0] : vector<16x64xf32> to vector<64xf32>
    %253 = vector.shape_cast %252 : vector<64xf32> to vector<1x64xf32>
    %254 = vector.extract_strided_slice %234 {offsets = [1, 0, 0], sizes = [1, 16, 64], strides = [1, 1, 1]} : vector<8x16x64xf32> to vector<1x16x64xf32>
    %255 = vector.shape_cast %254 : vector<1x16x64xf32> to vector<16x64xf32>
    %256 = arith.mulf %255, %247 : vector<16x64xf32>
    %257 = vector.extract_strided_slice %239 {offsets = [1, 0, 0], sizes = [1, 16, 64], strides = [1, 1, 1]} : vector<8x16x64xf32> to vector<1x16x64xf32>
    %258 = vector.shape_cast %257 : vector<1x16x64xf32> to vector<16x64xf32>
    %259 = arith.addf %256, %258 : vector<16x64xf32>
    %260 = vector.extract_strided_slice %240 {offsets = [1, 0, 0], sizes = [1, 16, 1], strides = [1, 1, 1]} : vector<8x16x1xf32> to vector<1x16x1xf32>
    %261 = vector.shape_cast %260 : vector<1x16x1xf32> to vector<16x1xf32>
    %262 = vector.broadcast %261 : vector<16x1xf32> to vector<16x64xf32>
    %263 = arith.mulf %259, %262 : vector<16x64xf32>
    %cst_55 = arith.constant dense<0.000000e+00> : vector<64xf32>
    %264 = vector.multi_reduction <add>, %263, %cst_55 [0] : vector<16x64xf32> to vector<64xf32>
    %265 = vector.shape_cast %264 : vector<64xf32> to vector<1x64xf32>
    %266 = vector.extract_strided_slice %234 {offsets = [2, 0, 0], sizes = [1, 16, 64], strides = [1, 1, 1]} : vector<8x16x64xf32> to vector<1x16x64xf32>
    %267 = vector.shape_cast %266 : vector<1x16x64xf32> to vector<16x64xf32>
    %268 = arith.mulf %267, %259 : vector<16x64xf32>
    %269 = vector.extract_strided_slice %239 {offsets = [2, 0, 0], sizes = [1, 16, 64], strides = [1, 1, 1]} : vector<8x16x64xf32> to vector<1x16x64xf32>
    %270 = vector.shape_cast %269 : vector<1x16x64xf32> to vector<16x64xf32>
    %271 = arith.addf %268, %270 : vector<16x64xf32>
    %272 = vector.extract_strided_slice %240 {offsets = [2, 0, 0], sizes = [1, 16, 1], strides = [1, 1, 1]} : vector<8x16x1xf32> to vector<1x16x1xf32>
    %273 = vector.shape_cast %272 : vector<1x16x1xf32> to vector<16x1xf32>
    %274 = vector.broadcast %273 : vector<16x1xf32> to vector<16x64xf32>
    %275 = arith.mulf %271, %274 : vector<16x64xf32>
    %cst_56 = arith.constant dense<0.000000e+00> : vector<64xf32>
    %276 = vector.multi_reduction <add>, %275, %cst_56 [0] : vector<16x64xf32> to vector<64xf32>
    %277 = vector.shape_cast %276 : vector<64xf32> to vector<1x64xf32>
    %278 = vector.extract_strided_slice %234 {offsets = [3, 0, 0], sizes = [1, 16, 64], strides = [1, 1, 1]} : vector<8x16x64xf32> to vector<1x16x64xf32>
    %279 = vector.shape_cast %278 : vector<1x16x64xf32> to vector<16x64xf32>
    %280 = arith.mulf %279, %271 : vector<16x64xf32>
    %281 = vector.extract_strided_slice %239 {offsets = [3, 0, 0], sizes = [1, 16, 64], strides = [1, 1, 1]} : vector<8x16x64xf32> to vector<1x16x64xf32>
    %282 = vector.shape_cast %281 : vector<1x16x64xf32> to vector<16x64xf32>
    %283 = arith.addf %280, %282 : vector<16x64xf32>
    %284 = vector.extract_strided_slice %240 {offsets = [3, 0, 0], sizes = [1, 16, 1], strides = [1, 1, 1]} : vector<8x16x1xf32> to vector<1x16x1xf32>
    %285 = vector.shape_cast %284 : vector<1x16x1xf32> to vector<16x1xf32>
    %286 = vector.broadcast %285 : vector<16x1xf32> to vector<16x64xf32>
    %287 = arith.mulf %283, %286 : vector<16x64xf32>
    %cst_57 = arith.constant dense<0.000000e+00> : vector<64xf32>
    %288 = vector.multi_reduction <add>, %287, %cst_57 [0] : vector<16x64xf32> to vector<64xf32>
    %289 = vector.shape_cast %288 : vector<64xf32> to vector<1x64xf32>
    %290 = vector.extract_strided_slice %234 {offsets = [4, 0, 0], sizes = [1, 16, 64], strides = [1, 1, 1]} : vector<8x16x64xf32> to vector<1x16x64xf32>
    %291 = vector.shape_cast %290 : vector<1x16x64xf32> to vector<16x64xf32>
    %292 = arith.mulf %291, %283 : vector<16x64xf32>
    %293 = vector.extract_strided_slice %239 {offsets = [4, 0, 0], sizes = [1, 16, 64], strides = [1, 1, 1]} : vector<8x16x64xf32> to vector<1x16x64xf32>
    %294 = vector.shape_cast %293 : vector<1x16x64xf32> to vector<16x64xf32>
    %295 = arith.addf %292, %294 : vector<16x64xf32>
    %296 = vector.extract_strided_slice %240 {offsets = [4, 0, 0], sizes = [1, 16, 1], strides = [1, 1, 1]} : vector<8x16x1xf32> to vector<1x16x1xf32>
    %297 = vector.shape_cast %296 : vector<1x16x1xf32> to vector<16x1xf32>
    %298 = vector.broadcast %297 : vector<16x1xf32> to vector<16x64xf32>
    %299 = arith.mulf %295, %298 : vector<16x64xf32>
    %cst_58 = arith.constant dense<0.000000e+00> : vector<64xf32>
    %300 = vector.multi_reduction <add>, %299, %cst_58 [0] : vector<16x64xf32> to vector<64xf32>
    %301 = vector.shape_cast %300 : vector<64xf32> to vector<1x64xf32>
    %302 = vector.extract_strided_slice %234 {offsets = [5, 0, 0], sizes = [1, 16, 64], strides = [1, 1, 1]} : vector<8x16x64xf32> to vector<1x16x64xf32>
    %303 = vector.shape_cast %302 : vector<1x16x64xf32> to vector<16x64xf32>
    %304 = arith.mulf %303, %295 : vector<16x64xf32>
    %305 = vector.extract_strided_slice %239 {offsets = [5, 0, 0], sizes = [1, 16, 64], strides = [1, 1, 1]} : vector<8x16x64xf32> to vector<1x16x64xf32>
    %306 = vector.shape_cast %305 : vector<1x16x64xf32> to vector<16x64xf32>
    %307 = arith.addf %304, %306 : vector<16x64xf32>
    %308 = vector.extract_strided_slice %240 {offsets = [5, 0, 0], sizes = [1, 16, 1], strides = [1, 1, 1]} : vector<8x16x1xf32> to vector<1x16x1xf32>
    %309 = vector.shape_cast %308 : vector<1x16x1xf32> to vector<16x1xf32>
    %310 = vector.broadcast %309 : vector<16x1xf32> to vector<16x64xf32>
    %311 = arith.mulf %307, %310 : vector<16x64xf32>
    %cst_59 = arith.constant dense<0.000000e+00> : vector<64xf32>
    %312 = vector.multi_reduction <add>, %311, %cst_59 [0] : vector<16x64xf32> to vector<64xf32>
    %313 = vector.shape_cast %312 : vector<64xf32> to vector<1x64xf32>
    %314 = vector.extract_strided_slice %234 {offsets = [6, 0, 0], sizes = [1, 16, 64], strides = [1, 1, 1]} : vector<8x16x64xf32> to vector<1x16x64xf32>
    %315 = vector.shape_cast %314 : vector<1x16x64xf32> to vector<16x64xf32>
    %316 = arith.mulf %315, %307 : vector<16x64xf32>
    %317 = vector.extract_strided_slice %239 {offsets = [6, 0, 0], sizes = [1, 16, 64], strides = [1, 1, 1]} : vector<8x16x64xf32> to vector<1x16x64xf32>
    %318 = vector.shape_cast %317 : vector<1x16x64xf32> to vector<16x64xf32>
    %319 = arith.addf %316, %318 : vector<16x64xf32>
    %320 = vector.extract_strided_slice %240 {offsets = [6, 0, 0], sizes = [1, 16, 1], strides = [1, 1, 1]} : vector<8x16x1xf32> to vector<1x16x1xf32>
    %321 = vector.shape_cast %320 : vector<1x16x1xf32> to vector<16x1xf32>
    %322 = vector.broadcast %321 : vector<16x1xf32> to vector<16x64xf32>
    %323 = arith.mulf %319, %322 : vector<16x64xf32>
    %cst_60 = arith.constant dense<0.000000e+00> : vector<64xf32>
    %324 = vector.multi_reduction <add>, %323, %cst_60 [0] : vector<16x64xf32> to vector<64xf32>
    %325 = vector.shape_cast %324 : vector<64xf32> to vector<1x64xf32>
    %326 = vector.extract_strided_slice %234 {offsets = [7, 0, 0], sizes = [1, 16, 64], strides = [1, 1, 1]} : vector<8x16x64xf32> to vector<1x16x64xf32>
    %327 = vector.shape_cast %326 : vector<1x16x64xf32> to vector<16x64xf32>
    %328 = arith.mulf %327, %319 : vector<16x64xf32>
    %329 = vector.extract_strided_slice %239 {offsets = [7, 0, 0], sizes = [1, 16, 64], strides = [1, 1, 1]} : vector<8x16x64xf32> to vector<1x16x64xf32>
    %330 = vector.shape_cast %329 : vector<1x16x64xf32> to vector<16x64xf32>
    %331 = arith.addf %328, %330 : vector<16x64xf32>
    %332 = vector.extract_strided_slice %240 {offsets = [7, 0, 0], sizes = [1, 16, 1], strides = [1, 1, 1]} : vector<8x16x1xf32> to vector<1x16x1xf32>
    %333 = vector.shape_cast %332 : vector<1x16x1xf32> to vector<16x1xf32>
    %334 = vector.broadcast %333 : vector<16x1xf32> to vector<16x64xf32>
    %335 = arith.mulf %331, %334 : vector<16x64xf32>
    %cst_61 = arith.constant dense<0.000000e+00> : vector<64xf32>
    %336 = vector.multi_reduction <add>, %335, %cst_61 [0] : vector<16x64xf32> to vector<64xf32>
    %337 = vector.shape_cast %336 : vector<64xf32> to vector<1x64xf32>
    %338 = tpu.concatenate %253, %265, %277, %289, %301, %313, %325, %337 in 0 : vector<1x64xf32>, vector<1x64xf32>, vector<1x64xf32>, vector<1x64xf32>, vector<1x64xf32>, vector<1x64xf32>, vector<1x64xf32>, vector<1x64xf32> -> vector<8x64xf32>
    %339 = tpu.concatenate %224, %338 in 0 : vector<8x64xf32>, vector<8x64xf32> -> vector<16x64xf32>
    %c0_62 = arith.constant 0 : index
    %c0_63 = arith.constant 0 : index
    %340 = vector.load %arg11[%c0_62, %c0_63] : memref<2x64xf32, #tpu.memory_space<vmem>>, vector<1x64xf32>
    %341 = vector.broadcast %340 : vector<1x64xf32> to vector<16x64xf32>
    %342 = arith.mulf %341, %89 : vector<16x64xf32>
    %343 = arith.addf %339, %342 : vector<16x64xf32>
    %cst_64 = arith.constant 0.000000e+00 : f32
    %344 = vector.broadcast %cst_64 : f32 to vector<16x64xf32>
    %345 = arith.subf %344, %40 : vector<16x64xf32>
    %346 = math.exp %345 : vector<16x64xf32>
    %cst_65 = arith.constant 1.000000e+00 : f32
    %347 = vector.broadcast %cst_65 : f32 to vector<16x64xf32>
    %348 = arith.addf %347, %346 : vector<16x64xf32>
    %cst_66 = arith.constant 1.000000e+00 : f32
    %349 = vector.broadcast %cst_66 : f32 to vector<16x64xf32>
    %350 = arith.divf %349, %348 : vector<16x64xf32>
    %351 = arith.mulf %40, %350 : vector<16x64xf32>
    %352 = arith.mulf %343, %351 : vector<16x64xf32>
    %c0_67 = arith.constant 0 : index
    %c0_68 = arith.constant 0 : index
    %c0_69 = arith.constant 0 : index
    %353 = vector.load %arg12[%c0_67, %c0_68, %c0_69] : memref<2x64x32xf32, #tpu.memory_space<vmem>>, vector<1x64x32xf32>
    %354 = vector.shape_cast %353 : vector<1x64x32xf32> to vector<64x32xf32>
    %cst_70 = arith.constant dense<0.000000e+00> : vector<16x32xf32>
    %355 = tpu.matmul %352, %354, %cst_70 {dimension_numbers = #tpu.dot_dimension_numbers<[1], [0], [0], [1], [0, 0, 1, 1], [], []>} : vector<16x64xf32>, vector<64x32xf32>, vector<16x32xf32> -> vector<16x32xf32>
    %356 = arith.addf %355, %5 : vector<16x32xf32>
    %357 = arith.mulf %356, %356 : vector<16x32xf32>
    %cst_71 = arith.constant dense<0.000000e+00> : vector<16xf32>
    %358 = vector.multi_reduction <add>, %357, %cst_71 [1] : vector<16x32xf32> to vector<16xf32>
    %359 = vector.shape_cast %358 : vector<16xf32> to vector<16x1xf32>
    %cst_72 = arith.constant 3.200000e+01 : f32
    %360 = vector.broadcast %cst_72 : f32 to vector<16x1xf32>
    %361 = arith.divf %359, %360 : vector<16x1xf32>
    %cst_73 = arith.constant 9.99999974E-6 : f32
    %362 = vector.broadcast %cst_73 : f32 to vector<16x1xf32>
    %363 = arith.addf %361, %362 : vector<16x1xf32>
    %364 = math.rsqrt %363 : vector<16x1xf32>
    %365 = vector.broadcast %364 : vector<16x1xf32> to vector<16x32xf32>
    %366 = arith.mulf %356, %365 : vector<16x32xf32>
    %c1 = arith.constant 1 : index
    %c0_74 = arith.constant 0 : index
    %367 = vector.load %arg4[%c1, %c0_74] : memref<2x32xf32, #tpu.memory_space<vmem>>, vector<1x32xf32>
    %368 = vector.broadcast %367 : vector<1x32xf32> to vector<16x32xf32>
    %369 = arith.mulf %366, %368 : vector<16x32xf32>
    %c1_75 = arith.constant 1 : index
    %c0_76 = arith.constant 0 : index
    %c0_77 = arith.constant 0 : index
    %370 = vector.load %arg5[%c1_75, %c0_76, %c0_77] : memref<2x32x128xf32, #tpu.memory_space<vmem>>, vector<1x32x128xf32>
    %371 = vector.shape_cast %370 : vector<1x32x128xf32> to vector<32x128xf32>
    %cst_78 = arith.constant dense<0.000000e+00> : vector<16x128xf32>
    %372 = tpu.matmul %369, %371, %cst_78 {dimension_numbers = #tpu.dot_dimension_numbers<[1], [0], [0], [1], [0, 0, 1, 1], [], []>} : vector<16x32xf32>, vector<32x128xf32>, vector<16x128xf32> -> vector<16x128xf32>
    %373 = vector.extract_strided_slice %372 {offsets = [0, 0], sizes = [16, 64], strides = [1, 1]} : vector<16x128xf32> to vector<16x64xf32>
    %374 = vector.extract_strided_slice %372 {offsets = [0, 64], sizes = [16, 64], strides = [1, 1]} : vector<16x128xf32> to vector<16x64xf32>
    %c1_79 = arith.constant 1 : index
    %c0_80 = arith.constant 0 : index
    %c0_81 = arith.constant 0 : index
    %375 = vector.load %arg6[%c1_79, %c0_80, %c0_81] : memref<2x4x64xf32, #tpu.memory_space<vmem>>, vector<1x4x64xf32>
    %376 = vector.shape_cast %375 : vector<1x4x64xf32> to vector<4x64xf32>
    %377 = vector.extract_strided_slice %376 {offsets = [3, 0], sizes = [1, 64], strides = [1, 1]} : vector<4x64xf32> to vector<1x64xf32>
    %378 = vector.broadcast %377 : vector<1x64xf32> to vector<16x64xf32>
    %379 = arith.mulf %373, %378 : vector<16x64xf32>
    %cst_82 = arith.constant 0.000000e+00 : f32
    %380 = vector.broadcast %cst_82 : f32 to vector<1x64xf32>
    %381 = vector.extract_strided_slice %373 {offsets = [0, 0], sizes = [15, 64], strides = [1, 1]} : vector<16x64xf32> to vector<15x64xf32>
    %382 = tpu.concatenate %380, %381 in 0 : vector<1x64xf32>, vector<15x64xf32> -> vector<16x64xf32>
    %c1_i32_83 = arith.constant 1 : i32
    %383 = vector.broadcast %c1_i32_83 : i32 to vector<16x64xi32>
    %384 = arith.cmpi sge, %22, %383 : vector<16x64xi32>
    %cst_84 = arith.constant 0.000000e+00 : f32
    %385 = vector.broadcast %cst_84 : f32 to vector<16x64xf32>
    %386 = arith.select %384, %382, %385 : vector<16x64xi1>, vector<16x64xf32>
    %387 = vector.extract_strided_slice %376 {offsets = [2, 0], sizes = [1, 64], strides = [1, 1]} : vector<4x64xf32> to vector<1x64xf32>
    %388 = vector.broadcast %387 : vector<1x64xf32> to vector<16x64xf32>
    %389 = arith.mulf %386, %388 : vector<16x64xf32>
    %390 = arith.addf %379, %389 : vector<16x64xf32>
    %cst_85 = arith.constant 0.000000e+00 : f32
    %391 = vector.broadcast %cst_85 : f32 to vector<2x64xf32>
    %392 = vector.extract_strided_slice %373 {offsets = [0, 0], sizes = [14, 64], strides = [1, 1]} : vector<16x64xf32> to vector<14x64xf32>
    %393 = tpu.concatenate %391, %392 in 0 : vector<2x64xf32>, vector<14x64xf32> -> vector<16x64xf32>
    %c2_i32_86 = arith.constant 2 : i32
    %394 = vector.broadcast %c2_i32_86 : i32 to vector<16x64xi32>
    %395 = arith.cmpi sge, %22, %394 : vector<16x64xi32>
    %cst_87 = arith.constant 0.000000e+00 : f32
    %396 = vector.broadcast %cst_87 : f32 to vector<16x64xf32>
    %397 = arith.select %395, %393, %396 : vector<16x64xi1>, vector<16x64xf32>
    %398 = vector.extract_strided_slice %376 {offsets = [1, 0], sizes = [1, 64], strides = [1, 1]} : vector<4x64xf32> to vector<1x64xf32>
    %399 = vector.broadcast %398 : vector<1x64xf32> to vector<16x64xf32>
    %400 = arith.mulf %397, %399 : vector<16x64xf32>
    %401 = arith.addf %390, %400 : vector<16x64xf32>
    %cst_88 = arith.constant 0.000000e+00 : f32
    %402 = vector.broadcast %cst_88 : f32 to vector<3x64xf32>
    %403 = vector.extract_strided_slice %373 {offsets = [0, 0], sizes = [13, 64], strides = [1, 1]} : vector<16x64xf32> to vector<13x64xf32>
    %404 = tpu.concatenate %402, %403 in 0 : vector<3x64xf32>, vector<13x64xf32> -> vector<16x64xf32>
    %c3_i32_89 = arith.constant 3 : i32
    %405 = vector.broadcast %c3_i32_89 : i32 to vector<16x64xi32>
    %406 = arith.cmpi sge, %22, %405 : vector<16x64xi32>
    %cst_90 = arith.constant 0.000000e+00 : f32
    %407 = vector.broadcast %cst_90 : f32 to vector<16x64xf32>
    %408 = arith.select %406, %404, %407 : vector<16x64xi1>, vector<16x64xf32>
    %409 = vector.extract_strided_slice %376 {offsets = [0, 0], sizes = [1, 64], strides = [1, 1]} : vector<4x64xf32> to vector<1x64xf32>
    %410 = vector.broadcast %409 : vector<1x64xf32> to vector<16x64xf32>
    %411 = arith.mulf %408, %410 : vector<16x64xf32>
    %412 = arith.addf %401, %411 : vector<16x64xf32>
    %c1_91 = arith.constant 1 : index
    %c0_92 = arith.constant 0 : index
    %413 = vector.load %arg7[%c1_91, %c0_92] : memref<2x64xf32, #tpu.memory_space<vmem>>, vector<1x64xf32>
    %414 = vector.broadcast %413 : vector<1x64xf32> to vector<16x64xf32>
    %415 = arith.addf %412, %414 : vector<16x64xf32>
    %cst_93 = arith.constant 0.000000e+00 : f32
    %416 = vector.broadcast %cst_93 : f32 to vector<16x64xf32>
    %417 = arith.subf %416, %415 : vector<16x64xf32>
    %418 = math.exp %417 : vector<16x64xf32>
    %cst_94 = arith.constant 1.000000e+00 : f32
    %419 = vector.broadcast %cst_94 : f32 to vector<16x64xf32>
    %420 = arith.addf %419, %418 : vector<16x64xf32>
    %cst_95 = arith.constant 1.000000e+00 : f32
    %421 = vector.broadcast %cst_95 : f32 to vector<16x64xf32>
    %422 = arith.divf %421, %420 : vector<16x64xf32>
    %423 = arith.mulf %415, %422 : vector<16x64xf32>
    %c1_96 = arith.constant 1 : index
    %c0_97 = arith.constant 0 : index
    %c0_98 = arith.constant 0 : index
    %424 = vector.load %arg8[%c1_96, %c0_97, %c0_98] : memref<2x64x96xf32, #tpu.memory_space<vmem>>, vector<1x64x96xf32>
    %425 = vector.shape_cast %424 : vector<1x64x96xf32> to vector<64x96xf32>
    %cst_99 = arith.constant dense<0.000000e+00> : vector<16x96xf32>
    %426 = tpu.matmul %423, %425, %cst_99 {dimension_numbers = #tpu.dot_dimension_numbers<[1], [0], [0], [1], [0, 0, 1, 1], [], []>} : vector<16x64xf32>, vector<64x96xf32>, vector<16x96xf32> -> vector<16x96xf32>
    %427 = vector.extract_strided_slice %426 {offsets = [0, 0], sizes = [16, 64], strides = [1, 1]} : vector<16x96xf32> to vector<16x64xf32>
    %c1_100 = arith.constant 1 : index
    %c0_101 = arith.constant 0 : index
    %428 = vector.load %arg9[%c1_100, %c0_101] : memref<2x64xf32, #tpu.memory_space<vmem>>, vector<1x64xf32>
    %429 = vector.broadcast %428 : vector<1x64xf32> to vector<16x64xf32>
    %430 = arith.addf %427, %429 : vector<16x64xf32>
    %cst_102 = arith.constant 2.000000e+01 : f32
    %431 = vector.broadcast %cst_102 : f32 to vector<16x64xf32>
    %432 = arith.cmpf ogt, %430, %431 : vector<16x64xf32>
    %cst_103 = arith.constant 2.000000e+01 : f32
    %433 = vector.broadcast %cst_103 : f32 to vector<16x64xf32>
    %434 = arith.minimumf %430, %433 : vector<16x64xf32>
    %435 = math.exp %434 : vector<16x64xf32>
    %cst_104 = arith.constant 1.000000e+00 : f32
    %436 = vector.broadcast %cst_104 : f32 to vector<16x64xf32>
    %437 = arith.addf %436, %435 : vector<16x64xf32>
    %438 = math.log %437 : vector<16x64xf32>
    %439 = arith.select %432, %430, %438 : vector<16x64xi1>, vector<16x64xf32>
    %440 = vector.extract_strided_slice %426 {offsets = [0, 64], sizes = [16, 16], strides = [1, 1]} : vector<16x96xf32> to vector<16x16xf32>
    %441 = vector.extract_strided_slice %426 {offsets = [0, 80], sizes = [16, 16], strides = [1, 1]} : vector<16x96xf32> to vector<16x16xf32>
    %c1_105 = arith.constant 1 : index
    %c0_106 = arith.constant 0 : index
    %c0_107 = arith.constant 0 : index
    %442 = vector.load %arg10[%c1_105, %c0_106, %c0_107] : memref<2x16x64xf32, #tpu.memory_space<vmem>>, vector<1x16x64xf32>
    %443 = vector.shape_cast %442 : vector<1x16x64xf32> to vector<16x64xf32>
    %444 = arith.mulf %439, %423 : vector<16x64xf32>
    %445 = vector.extract_strided_slice %439 {offsets = [0, 0], sizes = [8, 64], strides = [1, 1]} : vector<16x64xf32> to vector<8x64xf32>
    %446 = vector.extract_strided_slice %444 {offsets = [0, 0], sizes = [8, 64], strides = [1, 1]} : vector<16x64xf32> to vector<8x64xf32>
    %447 = vector.extract_strided_slice %440 {offsets = [0, 0], sizes = [8, 16], strides = [1, 1]} : vector<16x16xf32> to vector<8x16xf32>
    %448 = vector.extract_strided_slice %441 {offsets = [0, 0], sizes = [8, 16], strides = [1, 1]} : vector<16x16xf32> to vector<8x16xf32>
    %449 = vector.shape_cast %445 : vector<8x64xf32> to vector<8x1x64xf32>
    %450 = vector.shape_cast %443 : vector<16x64xf32> to vector<1x16x64xf32>
    %451 = vector.broadcast %449 : vector<8x1x64xf32> to vector<8x16x64xf32>
    %452 = vector.broadcast %450 : vector<1x16x64xf32> to vector<8x16x64xf32>
    %453 = arith.mulf %451, %452 : vector<8x16x64xf32>
    %454 = math.exp %453 : vector<8x16x64xf32>
    %455 = vector.shape_cast %446 : vector<8x64xf32> to vector<8x1x64xf32>
    %456 = vector.shape_cast %447 : vector<8x16xf32> to vector<8x16x1xf32>
    %457 = vector.broadcast %455 : vector<8x1x64xf32> to vector<8x16x64xf32>
    %458 = vector.broadcast %456 : vector<8x16x1xf32> to vector<8x16x64xf32>
    %459 = arith.mulf %457, %458 : vector<8x16x64xf32>
    %460 = vector.shape_cast %448 : vector<8x16xf32> to vector<8x16x1xf32>
    %cst_108 = arith.constant 0.000000e+00 : f32
    %461 = vector.broadcast %cst_108 : f32 to vector<16x64xf32>
    %462 = vector.extract_strided_slice %454 {offsets = [0, 0, 0], sizes = [1, 16, 64], strides = [1, 1, 1]} : vector<8x16x64xf32> to vector<1x16x64xf32>
    %463 = vector.shape_cast %462 : vector<1x16x64xf32> to vector<16x64xf32>
    %464 = arith.mulf %463, %461 : vector<16x64xf32>
    %465 = vector.extract_strided_slice %459 {offsets = [0, 0, 0], sizes = [1, 16, 64], strides = [1, 1, 1]} : vector<8x16x64xf32> to vector<1x16x64xf32>
    %466 = vector.shape_cast %465 : vector<1x16x64xf32> to vector<16x64xf32>
    %467 = arith.addf %464, %466 : vector<16x64xf32>
    %468 = vector.extract_strided_slice %460 {offsets = [0, 0, 0], sizes = [1, 16, 1], strides = [1, 1, 1]} : vector<8x16x1xf32> to vector<1x16x1xf32>
    %469 = vector.shape_cast %468 : vector<1x16x1xf32> to vector<16x1xf32>
    %470 = vector.broadcast %469 : vector<16x1xf32> to vector<16x64xf32>
    %471 = arith.mulf %467, %470 : vector<16x64xf32>
    %cst_109 = arith.constant dense<0.000000e+00> : vector<64xf32>
    %472 = vector.multi_reduction <add>, %471, %cst_109 [0] : vector<16x64xf32> to vector<64xf32>
    %473 = vector.shape_cast %472 : vector<64xf32> to vector<1x64xf32>
    %474 = vector.extract_strided_slice %454 {offsets = [1, 0, 0], sizes = [1, 16, 64], strides = [1, 1, 1]} : vector<8x16x64xf32> to vector<1x16x64xf32>
    %475 = vector.shape_cast %474 : vector<1x16x64xf32> to vector<16x64xf32>
    %476 = arith.mulf %475, %467 : vector<16x64xf32>
    %477 = vector.extract_strided_slice %459 {offsets = [1, 0, 0], sizes = [1, 16, 64], strides = [1, 1, 1]} : vector<8x16x64xf32> to vector<1x16x64xf32>
    %478 = vector.shape_cast %477 : vector<1x16x64xf32> to vector<16x64xf32>
    %479 = arith.addf %476, %478 : vector<16x64xf32>
    %480 = vector.extract_strided_slice %460 {offsets = [1, 0, 0], sizes = [1, 16, 1], strides = [1, 1, 1]} : vector<8x16x1xf32> to vector<1x16x1xf32>
    %481 = vector.shape_cast %480 : vector<1x16x1xf32> to vector<16x1xf32>
    %482 = vector.broadcast %481 : vector<16x1xf32> to vector<16x64xf32>
    %483 = arith.mulf %479, %482 : vector<16x64xf32>
    %cst_110 = arith.constant dense<0.000000e+00> : vector<64xf32>
    %484 = vector.multi_reduction <add>, %483, %cst_110 [0] : vector<16x64xf32> to vector<64xf32>
    %485 = vector.shape_cast %484 : vector<64xf32> to vector<1x64xf32>
    %486 = vector.extract_strided_slice %454 {offsets = [2, 0, 0], sizes = [1, 16, 64], strides = [1, 1, 1]} : vector<8x16x64xf32> to vector<1x16x64xf32>
    %487 = vector.shape_cast %486 : vector<1x16x64xf32> to vector<16x64xf32>
    %488 = arith.mulf %487, %479 : vector<16x64xf32>
    %489 = vector.extract_strided_slice %459 {offsets = [2, 0, 0], sizes = [1, 16, 64], strides = [1, 1, 1]} : vector<8x16x64xf32> to vector<1x16x64xf32>
    %490 = vector.shape_cast %489 : vector<1x16x64xf32> to vector<16x64xf32>
    %491 = arith.addf %488, %490 : vector<16x64xf32>
    %492 = vector.extract_strided_slice %460 {offsets = [2, 0, 0], sizes = [1, 16, 1], strides = [1, 1, 1]} : vector<8x16x1xf32> to vector<1x16x1xf32>
    %493 = vector.shape_cast %492 : vector<1x16x1xf32> to vector<16x1xf32>
    %494 = vector.broadcast %493 : vector<16x1xf32> to vector<16x64xf32>
    %495 = arith.mulf %491, %494 : vector<16x64xf32>
    %cst_111 = arith.constant dense<0.000000e+00> : vector<64xf32>
    %496 = vector.multi_reduction <add>, %495, %cst_111 [0] : vector<16x64xf32> to vector<64xf32>
    %497 = vector.shape_cast %496 : vector<64xf32> to vector<1x64xf32>
    %498 = vector.extract_strided_slice %454 {offsets = [3, 0, 0], sizes = [1, 16, 64], strides = [1, 1, 1]} : vector<8x16x64xf32> to vector<1x16x64xf32>
    %499 = vector.shape_cast %498 : vector<1x16x64xf32> to vector<16x64xf32>
    %500 = arith.mulf %499, %491 : vector<16x64xf32>
    %501 = vector.extract_strided_slice %459 {offsets = [3, 0, 0], sizes = [1, 16, 64], strides = [1, 1, 1]} : vector<8x16x64xf32> to vector<1x16x64xf32>
    %502 = vector.shape_cast %501 : vector<1x16x64xf32> to vector<16x64xf32>
    %503 = arith.addf %500, %502 : vector<16x64xf32>
    %504 = vector.extract_strided_slice %460 {offsets = [3, 0, 0], sizes = [1, 16, 1], strides = [1, 1, 1]} : vector<8x16x1xf32> to vector<1x16x1xf32>
    %505 = vector.shape_cast %504 : vector<1x16x1xf32> to vector<16x1xf32>
    %506 = vector.broadcast %505 : vector<16x1xf32> to vector<16x64xf32>
    %507 = arith.mulf %503, %506 : vector<16x64xf32>
    %cst_112 = arith.constant dense<0.000000e+00> : vector<64xf32>
    %508 = vector.multi_reduction <add>, %507, %cst_112 [0] : vector<16x64xf32> to vector<64xf32>
    %509 = vector.shape_cast %508 : vector<64xf32> to vector<1x64xf32>
    %510 = vector.extract_strided_slice %454 {offsets = [4, 0, 0], sizes = [1, 16, 64], strides = [1, 1, 1]} : vector<8x16x64xf32> to vector<1x16x64xf32>
    %511 = vector.shape_cast %510 : vector<1x16x64xf32> to vector<16x64xf32>
    %512 = arith.mulf %511, %503 : vector<16x64xf32>
    %513 = vector.extract_strided_slice %459 {offsets = [4, 0, 0], sizes = [1, 16, 64], strides = [1, 1, 1]} : vector<8x16x64xf32> to vector<1x16x64xf32>
    %514 = vector.shape_cast %513 : vector<1x16x64xf32> to vector<16x64xf32>
    %515 = arith.addf %512, %514 : vector<16x64xf32>
    %516 = vector.extract_strided_slice %460 {offsets = [4, 0, 0], sizes = [1, 16, 1], strides = [1, 1, 1]} : vector<8x16x1xf32> to vector<1x16x1xf32>
    %517 = vector.shape_cast %516 : vector<1x16x1xf32> to vector<16x1xf32>
    %518 = vector.broadcast %517 : vector<16x1xf32> to vector<16x64xf32>
    %519 = arith.mulf %515, %518 : vector<16x64xf32>
    %cst_113 = arith.constant dense<0.000000e+00> : vector<64xf32>
    %520 = vector.multi_reduction <add>, %519, %cst_113 [0] : vector<16x64xf32> to vector<64xf32>
    %521 = vector.shape_cast %520 : vector<64xf32> to vector<1x64xf32>
    %522 = vector.extract_strided_slice %454 {offsets = [5, 0, 0], sizes = [1, 16, 64], strides = [1, 1, 1]} : vector<8x16x64xf32> to vector<1x16x64xf32>
    %523 = vector.shape_cast %522 : vector<1x16x64xf32> to vector<16x64xf32>
    %524 = arith.mulf %523, %515 : vector<16x64xf32>
    %525 = vector.extract_strided_slice %459 {offsets = [5, 0, 0], sizes = [1, 16, 64], strides = [1, 1, 1]} : vector<8x16x64xf32> to vector<1x16x64xf32>
    %526 = vector.shape_cast %525 : vector<1x16x64xf32> to vector<16x64xf32>
    %527 = arith.addf %524, %526 : vector<16x64xf32>
    %528 = vector.extract_strided_slice %460 {offsets = [5, 0, 0], sizes = [1, 16, 1], strides = [1, 1, 1]} : vector<8x16x1xf32> to vector<1x16x1xf32>
    %529 = vector.shape_cast %528 : vector<1x16x1xf32> to vector<16x1xf32>
    %530 = vector.broadcast %529 : vector<16x1xf32> to vector<16x64xf32>
    %531 = arith.mulf %527, %530 : vector<16x64xf32>
    %cst_114 = arith.constant dense<0.000000e+00> : vector<64xf32>
    %532 = vector.multi_reduction <add>, %531, %cst_114 [0] : vector<16x64xf32> to vector<64xf32>
    %533 = vector.shape_cast %532 : vector<64xf32> to vector<1x64xf32>
    %534 = vector.extract_strided_slice %454 {offsets = [6, 0, 0], sizes = [1, 16, 64], strides = [1, 1, 1]} : vector<8x16x64xf32> to vector<1x16x64xf32>
    %535 = vector.shape_cast %534 : vector<1x16x64xf32> to vector<16x64xf32>
    %536 = arith.mulf %535, %527 : vector<16x64xf32>
    %537 = vector.extract_strided_slice %459 {offsets = [6, 0, 0], sizes = [1, 16, 64], strides = [1, 1, 1]} : vector<8x16x64xf32> to vector<1x16x64xf32>
    %538 = vector.shape_cast %537 : vector<1x16x64xf32> to vector<16x64xf32>
    %539 = arith.addf %536, %538 : vector<16x64xf32>
    %540 = vector.extract_strided_slice %460 {offsets = [6, 0, 0], sizes = [1, 16, 1], strides = [1, 1, 1]} : vector<8x16x1xf32> to vector<1x16x1xf32>
    %541 = vector.shape_cast %540 : vector<1x16x1xf32> to vector<16x1xf32>
    %542 = vector.broadcast %541 : vector<16x1xf32> to vector<16x64xf32>
    %543 = arith.mulf %539, %542 : vector<16x64xf32>
    %cst_115 = arith.constant dense<0.000000e+00> : vector<64xf32>
    %544 = vector.multi_reduction <add>, %543, %cst_115 [0] : vector<16x64xf32> to vector<64xf32>
    %545 = vector.shape_cast %544 : vector<64xf32> to vector<1x64xf32>
    %546 = vector.extract_strided_slice %454 {offsets = [7, 0, 0], sizes = [1, 16, 64], strides = [1, 1, 1]} : vector<8x16x64xf32> to vector<1x16x64xf32>
    %547 = vector.shape_cast %546 : vector<1x16x64xf32> to vector<16x64xf32>
    %548 = arith.mulf %547, %539 : vector<16x64xf32>
    %549 = vector.extract_strided_slice %459 {offsets = [7, 0, 0], sizes = [1, 16, 64], strides = [1, 1, 1]} : vector<8x16x64xf32> to vector<1x16x64xf32>
    %550 = vector.shape_cast %549 : vector<1x16x64xf32> to vector<16x64xf32>
    %551 = arith.addf %548, %550 : vector<16x64xf32>
    %552 = vector.extract_strided_slice %460 {offsets = [7, 0, 0], sizes = [1, 16, 1], strides = [1, 1, 1]} : vector<8x16x1xf32> to vector<1x16x1xf32>
    %553 = vector.shape_cast %552 : vector<1x16x1xf32> to vector<16x1xf32>
    %554 = vector.broadcast %553 : vector<16x1xf32> to vector<16x64xf32>
    %555 = arith.mulf %551, %554 : vector<16x64xf32>
    %cst_116 = arith.constant dense<0.000000e+00> : vector<64xf32>
    %556 = vector.multi_reduction <add>, %555, %cst_116 [0] : vector<16x64xf32> to vector<64xf32>
    %557 = vector.shape_cast %556 : vector<64xf32> to vector<1x64xf32>
    %558 = tpu.concatenate %473, %485, %497, %509, %521, %533, %545, %557 in 0 : vector<1x64xf32>, vector<1x64xf32>, vector<1x64xf32>, vector<1x64xf32>, vector<1x64xf32>, vector<1x64xf32>, vector<1x64xf32>, vector<1x64xf32> -> vector<8x64xf32>
    %559 = vector.extract_strided_slice %439 {offsets = [8, 0], sizes = [8, 64], strides = [1, 1]} : vector<16x64xf32> to vector<8x64xf32>
    %560 = vector.extract_strided_slice %444 {offsets = [8, 0], sizes = [8, 64], strides = [1, 1]} : vector<16x64xf32> to vector<8x64xf32>
    %561 = vector.extract_strided_slice %440 {offsets = [8, 0], sizes = [8, 16], strides = [1, 1]} : vector<16x16xf32> to vector<8x16xf32>
    %562 = vector.extract_strided_slice %441 {offsets = [8, 0], sizes = [8, 16], strides = [1, 1]} : vector<16x16xf32> to vector<8x16xf32>
    %563 = vector.shape_cast %559 : vector<8x64xf32> to vector<8x1x64xf32>
    %564 = vector.shape_cast %443 : vector<16x64xf32> to vector<1x16x64xf32>
    %565 = vector.broadcast %563 : vector<8x1x64xf32> to vector<8x16x64xf32>
    %566 = vector.broadcast %564 : vector<1x16x64xf32> to vector<8x16x64xf32>
    %567 = arith.mulf %565, %566 : vector<8x16x64xf32>
    %568 = math.exp %567 : vector<8x16x64xf32>
    %569 = vector.shape_cast %560 : vector<8x64xf32> to vector<8x1x64xf32>
    %570 = vector.shape_cast %561 : vector<8x16xf32> to vector<8x16x1xf32>
    %571 = vector.broadcast %569 : vector<8x1x64xf32> to vector<8x16x64xf32>
    %572 = vector.broadcast %570 : vector<8x16x1xf32> to vector<8x16x64xf32>
    %573 = arith.mulf %571, %572 : vector<8x16x64xf32>
    %574 = vector.shape_cast %562 : vector<8x16xf32> to vector<8x16x1xf32>
    %cst_117 = arith.constant 0.000000e+00 : f32
    %575 = vector.broadcast %cst_117 : f32 to vector<16x64xf32>
    %576 = vector.extract_strided_slice %568 {offsets = [0, 0, 0], sizes = [1, 16, 64], strides = [1, 1, 1]} : vector<8x16x64xf32> to vector<1x16x64xf32>
    %577 = vector.shape_cast %576 : vector<1x16x64xf32> to vector<16x64xf32>
    %578 = arith.mulf %577, %575 : vector<16x64xf32>
    %579 = vector.extract_strided_slice %573 {offsets = [0, 0, 0], sizes = [1, 16, 64], strides = [1, 1, 1]} : vector<8x16x64xf32> to vector<1x16x64xf32>
    %580 = vector.shape_cast %579 : vector<1x16x64xf32> to vector<16x64xf32>
    %581 = arith.addf %578, %580 : vector<16x64xf32>
    %582 = vector.extract_strided_slice %574 {offsets = [0, 0, 0], sizes = [1, 16, 1], strides = [1, 1, 1]} : vector<8x16x1xf32> to vector<1x16x1xf32>
    %583 = vector.shape_cast %582 : vector<1x16x1xf32> to vector<16x1xf32>
    %584 = vector.broadcast %583 : vector<16x1xf32> to vector<16x64xf32>
    %585 = arith.mulf %581, %584 : vector<16x64xf32>
    %cst_118 = arith.constant dense<0.000000e+00> : vector<64xf32>
    %586 = vector.multi_reduction <add>, %585, %cst_118 [0] : vector<16x64xf32> to vector<64xf32>
    %587 = vector.shape_cast %586 : vector<64xf32> to vector<1x64xf32>
    %588 = vector.extract_strided_slice %568 {offsets = [1, 0, 0], sizes = [1, 16, 64], strides = [1, 1, 1]} : vector<8x16x64xf32> to vector<1x16x64xf32>
    %589 = vector.shape_cast %588 : vector<1x16x64xf32> to vector<16x64xf32>
    %590 = arith.mulf %589, %581 : vector<16x64xf32>
    %591 = vector.extract_strided_slice %573 {offsets = [1, 0, 0], sizes = [1, 16, 64], strides = [1, 1, 1]} : vector<8x16x64xf32> to vector<1x16x64xf32>
    %592 = vector.shape_cast %591 : vector<1x16x64xf32> to vector<16x64xf32>
    %593 = arith.addf %590, %592 : vector<16x64xf32>
    %594 = vector.extract_strided_slice %574 {offsets = [1, 0, 0], sizes = [1, 16, 1], strides = [1, 1, 1]} : vector<8x16x1xf32> to vector<1x16x1xf32>
    %595 = vector.shape_cast %594 : vector<1x16x1xf32> to vector<16x1xf32>
    %596 = vector.broadcast %595 : vector<16x1xf32> to vector<16x64xf32>
    %597 = arith.mulf %593, %596 : vector<16x64xf32>
    %cst_119 = arith.constant dense<0.000000e+00> : vector<64xf32>
    %598 = vector.multi_reduction <add>, %597, %cst_119 [0] : vector<16x64xf32> to vector<64xf32>
    %599 = vector.shape_cast %598 : vector<64xf32> to vector<1x64xf32>
    %600 = vector.extract_strided_slice %568 {offsets = [2, 0, 0], sizes = [1, 16, 64], strides = [1, 1, 1]} : vector<8x16x64xf32> to vector<1x16x64xf32>
    %601 = vector.shape_cast %600 : vector<1x16x64xf32> to vector<16x64xf32>
    %602 = arith.mulf %601, %593 : vector<16x64xf32>
    %603 = vector.extract_strided_slice %573 {offsets = [2, 0, 0], sizes = [1, 16, 64], strides = [1, 1, 1]} : vector<8x16x64xf32> to vector<1x16x64xf32>
    %604 = vector.shape_cast %603 : vector<1x16x64xf32> to vector<16x64xf32>
    %605 = arith.addf %602, %604 : vector<16x64xf32>
    %606 = vector.extract_strided_slice %574 {offsets = [2, 0, 0], sizes = [1, 16, 1], strides = [1, 1, 1]} : vector<8x16x1xf32> to vector<1x16x1xf32>
    %607 = vector.shape_cast %606 : vector<1x16x1xf32> to vector<16x1xf32>
    %608 = vector.broadcast %607 : vector<16x1xf32> to vector<16x64xf32>
    %609 = arith.mulf %605, %608 : vector<16x64xf32>
    %cst_120 = arith.constant dense<0.000000e+00> : vector<64xf32>
    %610 = vector.multi_reduction <add>, %609, %cst_120 [0] : vector<16x64xf32> to vector<64xf32>
    %611 = vector.shape_cast %610 : vector<64xf32> to vector<1x64xf32>
    %612 = vector.extract_strided_slice %568 {offsets = [3, 0, 0], sizes = [1, 16, 64], strides = [1, 1, 1]} : vector<8x16x64xf32> to vector<1x16x64xf32>
    %613 = vector.shape_cast %612 : vector<1x16x64xf32> to vector<16x64xf32>
    %614 = arith.mulf %613, %605 : vector<16x64xf32>
    %615 = vector.extract_strided_slice %573 {offsets = [3, 0, 0], sizes = [1, 16, 64], strides = [1, 1, 1]} : vector<8x16x64xf32> to vector<1x16x64xf32>
    %616 = vector.shape_cast %615 : vector<1x16x64xf32> to vector<16x64xf32>
    %617 = arith.addf %614, %616 : vector<16x64xf32>
    %618 = vector.extract_strided_slice %574 {offsets = [3, 0, 0], sizes = [1, 16, 1], strides = [1, 1, 1]} : vector<8x16x1xf32> to vector<1x16x1xf32>
    %619 = vector.shape_cast %618 : vector<1x16x1xf32> to vector<16x1xf32>
    %620 = vector.broadcast %619 : vector<16x1xf32> to vector<16x64xf32>
    %621 = arith.mulf %617, %620 : vector<16x64xf32>
    %cst_121 = arith.constant dense<0.000000e+00> : vector<64xf32>
    %622 = vector.multi_reduction <add>, %621, %cst_121 [0] : vector<16x64xf32> to vector<64xf32>
    %623 = vector.shape_cast %622 : vector<64xf32> to vector<1x64xf32>
    %624 = vector.extract_strided_slice %568 {offsets = [4, 0, 0], sizes = [1, 16, 64], strides = [1, 1, 1]} : vector<8x16x64xf32> to vector<1x16x64xf32>
    %625 = vector.shape_cast %624 : vector<1x16x64xf32> to vector<16x64xf32>
    %626 = arith.mulf %625, %617 : vector<16x64xf32>
    %627 = vector.extract_strided_slice %573 {offsets = [4, 0, 0], sizes = [1, 16, 64], strides = [1, 1, 1]} : vector<8x16x64xf32> to vector<1x16x64xf32>
    %628 = vector.shape_cast %627 : vector<1x16x64xf32> to vector<16x64xf32>
    %629 = arith.addf %626, %628 : vector<16x64xf32>
    %630 = vector.extract_strided_slice %574 {offsets = [4, 0, 0], sizes = [1, 16, 1], strides = [1, 1, 1]} : vector<8x16x1xf32> to vector<1x16x1xf32>
    %631 = vector.shape_cast %630 : vector<1x16x1xf32> to vector<16x1xf32>
    %632 = vector.broadcast %631 : vector<16x1xf32> to vector<16x64xf32>
    %633 = arith.mulf %629, %632 : vector<16x64xf32>
    %cst_122 = arith.constant dense<0.000000e+00> : vector<64xf32>
    %634 = vector.multi_reduction <add>, %633, %cst_122 [0] : vector<16x64xf32> to vector<64xf32>
    %635 = vector.shape_cast %634 : vector<64xf32> to vector<1x64xf32>
    %636 = vector.extract_strided_slice %568 {offsets = [5, 0, 0], sizes = [1, 16, 64], strides = [1, 1, 1]} : vector<8x16x64xf32> to vector<1x16x64xf32>
    %637 = vector.shape_cast %636 : vector<1x16x64xf32> to vector<16x64xf32>
    %638 = arith.mulf %637, %629 : vector<16x64xf32>
    %639 = vector.extract_strided_slice %573 {offsets = [5, 0, 0], sizes = [1, 16, 64], strides = [1, 1, 1]} : vector<8x16x64xf32> to vector<1x16x64xf32>
    %640 = vector.shape_cast %639 : vector<1x16x64xf32> to vector<16x64xf32>
    %641 = arith.addf %638, %640 : vector<16x64xf32>
    %642 = vector.extract_strided_slice %574 {offsets = [5, 0, 0], sizes = [1, 16, 1], strides = [1, 1, 1]} : vector<8x16x1xf32> to vector<1x16x1xf32>
    %643 = vector.shape_cast %642 : vector<1x16x1xf32> to vector<16x1xf32>
    %644 = vector.broadcast %643 : vector<16x1xf32> to vector<16x64xf32>
    %645 = arith.mulf %641, %644 : vector<16x64xf32>
    %cst_123 = arith.constant dense<0.000000e+00> : vector<64xf32>
    %646 = vector.multi_reduction <add>, %645, %cst_123 [0] : vector<16x64xf32> to vector<64xf32>
    %647 = vector.shape_cast %646 : vector<64xf32> to vector<1x64xf32>
    %648 = vector.extract_strided_slice %568 {offsets = [6, 0, 0], sizes = [1, 16, 64], strides = [1, 1, 1]} : vector<8x16x64xf32> to vector<1x16x64xf32>
    %649 = vector.shape_cast %648 : vector<1x16x64xf32> to vector<16x64xf32>
    %650 = arith.mulf %649, %641 : vector<16x64xf32>
    %651 = vector.extract_strided_slice %573 {offsets = [6, 0, 0], sizes = [1, 16, 64], strides = [1, 1, 1]} : vector<8x16x64xf32> to vector<1x16x64xf32>
    %652 = vector.shape_cast %651 : vector<1x16x64xf32> to vector<16x64xf32>
    %653 = arith.addf %650, %652 : vector<16x64xf32>
    %654 = vector.extract_strided_slice %574 {offsets = [6, 0, 0], sizes = [1, 16, 1], strides = [1, 1, 1]} : vector<8x16x1xf32> to vector<1x16x1xf32>
    %655 = vector.shape_cast %654 : vector<1x16x1xf32> to vector<16x1xf32>
    %656 = vector.broadcast %655 : vector<16x1xf32> to vector<16x64xf32>
    %657 = arith.mulf %653, %656 : vector<16x64xf32>
    %cst_124 = arith.constant dense<0.000000e+00> : vector<64xf32>
    %658 = vector.multi_reduction <add>, %657, %cst_124 [0] : vector<16x64xf32> to vector<64xf32>
    %659 = vector.shape_cast %658 : vector<64xf32> to vector<1x64xf32>
    %660 = vector.extract_strided_slice %568 {offsets = [7, 0, 0], sizes = [1, 16, 64], strides = [1, 1, 1]} : vector<8x16x64xf32> to vector<1x16x64xf32>
    %661 = vector.shape_cast %660 : vector<1x16x64xf32> to vector<16x64xf32>
    %662 = arith.mulf %661, %653 : vector<16x64xf32>
    %663 = vector.extract_strided_slice %573 {offsets = [7, 0, 0], sizes = [1, 16, 64], strides = [1, 1, 1]} : vector<8x16x64xf32> to vector<1x16x64xf32>
    %664 = vector.shape_cast %663 : vector<1x16x64xf32> to vector<16x64xf32>
    %665 = arith.addf %662, %664 : vector<16x64xf32>
    %666 = vector.extract_strided_slice %574 {offsets = [7, 0, 0], sizes = [1, 16, 1], strides = [1, 1, 1]} : vector<8x16x1xf32> to vector<1x16x1xf32>
    %667 = vector.shape_cast %666 : vector<1x16x1xf32> to vector<16x1xf32>
    %668 = vector.broadcast %667 : vector<16x1xf32> to vector<16x64xf32>
    %669 = arith.mulf %665, %668 : vector<16x64xf32>
    %cst_125 = arith.constant dense<0.000000e+00> : vector<64xf32>
    %670 = vector.multi_reduction <add>, %669, %cst_125 [0] : vector<16x64xf32> to vector<64xf32>
    %671 = vector.shape_cast %670 : vector<64xf32> to vector<1x64xf32>
    %672 = tpu.concatenate %587, %599, %611, %623, %635, %647, %659, %671 in 0 : vector<1x64xf32>, vector<1x64xf32>, vector<1x64xf32>, vector<1x64xf32>, vector<1x64xf32>, vector<1x64xf32>, vector<1x64xf32>, vector<1x64xf32> -> vector<8x64xf32>
    %673 = tpu.concatenate %558, %672 in 0 : vector<8x64xf32>, vector<8x64xf32> -> vector<16x64xf32>
    %c1_126 = arith.constant 1 : index
    %c0_127 = arith.constant 0 : index
    %674 = vector.load %arg11[%c1_126, %c0_127] : memref<2x64xf32, #tpu.memory_space<vmem>>, vector<1x64xf32>
    %675 = vector.broadcast %674 : vector<1x64xf32> to vector<16x64xf32>
    %676 = arith.mulf %675, %423 : vector<16x64xf32>
    %677 = arith.addf %673, %676 : vector<16x64xf32>
    %cst_128 = arith.constant 0.000000e+00 : f32
    %678 = vector.broadcast %cst_128 : f32 to vector<16x64xf32>
    %679 = arith.subf %678, %374 : vector<16x64xf32>
    %680 = math.exp %679 : vector<16x64xf32>
    %cst_129 = arith.constant 1.000000e+00 : f32
    %681 = vector.broadcast %cst_129 : f32 to vector<16x64xf32>
    %682 = arith.addf %681, %680 : vector<16x64xf32>
    %cst_130 = arith.constant 1.000000e+00 : f32
    %683 = vector.broadcast %cst_130 : f32 to vector<16x64xf32>
    %684 = arith.divf %683, %682 : vector<16x64xf32>
    %685 = arith.mulf %374, %684 : vector<16x64xf32>
    %686 = arith.mulf %677, %685 : vector<16x64xf32>
    %c1_131 = arith.constant 1 : index
    %c0_132 = arith.constant 0 : index
    %c0_133 = arith.constant 0 : index
    %687 = vector.load %arg12[%c1_131, %c0_132, %c0_133] : memref<2x64x32xf32, #tpu.memory_space<vmem>>, vector<1x64x32xf32>
    %688 = vector.shape_cast %687 : vector<1x64x32xf32> to vector<64x32xf32>
    %cst_134 = arith.constant dense<0.000000e+00> : vector<16x32xf32>
    %689 = tpu.matmul %686, %688, %cst_134 {dimension_numbers = #tpu.dot_dimension_numbers<[1], [0], [0], [1], [0, 0, 1, 1], [], []>} : vector<16x64xf32>, vector<64x32xf32>, vector<16x32xf32> -> vector<16x32xf32>
    %690 = arith.addf %689, %356 : vector<16x32xf32>
    %c0_135 = arith.constant 0 : index
    %c0_136 = arith.constant 0 : index
    %691 = vector.load %arg13[%c0_135, %c0_136] : memref<32x3xf32, #tpu.memory_space<vmem>>, vector<32x3xf32>
    %cst_137 = arith.constant dense<0.000000e+00> : vector<16x3xf32>
    %692 = tpu.matmul %690, %691, %cst_137 {dimension_numbers = #tpu.dot_dimension_numbers<[1], [0], [0], [1], [0, 0, 1, 1], [], []>} : vector<16x32xf32>, vector<32x3xf32>, vector<16x3xf32> -> vector<16x3xf32>
    %c0_138 = arith.constant 0 : index
    %c0_139 = arith.constant 0 : index
    %693 = vector.load %arg14[%c0_138, %c0_139] : memref<1x3xf32, #tpu.memory_space<vmem>>, vector<1x3xf32>
    %694 = vector.broadcast %693 : vector<1x3xf32> to vector<16x3xf32>
    %695 = arith.addf %692, %694 : vector<16x3xf32>
    %cst_140 = arith.constant 0.000000e+00 : f32
    %696 = vector.broadcast %cst_140 : f32 to vector<16x3xf32>
    %697 = arith.subf %696, %695 : vector<16x3xf32>
    %698 = math.exp %697 : vector<16x3xf32>
    %cst_141 = arith.constant 1.000000e+00 : f32
    %699 = vector.broadcast %cst_141 : f32 to vector<16x3xf32>
    %700 = arith.addf %699, %698 : vector<16x3xf32>
    %cst_142 = arith.constant 1.000000e+00 : f32
    %701 = vector.broadcast %cst_142 : f32 to vector<16x3xf32>
    %702 = arith.divf %701, %700 : vector<16x3xf32>
    %c0_143 = arith.constant 0 : index
    %c0_144 = arith.constant 0 : index
    %703 = vector.load %arg15[%c0_143, %c0_144] : memref<16x3xf32, #tpu.memory_space<vmem>>, vector<16x3xf32>
    tpu.vector_store %arg15[%c0_143, %c0_144], %702 {strides = array<i32>} : memref<16x3xf32, #tpu.memory_space<vmem>>, vector<16x3xf32>,
    return
  }
  func.func @transform_0(%arg0: i32) -> (i32, i32) {
    %c0_i32 = arith.constant 0 : i32
    %c0_i32_0 = arith.constant 0 : i32
    %c0_i32_1 = arith.constant 0 : i32
    return %c0_i32, %c0_i32_0 : i32, i32
  }
  func.func @transform_1(%arg0: i32) -> (i32, i32) {
    %c0_i32 = arith.constant 0 : i32
    %c0_i32_0 = arith.constant 0 : i32
    %c0_i32_1 = arith.constant 0 : i32
    return %c0_i32, %c0_i32_0 : i32, i32
  }
  func.func @transform_2(%arg0: i32) -> (i32, i32) {
    %c0_i32 = arith.constant 0 : i32
    %c0_i32_0 = arith.constant 0 : i32
    %c0_i32_1 = arith.constant 0 : i32
    return %c0_i32, %c0_i32_0 : i32, i32
  }
  func.func @transform_3(%arg0: i32) -> (i32, i32) {
    %c0_i32 = arith.constant 0 : i32
    %c0_i32_0 = arith.constant 0 : i32
    %c0_i32_1 = arith.constant 0 : i32
    return %c0_i32, %c0_i32_0 : i32, i32
  }
  func.func @transform_4(%arg0: i32) -> (i32, i32, i32) {
    %c0_i32 = arith.constant 0 : i32
    %c0_i32_0 = arith.constant 0 : i32
    %c0_i32_1 = arith.constant 0 : i32
    %c0_i32_2 = arith.constant 0 : i32
    return %c0_i32, %c0_i32_0, %c0_i32_1 : i32, i32, i32
  }
  func.func @transform_5(%arg0: i32) -> (i32, i32, i32) {
    %c0_i32 = arith.constant 0 : i32
    %c0_i32_0 = arith.constant 0 : i32
    %c0_i32_1 = arith.constant 0 : i32
    %c0_i32_2 = arith.constant 0 : i32
    return %c0_i32, %c0_i32_0, %c0_i32_1 : i32, i32, i32
  }
  func.func @transform_6(%arg0: i32) -> (i32, i32) {
    %c0_i32 = arith.constant 0 : i32
    %c0_i32_0 = arith.constant 0 : i32
    %c0_i32_1 = arith.constant 0 : i32
    return %c0_i32, %c0_i32_0 : i32, i32
  }
  func.func @transform_7(%arg0: i32) -> (i32, i32, i32) {
    %c0_i32 = arith.constant 0 : i32
    %c0_i32_0 = arith.constant 0 : i32
    %c0_i32_1 = arith.constant 0 : i32
    %c0_i32_2 = arith.constant 0 : i32
    return %c0_i32, %c0_i32_0, %c0_i32_1 : i32, i32, i32
  }
  func.func @transform_8(%arg0: i32) -> (i32, i32) {
    %c0_i32 = arith.constant 0 : i32
    %c0_i32_0 = arith.constant 0 : i32
    %c0_i32_1 = arith.constant 0 : i32
    return %c0_i32, %c0_i32_0 : i32, i32
  }
  func.func @transform_9(%arg0: i32) -> (i32, i32, i32) {
    %c0_i32 = arith.constant 0 : i32
    %c0_i32_0 = arith.constant 0 : i32
    %c0_i32_1 = arith.constant 0 : i32
    %c0_i32_2 = arith.constant 0 : i32
    return %c0_i32, %c0_i32_0, %c0_i32_1 : i32, i32, i32
  }
  func.func @transform_10(%arg0: i32) -> (i32, i32) {
    %c0_i32 = arith.constant 0 : i32
    %c0_i32_0 = arith.constant 0 : i32
    %c0_i32_1 = arith.constant 0 : i32
    return %c0_i32, %c0_i32_0 : i32, i32
  }
  func.func @transform_11(%arg0: i32) -> (i32, i32, i32) {
    %c0_i32 = arith.constant 0 : i32
    %c0_i32_0 = arith.constant 0 : i32
    %c0_i32_1 = arith.constant 0 : i32
    %c0_i32_2 = arith.constant 0 : i32
    return %c0_i32, %c0_i32_0, %c0_i32_1 : i32, i32, i32
  }
  func.func @transform_12(%arg0: i32) -> (i32, i32) {
    %c0_i32 = arith.constant 0 : i32
    %c0_i32_0 = arith.constant 0 : i32
    %c0_i32_1 = arith.constant 0 : i32
    return %c0_i32, %c0_i32_0 : i32, i32
  }
  func.func @transform_13(%arg0: i32) -> (i32, i32) {
    %c0_i32 = arith.constant 0 : i32
    %c0_i32_0 = arith.constant 0 : i32
    %c0_i32_1 = arith.constant 0 : i32
    return %c0_i32, %c0_i32_0 : i32, i32
  }
  func.func @transform_14(%arg0: i32) -> (i32, i32) {
    %c0_i32 = arith.constant 0 : i32
    %c0_i32_0 = arith.constant 0 : i32
    %c0_i32_1 = arith.constant 0 : i32
    return %c0_i32, %c0_i32_0 : i32, i32
  }
}

</mosaic_0001>

<llo_original>
// kernel: net_forward.1
$region0: #{net_forward.1}
  #allocation0 [shape = 'u32[]', space=smem, size = 0x4, offset = 0x4, fixed_abs, tag = 'smem constant byte address 0x4 - core index']
  #allocation1 [shape = 'u32[144,128]{1,0:T(1,128)}', space=vmem, size = 0x12000, scoped, tag = 'internal scratch']
  %s0 = inlined_call_operand.vmem [shape: f32[16,4], index: 0, kind: input, shape index: {}]
  %s1 = inlined_call_operand.vmem [shape: f32[4,32], index: 1, kind: input, shape index: {}]
  %s2 = inlined_call_operand.vmem [shape: f32[1,32], index: 2, kind: input, shape index: {}]
  %s3 = inlined_call_operand.vmem [shape: f32[2,32], index: 3, kind: input, shape index: {}]
  %s4 = inlined_call_operand.vmem [shape: f32[2,32,128], index: 4, kind: input, shape index: {}]
  %s5 = inlined_call_operand.vmem [shape: f32[2,4,64], index: 5, kind: input, shape index: {}]
  %s6 = inlined_call_operand.vmem [shape: f32[2,64], index: 6, kind: input, shape index: {}]
  %s7 = inlined_call_operand.vmem [shape: f32[2,64,96], index: 7, kind: input, shape index: {}]
  %s8 = inlined_call_operand.vmem [shape: f32[2,64], index: 8, kind: input, shape index: {}]
  %s9 = inlined_call_operand.vmem [shape: f32[2,16,64], index: 9, kind: input, shape index: {}]
  %s10 = inlined_call_operand.vmem [shape: f32[2,64], index: 10, kind: input, shape index: {}]
  %s11 = inlined_call_operand.vmem [shape: f32[2,64,32], index: 11, kind: input, shape index: {}]
  %s12 = inlined_call_operand.vmem [shape: f32[32,3], index: 12, kind: input, shape index: {}]
  %s13 = inlined_call_operand.vmem [shape: f32[1,3], index: 13, kind: input, shape index: {}]
  %s14 = inlined_call_operand.vmem [shape: f32[16,3], index: 14, kind: output, shape index: {}]
  %s15 = sld [smem:[#allocation0]]
  $region66: #{net_forward.1} parent=0
    _
  %s17 = ssub.s32 1, %s15
  %s18 = scalar_select 0, %s17, %s15
  // Predicated region
  $region2: #{net_forward.1} parent=0 // pred_check
    _
  $region3: #{net_forward.1} parent=0 // pred_check_branch
    %20 = sbr.rel (0) target = $region5
  $region4: #{net_forward.1} parent=0 // pred_region
    _
  $region5: #{net_forward.1} parent=0 // pred_fallthru
    _
  // Predicated region
  $region6: #{net_forward.1} parent=0 // pred_check
    _
  $region7: #{net_forward.1} parent=0 // pred_check_branch
    %22 = sbr.rel (0) target = $region9
  $region8: #{net_forward.1} parent=0 // pred_region
    _
  $region9: #{net_forward.1} parent=0 // pred_fallthru
    _
  // Predicated region
  $region10: #{net_forward.1} parent=0 // pred_check
    _
  $region11: #{net_forward.1} parent=0 // pred_check_branch
    %24 = sbr.rel (0) target = $region13
  $region12: #{net_forward.1} parent=0 // pred_region
    _
  $region13: #{net_forward.1} parent=0 // pred_fallthru
    _
  // Predicated region
  $region14: #{net_forward.1} parent=0 // pred_check
    _
  $region15: #{net_forward.1} parent=0 // pred_check_branch
    %26 = sbr.rel (0) target = $region17
  $region16: #{net_forward.1} parent=0 // pred_region
    _
  $region17: #{net_forward.1} parent=0 // pred_fallthru
    _
  // Predicated region
  $region18: #{net_forward.1} parent=0 // pred_check
    _
  $region19: #{net_forward.1} parent=0 // pred_check_branch
    %28 = sbr.rel (0) target = $region21
  $region20: #{net_forward.1} parent=0 // pred_region
    _
  $region21: #{net_forward.1} parent=0 // pred_fallthru
    _
  // Predicated region
  $region22: #{net_forward.1} parent=0 // pred_check
    _
  $region23: #{net_forward.1} parent=0 // pred_check_branch
    %30 = sbr.rel (0) target = $region25
  $region24: #{net_forward.1} parent=0 // pred_region
    _
  $region25: #{net_forward.1} parent=0 // pred_fallthru
    _
  // Predicated region
  $region26: #{net_forward.1} parent=0 // pred_check
    _
  $region27: #{net_forward.1} parent=0 // pred_check_branch
    %32 = sbr.rel (0) target = $region29
  $region28: #{net_forward.1} parent=0 // pred_region
    _
  $region29: #{net_forward.1} parent=0 // pred_fallthru
    _
  // Predicated region
  $region30: #{net_forward.1} parent=0 // pred_check
    _
  $region31: #{net_forward.1} parent=0 // pred_check_branch
    %34 = sbr.rel (0) target = $region33
  $region32: #{net_forward.1} parent=0 // pred_region
    _
  $region33: #{net_forward.1} parent=0 // pred_fallthru
    _
  // Predicated region
  $region34: #{net_forward.1} parent=0 // pred_check
    _
  $region35: #{net_forward.1} parent=0 // pred_check_branch
    %36 = sbr.rel (0) target = $region37
  $region36: #{net_forward.1} parent=0 // pred_region
    _
  $region37: #{net_forward.1} parent=0 // pred_fallthru
    _
  // Predicated region
  $region38: #{net_forward.1} parent=0 // pred_check
    _
  $region39: #{net_forward.1} parent=0 // pred_check_branch
    %38 = sbr.rel (0) target = $region41
  $region40: #{net_forward.1} parent=0 // pred_region
    _
  $region41: #{net_forward.1} parent=0 // pred_fallthru
    _
  // Predicated region
  $region42: #{net_forward.1} parent=0 // pred_check
    _
  $region43: #{net_forward.1} parent=0 // pred_check_branch
    %40 = sbr.rel (0) target = $region45
  $region44: #{net_forward.1} parent=0 // pred_region
    _
  $region45: #{net_forward.1} parent=0 // pred_fallthru
    _
  // Predicated region
  $region46: #{net_forward.1} parent=0 // pred_check
    _
  $region47: #{net_forward.1} parent=0 // pred_check_branch
    %42 = sbr.rel (0) target = $region49
  $region48: #{net_forward.1} parent=0 // pred_region
    _
  $region49: #{net_forward.1} parent=0 // pred_fallthru
    _
  // Predicated region
  $region50: #{net_forward.1} parent=0 // pred_check
    _
  $region51: #{net_forward.1} parent=0 // pred_check_branch
    %44 = sbr.rel (0) target = $region53
  $region52: #{net_forward.1} parent=0 // pred_region
    _
  $region53: #{net_forward.1} parent=0 // pred_fallthru
    _
  // Predicated region
  $region54: #{net_forward.1} parent=0 // pred_check
    _
  $region55: #{net_forward.1} parent=0 // pred_check_branch
    %46 = sbr.rel (0) target = $region57
  $region56: #{net_forward.1} parent=0 // pred_region
    _
  $region57: #{net_forward.1} parent=0 // pred_fallthru
    _
  %v47 = vld [vmem:[%s0] sm:$0xff]
  %v48 = vld [vmem:[%s0 + $0x8] sm:$0xff]
  %v49 = vld [vmem:[%s1] sm:$0xf]
  %v50 = vld [vmem:[%s2] sm:$0x1]
  %v52 = vlaneseq
  %v53 = vshrl.u32 %v52, 7
  %v54 = vsub.s32 0, %v53
  %v55 = vrot.slane %v50, %v54
  %vm57 = vcmask 31744
  %v59 = vsel %vm57, %v47, 0
  %v62 = vsel %vm57, %v48, 0
  %vm64 = vcmask 1043456
  %v66 = vsel %vm64, %v49, 0
  %68 = vmatprep.subr.mxu0 0.0
  %69 = vmatpush1.msra.mxu0 %v66
  %70 = vmatprep.subr.mxu0 0.0
  %71 = vmatpush1.msra.mxu0 0.0
  %72 = vmatprep.subr.mxu0 0.0
  %73 = vmatpush1.msra.mxu0 0.0
  %74 = vmatprep.subr.mxu0 0.0
  %75 = vmatpush1.msra.mxu0 0.0
  %76 = vmatprep.subr.mxu0 0.0
  %77 = vmatpush1.msra.mxu0 0.0
  %78 = vmatprep.subr.mxu0 0.0
  %79 = vmatpush1.msra.mxu0 0.0
  %80 = vmatprep.subr.mxu0 0.0
  %81 = vmatpush1.msra.mxu0 0.0
  %82 = vmatprep.subr.mxu0 0.0
  %83 = vmatpush1.msra.mxu0 0.0
  %84 = vmatprep.subr.mxu0 0.0
  %85 = vmatpush1.msra.mxu0 0.0
  %86 = vmatprep.subr.mxu0 0.0
  %87 = vmatpush1.msra.mxu0 0.0
  %88 = vmatprep.subr.mxu0 0.0
  %89 = vmatpush1.msra.mxu0 0.0
  %90 = vmatprep.subr.mxu0 0.0
  %91 = vmatpush1.msra.mxu0 0.0
  %92 = vmatprep.subr.mxu0 0.0
  %93 = vmatpush1.msra.mxu0 0.0
  %94 = vmatprep.subr.mxu0 0.0
  %95 = vmatpush1.msra.mxu0 0.0
  %96 = vmatprep.subr.mxu0 0.0
  %97 = vmatpush1.msra.mxu0 0.0
  %98 = vmatprep.subr.mxu0 0.0
  %99 = vmatpush1.msra.mxu0 0.0
  %100 = vmatprep.subr.mxu0 0.0
  %101 = vmatpush1.msra.mxu0 0.0
  %102 = vmatprep.subr.mxu0 0.0
  %103 = vmatpush1.msra.mxu0 0.0
  %104 = vmatprep.subr.mxu0 0.0
  %105 = vmatpush1.msra.mxu0 0.0
  %106 = vmatprep.subr.mxu0 0.0
  %107 = vmatpush1.msra.mxu0 0.0
  %108 = vmatprep.subr.mxu0 0.0
  %109 = vmatpush1.msra.mxu0 0.0
  %110 = vmatprep.subr.mxu0 0.0
  %111 = vmatpush1.msra.mxu0 0.0
  %112 = vmatprep.subr.mxu0 0.0
  %113 = vmatpush1.msra.mxu0 0.0
  %114 = vmatprep.subr.mxu0 0.0
  %115 = vmatpush1.msra.mxu0 0.0
  %116 = vmatprep.subr.mxu0 0.0
  %117 = vmatpush1.msra.mxu0 0.0
  %118 = vmatprep.subr.mxu0 0.0
  %119 = vmatpush1.msra.mxu0 0.0
  %120 = vmatprep.subr.mxu0 0.0
  %121 = vmatpush1.msra.mxu0 0.0
  %122 = vmatprep.subr.mxu0 0.0
  %123 = vmatpush1.msra.mxu0 0.0
  %124 = vmatprep.subr.mxu0 0.0
  %125 = vmatpush1.msra.mxu0 0.0
  %126 = vmatprep.subr.mxu0 0.0
  %127 = vmatpush1.msra.mxu0 0.0
  %128 = vmatprep.subr.mxu0 0.0
  %129 = vmatpush1.msra.mxu0 0.0
  %130 = vmatprep.subr.mxu0 0.0
  %131 = vmatpush1.msra.mxu0 0.0
  %132 = vmatprep.mubr.f32.mxu0 0.0
  %133 = vmatmul.mubr.f32.gmra.mrb[0].mxu0 %v59
  %v134 = vpop.f32.mrb[0].mxu0
  %v135 = vadd.f32 %v55, %v134
  %v136 = vpop.f32.mrb[0].mxu0
  %137 = vmatprep.mubr.f32.mxu0 0.0
  %138 = vmatmul.mubr.f32.gmra.mrb[0].mxu0 %v62
  %v139 = vpop.f32.mrb[0].mxu0
  %v140 = vadd.f32 %v55, %v139
  %v141 = vpop.f32.mrb[0].mxu0
  %142 = vdwg.mxu0
  %v143 = vlaneseq
  %v144 = vshrl.u32 %v143, 7
  %v145 = vadd.s32 %v144, 8
  %vm146 = vcmp.lt.s32.totalorder %v144, 0
  %v147 = vsub.s32 0, %v144
  %v148 = vsel %vm146, %v147, %v144
  %v149 = vshrl.u32 %v148, 3
  %v150 = vand.u32 %v148, 7
  %v151 = vsub.s32 0, %v150
  %v152 = vsel %vm146, %v151, %v150
  %vm153 = vcmp.lt.s32.totalorder %v145, 0
  %v154 = vsub.s32 0, %v145
  %v155 = vsel %vm153, %v154, %v145
  %v156 = vshrl.u32 %v155, 3
  %v157 = vand.u32 %v155, 7
  %v158 = vsub.s32 0, %v157
  %v159 = vsel %vm153, %v158, %v157
  %vm160 = vcmp.ne.s32.totalorder %v152, 0
  %vm161 = vcmp.ne.s32.totalorder %v159, 0
  %vm162 = vcmp.lt.s32.totalorder %v152, 0
  %vm163 = vcmp.lt.s32.totalorder %v159, 0
  %vm164 = vmand %vm162, %vm160
  %vm165 = vmand %vm163, %vm161
  %v166 = vadd.s32 %v152, 8
  %v167 = vadd.s32 %v159, 8
  %v168 = vsel %vm164, %v166, %v152
  %v169 = vsel %vm165, %v167, %v159
  %v170 = vmul.f32 %v135, %v135
  %v171 = vmul.f32 %v140, %v140
  %vm172 = vcmask 261120
  %v173 = vsel %vm172, %v170, 0.0
  %174 = vadd.xlane.f32.xlu0 %v173
  %v175 = vpop.xlane.xlu0 %174
  %v176 = vsel %vm172, %v171, 0.0
  %177 = vadd.xlane.f32.xlu0 %v176
  %v178 = vpop.xlane.xlu0 %177
  %v179 = vrcp.pop 32.0
  %v180 = vmul.f32 %v175, %v179
  %v181 = vmul.f32 %v178, %v179
  %v182 = vadd.f32 %v180, 1e-05
  %v183 = vadd.f32 %v181, 1e-05
  %v184 = vrsqrt.pop %v182
  %v185 = vrsqrt.pop %v183
  %v186 = vmul.f32 %v135, %v184
  %v187 = vmul.f32 %v140, %v185
  %v188 = vld [vmem:[%s3] sm:$0x1]
  %v189 = vlaneseq
  %v190 = vshrl.u32 %v189, 7
  %v191 = vsub.s32 0, %v190
  %v192 = vrot.slane %v188, %v191
  %v193 = vmul.f32 %v186, %v192
  %v194 = vmul.f32 %v187, %v192
  %v195 = vld [vmem:[%s4] sm:$0xff]
  %v196 = vld [vmem:[%s4 + $0x8] sm:$0xff]
  %v197 = vld [vmem:[%s4 + $0x10] sm:$0xff]
  %v198 = vld [vmem:[%s4 + $0x18] sm:$0xff]
  %v200 = vsel %vm172, %v193, 0
  %v203 = vsel %vm172, %v194, 0
  %205 = vmatprep.subr.mxu0 0.0
  %206 = vmatpush1.msra.mxu0 %v195
  %207 = vmatprep.subr.mxu0 0.0
  %208 = vmatpush1.msra.mxu0 %v196
  %209 = vmatprep.subr.mxu0 0.0
  %210 = vmatpush1.msra.mxu0 %v197
  %211 = vmatprep.subr.mxu0 0.0
  %212 = vmatpush1.msra.mxu0 %v198
  %213 = vmatprep.subr.mxu0 0.0
  %214 = vmatpush1.msra.mxu0 0.0
  %215 = vmatprep.subr.mxu0 0.0
  %216 = vmatpush1.msra.mxu0 0.0
  %217 = vmatprep.subr.mxu0 0.0
  %218 = vmatpush1.msra.mxu0 0.0
  %219 = vmatprep.subr.mxu0 0.0
  %220 = vmatpush1.msra.mxu0 0.0
  %221 = vmatprep.subr.mxu0 0.0
  %222 = vmatpush1.msra.mxu0 0.0
  %223 = vmatprep.subr.mxu0 0.0
  %224 = vmatpush1.msra.mxu0 0.0
  %225 = vmatprep.subr.mxu0 0.0
  %226 = vmatpush1.msra.mxu0 0.0
  %227 = vmatprep.subr.mxu0 0.0
  %228 = vmatpush1.msra.mxu0 0.0
  %229 = vmatprep.subr.mxu0 0.0
  %230 = vmatpush1.msra.mxu0 0.0
  %231 = vmatprep.subr.mxu0 0.0
  %232 = vmatpush1.msra.mxu0 0.0
  %233 = vmatprep.subr.mxu0 0.0
  %234 = vmatpush1.msra.mxu0 0.0
  %235 = vmatprep.subr.mxu0 0.0
  %236 = vmatpush1.msra.mxu0 0.0
  %237 = vmatprep.subr.mxu0 0.0
  %238 = vmatpush1.msra.mxu0 0.0
  %239 = vmatprep.subr.mxu0 0.0
  %240 = vmatpush1.msra.mxu0 0.0
  %241 = vmatprep.subr.mxu0 0.0
  %242 = vmatpush1.msra.mxu0 0.0
  %243 = vmatprep.subr.mxu0 0.0
  %244 = vmatpush1.msra.mxu0 0.0
  %245 = vmatprep.subr.mxu0 0.0
  %246 = vmatpush1.msra.mxu0 0.0
  %247 = vmatprep.subr.mxu0 0.0
  %248 = vmatpush1.msra.mxu0 0.0
  %249 = vmatprep.subr.mxu0 0.0
  %250 = vmatpush1.msra.mxu0 0.0
  %251 = vmatprep.subr.mxu0 0.0
  %252 = vmatpush1.msra.mxu0 0.0
  %253 = vmatprep.subr.mxu0 0.0
  %254 = vmatpush1.msra.mxu0 0.0
  %255 = vmatprep.subr.mxu0 0.0
  %256 = vmatpush1.msra.mxu0 0.0
  %257 = vmatprep.subr.mxu0 0.0
  %258 = vmatpush1.msra.mxu0 0.0
  %259 = vmatprep.subr.mxu0 0.0
  %260 = vmatpush1.msra.mxu0 0.0
  %261 = vmatprep.subr.mxu0 0.0
  %262 = vmatpush1.msra.mxu0 0.0
  %263 = vmatprep.subr.mxu0 0.0
  %264 = vmatpush1.msra.mxu0 0.0
  %265 = vmatprep.subr.mxu0 0.0
  %266 = vmatpush1.msra.mxu0 0.0
  %267 = vmatprep.subr.mxu0 0.0
  %268 = vmatpush1.msra.mxu0 0.0
  %269 = vmatprep.mubr.f32.mxu0 0.0
  %270 = vmatmul.mubr.f32.gmra.mrb[0].mxu0 %v200
  %v271 = vpop.f32.mrb[0].mxu0
  %v272 = vadd.f32 0.0, %v271
  %v273 = vpop.f32.mrb[0].mxu0
  %274 = vmatprep.mubr.f32.mxu0 0.0
  %275 = vmatmul.mubr.f32.gmra.mrb[0].mxu0 %v203
  %v276 = vpop.f32.mrb[0].mxu0
  %v277 = vadd.f32 0.0, %v276
  %v278 = vpop.f32.mrb[0].mxu0
  %279 = vdwg.mxu0
  %v280 = vld [vmem:[%s5] sm:$0xf]
  %v281 = vlaneseq
  %v282 = vshrl.u32 %v281, 7
  %v283 = vsub.s32 3, %v282
  %v284 = vrot.slane %v280, %v283
  %v285 = vmul.f32 %v272, %v284
  %v286 = vmul.f32 %v277, %v284
  %vm289 = vcmask 1040384
  %v290 = vrot.slane %v272, 7
  %v291 = vrot.slane %v277, 7
  %v292 = vsel %vm289, %v290, %v291
  %v295 = vsel %vm289, 0.0, %v290
  %vm296 = vcmp.ge.s32.totalorder %v168, 1
  %vm297 = vcmp.ge.s32.totalorder %v169, 1
  %v298 = vsel %vm296, %v295, 0.0
  %v299 = vsel %vm297, %v292, 0.0
  %v300 = vlaneseq
  %v301 = vshrl.u32 %v300, 7
  %v302 = vsub.s32 2, %v301
  %v303 = vrot.slane %v280, %v302
  %v304 = vmul.f32 %v298, %v303
  %v305 = vmul.f32 %v299, %v303
  %v306 = vadd.f32 %v285, %v304
  %v307 = vadd.f32 %v286, %v305
  %vm308 = vcmask 1041408
  %v309 = vrot.slane %v272, 6
  %v310 = vrot.slane %v277, 6
  %v311 = vsel %vm308, %v309, %v310
  %v314 = vsel %vm308, 0.0, %v309
  %vm315 = vcmp.ge.s32.totalorder %v168, 2
  %vm316 = vcmp.ge.s32.totalorder %v169, 2
  %v317 = vsel %vm315, %v314, 0.0
  %v318 = vsel %vm316, %v311, 0.0
  %v319 = vlaneseq
  %v320 = vshrl.u32 %v319, 7
  %v321 = vsub.s32 1, %v320
  %v322 = vrot.slane %v280, %v321
  %v323 = vmul.f32 %v317, %v322
  %v324 = vmul.f32 %v318, %v322
  %v325 = vadd.f32 %v306, %v323
  %v326 = vadd.f32 %v307, %v324
  %vm327 = vcmask 1042432
  %v328 = vrot.slane %v272, 5
  %v329 = vrot.slane %v277, 5
  %v330 = vsel %vm327, %v328, %v329
  %v333 = vsel %vm327, 0.0, %v328
  %vm334 = vcmp.ge.s32.totalorder %v168, 3
  %vm335 = vcmp.ge.s32.totalorder %v169, 3
  %v336 = vsel %vm334, %v333, 0.0
  %v337 = vsel %vm335, %v330, 0.0
  %v338 = vlaneseq
  %v339 = vshrl.u32 %v338, 7
  %v340 = vsub.s32 0, %v339
  %v341 = vrot.slane %v280, %v340
  %v342 = vmul.f32 %v336, %v341
  %v343 = vmul.f32 %v337, %v341
  %v344 = vadd.f32 %v325, %v342
  %v345 = vadd.f32 %v326, %v343
  %v346 = vld [vmem:[%s6] sm:$0x1]
  %v347 = vlaneseq
  %v348 = vshrl.u32 %v347, 7
  %v349 = vsub.s32 0, %v348
  %v350 = vrot.slane %v346, %v349
  %v351 = vadd.f32 %v344, %v350
  %v352 = vadd.f32 %v345, %v350
  %v353 = vsub.f32 0.0, %v351
  %v354 = vsub.f32 0.0, %v352
  %v355 = vmul.f32 %v353, 1.442695
  %v356 = vpow.pop %v355
  %v357 = vmul.f32 %v354, 1.442695
  %v358 = vpow.pop %v357
  %v359 = vadd.f32 %v356, 1.0
  %v360 = vadd.f32 %v358, 1.0
  %v361 = vrcp.pop %v359
  %v362 = vmul.f32 1.0, %v361
  %v363 = vrcp.pop %v360
  %v364 = vmul.f32 1.0, %v363
  %v365 = vmul.f32 %v351, %v362
  %v366 = vmul.f32 %v352, %v364
  %v367 = vld [vmem:[%s7] sm:$0xff]
  %v368 = vld [vmem:[%s7 + $0x8] sm:$0xff]
  %v369 = vld [vmem:[%s7 + $0x10] sm:$0xff]
  %v370 = vld [vmem:[%s7 + $0x18] sm:$0xff]
  %v371 = vld [vmem:[%s7 + $0x20] sm:$0xff]
  %v372 = vld [vmem:[%s7 + $0x28] sm:$0xff]
  %v373 = vld [vmem:[%s7 + $0x30] sm:$0xff]
  %v374 = vld [vmem:[%s7 + $0x38] sm:$0xff]
  %vm375 = vcmask 523264
  %v377 = vsel %vm375, %v365, 0
  %v380 = vsel %vm375, %v366, 0
  %382 = vmatprep.subr.mxu0 0.0
  %383 = vmatpush1.msra.mxu0 %v367
  %384 = vmatprep.subr.mxu0 0.0
  %385 = vmatpush1.msra.mxu0 %v368
  %386 = vmatprep.subr.mxu0 0.0
  %387 = vmatpush1.msra.mxu0 %v369
  %388 = vmatprep.subr.mxu0 0.0
  %389 = vmatpush1.msra.mxu0 %v370
  %390 = vmatprep.subr.mxu0 0.0
  %391 = vmatpush1.msra.mxu0 %v371
  %392 = vmatprep.subr.mxu0 0.0
  %393 = vmatpush1.msra.mxu0 %v372
  %394 = vmatprep.subr.mxu0 0.0
  %395 = vmatpush1.msra.mxu0 %v373
  %396 = vmatprep.subr.mxu0 0.0
  %397 = vmatpush1.msra.mxu0 %v374
  %398 = vmatprep.subr.mxu0 0.0
  %399 = vmatpush1.msra.mxu0 0.0
  %400 = vmatprep.subr.mxu0 0.0
  %401 = vmatpush1.msra.mxu0 0.0
  %402 = vmatprep.subr.mxu0 0.0
  %403 = vmatpush1.msra.mxu0 0.0
  %404 = vmatprep.subr.mxu0 0.0
  %405 = vmatpush1.msra.mxu0 0.0
  %406 = vmatprep.subr.mxu0 0.0
  %407 = vmatpush1.msra.mxu0 0.0
  %408 = vmatprep.subr.mxu0 0.0
  %409 = vmatpush1.msra.mxu0 0.0
  %410 = vmatprep.subr.mxu0 0.0
  %411 = vmatpush1.msra.mxu0 0.0
  %412 = vmatprep.subr.mxu0 0.0
  %413 = vmatpush1.msra.mxu0 0.0
  %414 = vmatprep.subr.mxu0 0.0
  %415 = vmatpush1.msra.mxu0 0.0
  %416 = vmatprep.subr.mxu0 0.0
  %417 = vmatpush1.msra.mxu0 0.0
  %418 = vmatprep.subr.mxu0 0.0
  %419 = vmatpush1.msra.mxu0 0.0
  %420 = vmatprep.subr.mxu0 0.0
  %421 = vmatpush1.msra.mxu0 0.0
  %422 = vmatprep.subr.mxu0 0.0
  %423 = vmatpush1.msra.mxu0 0.0
  %424 = vmatprep.subr.mxu0 0.0
  %425 = vmatpush1.msra.mxu0 0.0
  %426 = vmatprep.subr.mxu0 0.0
  %427 = vmatpush1.msra.mxu0 0.0
  %428 = vmatprep.subr.mxu0 0.0
  %429 = vmatpush1.msra.mxu0 0.0
  %430 = vmatprep.subr.mxu0 0.0
  %431 = vmatpush1.msra.mxu0 0.0
  %432 = vmatprep.subr.mxu0 0.0
  %433 = vmatpush1.msra.mxu0 0.0
  %434 = vmatprep.subr.mxu0 0.0
  %435 = vmatpush1.msra.mxu0 0.0
  %436 = vmatprep.subr.mxu0 0.0
  %437 = vmatpush1.msra.mxu0 0.0
  %438 = vmatprep.subr.mxu0 0.0
  %439 = vmatpush1.msra.mxu0 0.0
  %440 = vmatprep.subr.mxu0 0.0
  %441 = vmatpush1.msra.mxu0 0.0
  %442 = vmatprep.subr.mxu0 0.0
  %443 = vmatpush1.msra.mxu0 0.0
  %444 = vmatprep.subr.mxu0 0.0
  %445 = vmatpush1.msra.mxu0 0.0
  %446 = vmatprep.mubr.f32.mxu0 0.0
  %447 = vmatmul.mubr.f32.gmra.mrb[0].mxu0 %v377
  %v448 = vpop.f32.mrb[0].mxu0
  %v449 = vadd.f32 0.0, %v448
  %v450 = vpop.f32.mrb[0].mxu0
  %451 = vmatprep.mubr.f32.mxu0 0.0
  %452 = vmatmul.mubr.f32.gmra.mrb[0].mxu0 %v380
  %v453 = vpop.f32.mrb[0].mxu0
  %v454 = vadd.f32 0.0, %v453
  %v455 = vpop.f32.mrb[0].mxu0
  %456 = vdwg.mxu0
  %v457 = vld [vmem:[%s8] sm:$0x1]
  %v458 = vlaneseq
  %v459 = vshrl.u32 %v458, 7
  %v460 = vsub.s32 0, %v459
  %v461 = vrot.slane %v457, %v460
  %v462 = vadd.f32 %v449, %v461
  %v463 = vadd.f32 %v454, %v461
  %vm464 = vcmp.gt.f32.partialorder %v462, 20.0
  %vm465 = vcmp.gt.f32.partialorder %v463, 20.0
  %v466 = vmin.f32 %v462, 20.0
  %v467 = vmin.f32 %v463, 20.0
  %v468 = vmul.f32 %v466, 1.442695
  %v469 = vpow.pop %v468
  %v470 = vmul.f32 %v467, 1.442695
  %v471 = vpow.pop %v470
  %v472 = vadd.f32 %v469, 1.0
  %v473 = vadd.f32 %v471, 1.0
  %v474 = vlog2.pop %v472
  %v475 = vmul.f32 %v474, 0.6931472
  %v476 = vlog2.pop %v473
  %v477 = vmul.f32 %v476, 0.6931472
  %v478 = vsel %vm464, %v462, %v475
  %v479 = vsel %vm465, %v463, %v477
  %v480 = vld [vmem:[%s9] sm:$0xff]
  %v481 = vld [vmem:[%s9 + $0x8] sm:$0xff]
  %v482 = vmul.f32 %v478, %v365
  %v483 = vmul.f32 %v479, %v366
  %v485 = vcombine.high %v478, %v478
  %v487 = vunpack.c.l.s4 1966171168
  %v488 = vunpack.c.0.s8 %v487
  %v489 = vlaneseq
  %v490 = vshrl.u32 %v489, 7
  %v491 = vsub.s32 %v488, %v490
  %v492 = vrot.slane %v478, %v491
  %v494 = vunpack.c.l.s4 1966171168
  %v495 = vunpack.c.0.s8 %v494
  %v496 = vlaneseq
  %v497 = vshrl.u32 %v496, 7
  %v498 = vsub.s32 %v495, %v497
  %v499 = vrot.slane %v485, %v498
  %v500 = vcombine.high %v492, %v492
  %v501 = vcombine.high %v499, %v499
  %v503 = vunpack.c.l.s4 1966171168
  %v504 = vunpack.c.0.s8 %v503
  %v505 = vlaneseq
  %v506 = vshrl.u32 %v505, 7
  %v507 = vsub.s32 %v504, %v506
  %v508 = vrot.slane %v492, %v507
  %v510 = vunpack.c.l.s4 1966171168
  %v511 = vunpack.c.0.s8 %v510
  %v512 = vlaneseq
  %v513 = vshrl.u32 %v512, 7
  %v514 = vsub.s32 %v511, %v513
  %v515 = vrot.slane %v499, %v514
  %v517 = vunpack.c.l.s4 1966171168
  %v518 = vunpack.c.0.s8 %v517
  %v519 = vlaneseq
  %v520 = vshrl.u32 %v519, 7
  %v521 = vsub.s32 %v518, %v520
  %v522 = vrot.slane %v500, %v521
  %v524 = vunpack.c.l.s4 1966171168
  %v525 = vunpack.c.0.s8 %v524
  %v526 = vlaneseq
  %v527 = vshrl.u32 %v526, 7
  %v528 = vsub.s32 %v525, %v527
  %v529 = vrot.slane %v501, %v528
  %v530 = vcombine.high %v508, %v508
  %v531 = vcombine.high %v515, %v515
  %v532 = vcombine.high %v522, %v522
  %v533 = vcombine.high %v529, %v529
  %v534 = vlaneseq
  %v535 = vshrl.u32 %v534, 7
  %v536 = vsub.s32 0, %v535
  %v537 = vrot.slane %v508, %v536
  %v538 = vlaneseq
  %v539 = vshrl.u32 %v538, 7
  %v540 = vsub.s32 0, %v539
  %v541 = vrot.slane %v522, %v540
  %v542 = vlaneseq
  %v543 = vshrl.u32 %v542, 7
  %v544 = vsub.s32 0, %v543
  %v545 = vrot.slane %v530, %v544
  %v546 = vlaneseq
  %v547 = vshrl.u32 %v546, 7
  %v548 = vsub.s32 0, %v547
  %v549 = vrot.slane %v532, %v548
  %v550 = vlaneseq
  %v551 = vshrl.u32 %v550, 7
  %v552 = vsub.s32 0, %v551
  %v553 = vrot.slane %v515, %v552
  %v554 = vlaneseq
  %v555 = vshrl.u32 %v554, 7
  %v556 = vsub.s32 0, %v555
  %v557 = vrot.slane %v529, %v556
  %v558 = vlaneseq
  %v559 = vshrl.u32 %v558, 7
  %v560 = vsub.s32 0, %v559
  %v561 = vrot.slane %v531, %v560
  %v562 = vlaneseq
  %v563 = vshrl.u32 %v562, 7
  %v564 = vsub.s32 0, %v563
  %v565 = vrot.slane %v533, %v564
  %v574 = vmul.f32 %v537, %v480
  %v575 = vmul.f32 %v537, %v481
  %v576 = vmul.f32 %v541, %v480
  %v577 = vmul.f32 %v541, %v481
  %v578 = vmul.f32 %v545, %v480
  %v579 = vmul.f32 %v545, %v481
  %v580 = vmul.f32 %v549, %v480
  %v581 = vmul.f32 %v549, %v481
  %v582 = vmul.f32 %v553, %v480
  %v583 = vmul.f32 %v553, %v481
  %v584 = vmul.f32 %v557, %v480
  %v585 = vmul.f32 %v557, %v481
  %v586 = vmul.f32 %v561, %v480
  %v587 = vmul.f32 %v561, %v481
  %v588 = vmul.f32 %v565, %v480
  %v589 = vmul.f32 %v565, %v481
  %v590 = vmul.f32 %v574, 1.442695
  %v591 = vpow.pop %v590
  %v592 = vmul.f32 %v575, 1.442695
  %v593 = vpow.pop %v592
  %v594 = vmul.f32 %v576, 1.442695
  %v595 = vpow.pop %v594
  %v596 = vmul.f32 %v577, 1.442695
  %v597 = vpow.pop %v596
  %v598 = vmul.f32 %v578, 1.442695
  %v599 = vpow.pop %v598
  %v600 = vmul.f32 %v579, 1.442695
  %v601 = vpow.pop %v600
  %v602 = vmul.f32 %v580, 1.442695
  %v603 = vpow.pop %v602
  %v604 = vmul.f32 %v581, 1.442695
  %v605 = vpow.pop %v604
  %v606 = vmul.f32 %v582, 1.442695
  %v607 = vpow.pop %v606
  %v608 = vmul.f32 %v583, 1.442695
  %v609 = vpow.pop %v608
  %v610 = vmul.f32 %v584, 1.442695
  %v611 = vpow.pop %v610
  %v612 = vmul.f32 %v585, 1.442695
  %v613 = vpow.pop %v612
  %v614 = vmul.f32 %v586, 1.442695
  %v615 = vpow.pop %v614
  %v616 = vmul.f32 %v587, 1.442695
  %v617 = vpow.pop %v616
  %v618 = vmul.f32 %v588, 1.442695
  %v619 = vpow.pop %v618
  %v620 = vmul.f32 %v589, 1.442695
  %v621 = vpow.pop %v620
  %v623 = vcombine.high %v482, %v482
  %v625 = vunpack.c.l.s4 1966171168
  %v626 = vunpack.c.0.s8 %v625
  %v627 = vlaneseq
  %v628 = vshrl.u32 %v627, 7
  %v629 = vsub.s32 %v626, %v628
  %v630 = vrot.slane %v482, %v629
  %v632 = vunpack.c.l.s4 1966171168
  %v633 = vunpack.c.0.s8 %v632
  %v634 = vlaneseq
  %v635 = vshrl.u32 %v634, 7
  %v636 = vsub.s32 %v633, %v635
  %v637 = vrot.slane %v623, %v636
  %v638 = vcombine.high %v630, %v630
  %v639 = vcombine.high %v637, %v637
  %v641 = vunpack.c.l.s4 1966171168
  %v642 = vunpack.c.0.s8 %v641
  %v643 = vlaneseq
  %v644 = vshrl.u32 %v643, 7
  %v645 = vsub.s32 %v642, %v644
  %v646 = vrot.slane %v630, %v645
  %v648 = vunpack.c.l.s4 1966171168
  %v649 = vunpack.c.0.s8 %v648
  %v650 = vlaneseq
  %v651 = vshrl.u32 %v650, 7
  %v652 = vsub.s32 %v649, %v651
  %v653 = vrot.slane %v637, %v652
  %v655 = vunpack.c.l.s4 1966171168
  %v656 = vunpack.c.0.s8 %v655
  %v657 = vlaneseq
  %v658 = vshrl.u32 %v657, 7
  %v659 = vsub.s32 %v656, %v658
  %v660 = vrot.slane %v638, %v659
  %v662 = vunpack.c.l.s4 1966171168
  %v663 = vunpack.c.0.s8 %v662
  %v664 = vlaneseq
  %v665 = vshrl.u32 %v664, 7
  %v666 = vsub.s32 %v663, %v665
  %v667 = vrot.slane %v639, %v666
  %v668 = vcombine.high %v646, %v646
  %v669 = vcombine.high %v653, %v653
  %v670 = vcombine.high %v660, %v660
  %v671 = vcombine.high %v667, %v667
  %v672 = vlaneseq
  %v673 = vshrl.u32 %v672, 7
  %v674 = vsub.s32 0, %v673
  %v675 = vrot.slane %v449, %v674
  %s677 = sor.u32 256, 64
  %678 = vbcast.lane.b32.xlu0 %v675, %s677
  %v679 = vpop.permute.xlu0 %678
  %s681 = sor.u32 256, 72
  %682 = vbcast.lane.b32.xlu0 %v675, %s681
  %v683 = vpop.permute.xlu0 %682
  %v684 = vlaneseq
  %v685 = vshrl.u32 %v684, 7
  %v686 = vsub.s32 1, %v685
  %v687 = vrot.slane %v449, %v686
  %s689 = sor.u32 256, 64
  %690 = vbcast.lane.b32.xlu0 %v687, %s689
  %v691 = vpop.permute.xlu0 %690
  %s693 = sor.u32 256, 72
  %694 = vbcast.lane.b32.xlu0 %v687, %s693
  %v695 = vpop.permute.xlu0 %694
  %v696 = vlaneseq
  %v697 = vshrl.u32 %v696, 7
  %v698 = vsub.s32 2, %v697
  %v699 = vrot.slane %v449, %v698
  %s701 = sor.u32 256, 64
  %702 = vbcast.lane.b32.xlu0 %v699, %s701
  %v703 = vpop.permute.xlu0 %702
  %s705 = sor.u32 256, 72
  %706 = vbcast.lane.b32.xlu0 %v699, %s705
  %v707 = vpop.permute.xlu0 %706
  %v708 = vlaneseq
  %v709 = vshrl.u32 %v708, 7
  %v710 = vsub.s32 3, %v709
  %v711 = vrot.slane %v449, %v710
  %s713 = sor.u32 256, 64
  %714 = vbcast.lane.b32.xlu0 %v711, %s713
  %v715 = vpop.permute.xlu0 %714
  %s717 = sor.u32 256, 72
  %718 = vbcast.lane.b32.xlu0 %v711, %s717
  %v719 = vpop.permute.xlu0 %718
  %v720 = vlaneseq
  %v721 = vshrl.u32 %v720, 7
  %v722 = vsub.s32 4, %v721
  %v723 = vrot.slane %v449, %v722
  %s725 = sor.u32 256, 64
  %726 = vbcast.lane.b32.xlu0 %v723, %s725
  %v727 = vpop.permute.xlu0 %726
  %s729 = sor.u32 256, 72
  %730 = vbcast.lane.b32.xlu0 %v723, %s729
  %v731 = vpop.permute.xlu0 %730
  %v732 = vlaneseq
  %v733 = vshrl.u32 %v732, 7
  %v734 = vsub.s32 5, %v733
  %v735 = vrot.slane %v449, %v734
  %s737 = sor.u32 256, 64
  %738 = vbcast.lane.b32.xlu0 %v735, %s737
  %v739 = vpop.permute.xlu0 %738
  %s741 = sor.u32 256, 72
  %742 = vbcast.lane.b32.xlu0 %v735, %s741
  %v743 = vpop.permute.xlu0 %742
  %v744 = vlaneseq
  %v745 = vshrl.u32 %v744, 7
  %v746 = vsub.s32 6, %v745
  %v747 = vrot.slane %v449, %v746
  %s749 = sor.u32 256, 64
  %750 = vbcast.lane.b32.xlu0 %v747, %s749
  %v751 = vpop.permute.xlu0 %750
  %s753 = sor.u32 256, 72
  %754 = vbcast.lane.b32.xlu0 %v747, %s753
  %v755 = vpop.permute.xlu0 %754
  %v756 = vlaneseq
  %v757 = vshrl.u32 %v756, 7
  %v758 = vsub.s32 7, %v757
  %v759 = vrot.slane %v449, %v758
  %s761 = sor.u32 256, 64
  %762 = vbcast.lane.b32.xlu0 %v759, %s761
  %v763 = vpop.permute.xlu0 %762
  %s765 = sor.u32 256, 72
  %766 = vbcast.lane.b32.xlu0 %v759, %s765
  %v767 = vpop.permute.xlu0 %766
  %v768 = vlaneseq
  %v769 = vshrl.u32 %v768, 7
  %v770 = vsub.s32 0, %v769
  %v771 = vrot.slane %v646, %v770
  %v772 = vlaneseq
  %v773 = vshrl.u32 %v772, 7
  %v774 = vsub.s32 0, %v773
  %v775 = vrot.slane %v660, %v774
  %v776 = vlaneseq
  %v777 = vshrl.u32 %v776, 7
  %v778 = vsub.s32 0, %v777
  %v779 = vrot.slane %v668, %v778
  %v780 = vlaneseq
  %v781 = vshrl.u32 %v780, 7
  %v782 = vsub.s32 0, %v781
  %v783 = vrot.slane %v670, %v782
  %v784 = vlaneseq
  %v785 = vshrl.u32 %v784, 7
  %v786 = vsub.s32 0, %v785
  %v787 = vrot.slane %v653, %v786
  %v788 = vlaneseq
  %v789 = vshrl.u32 %v788, 7
  %v790 = vsub.s32 0, %v789
  %v791 = vrot.slane %v667, %v790
  %v792 = vlaneseq
  %v793 = vshrl.u32 %v792, 7
  %v794 = vsub.s32 0, %v793
  %v795 = vrot.slane %v669, %v794
  %v796 = vlaneseq
  %v797 = vshrl.u32 %v796, 7
  %v798 = vsub.s32 0, %v797
  %v799 = vrot.slane %v671, %v798
  %v808 = vmul.f32 %v771, %v679
  %v809 = vmul.f32 %v771, %v683
  %v810 = vmul.f32 %v775, %v691
  %v811 = vmul.f32 %v775, %v695
  %v812 = vmul.f32 %v779, %v703
  %v813 = vmul.f32 %v779, %v707
  %v814 = vmul.f32 %v783, %v715
  %v815 = vmul.f32 %v783, %v719
  %v816 = vmul.f32 %v787, %v727
  %v817 = vmul.f32 %v787, %v731
  %v818 = vmul.f32 %v791, %v739
  %v819 = vmul.f32 %v791, %v743
  %v820 = vmul.f32 %v795, %v751
  %v821 = vmul.f32 %v795, %v755
  %v822 = vmul.f32 %v799, %v763
  %v823 = vmul.f32 %v799, %v767
  %s825 = sor.u32 256, 80
  %826 = vbcast.lane.b32.xlu0 %v675, %s825
  %v827 = vpop.permute.xlu0 %826
  %s829 = sor.u32 256, 88
  %830 = vbcast.lane.b32.xlu0 %v675, %s829
  %v831 = vpop.permute.xlu0 %830
  %s833 = sor.u32 256, 80
  %834 = vbcast.lane.b32.xlu0 %v687, %s833
  %v835 = vpop.permute.xlu0 %834
  %s837 = sor.u32 256, 88
  %838 = vbcast.lane.b32.xlu0 %v687, %s837
  %v839 = vpop.permute.xlu0 %838
  %s841 = sor.u32 256, 80
  %842 = vbcast.lane.b32.xlu0 %v699, %s841
  %v843 = vpop.permute.xlu0 %842
  %s845 = sor.u32 256, 88
  %846 = vbcast.lane.b32.xlu0 %v699, %s845
  %v847 = vpop.permute.xlu0 %846
  %s849 = sor.u32 256, 80
  %850 = vbcast.lane.b32.xlu0 %v711, %s849
  %v851 = vpop.permute.xlu0 %850
  %s853 = sor.u32 256, 88
  %854 = vbcast.lane.b32.xlu0 %v711, %s853
  %v855 = vpop.permute.xlu0 %854
  %s857 = sor.u32 256, 80
  %858 = vbcast.lane.b32.xlu0 %v723, %s857
  %v859 = vpop.permute.xlu0 %858
  %s861 = sor.u32 256, 88
  %862 = vbcast.lane.b32.xlu0 %v723, %s861
  %v863 = vpop.permute.xlu0 %862
  %s865 = sor.u32 256, 80
  %866 = vbcast.lane.b32.xlu0 %v735, %s865
  %v867 = vpop.permute.xlu0 %866
  %s869 = sor.u32 256, 88
  %870 = vbcast.lane.b32.xlu0 %v735, %s869
  %v871 = vpop.permute.xlu0 %870
  %s873 = sor.u32 256, 80
  %874 = vbcast.lane.b32.xlu0 %v747, %s873
  %v875 = vpop.permute.xlu0 %874
  %s877 = sor.u32 256, 88
  %878 = vbcast.lane.b32.xlu0 %v747, %s877
  %v879 = vpop.permute.xlu0 %878
  %s881 = sor.u32 256, 80
  %882 = vbcast.lane.b32.xlu0 %v759, %s881
  %v883 = vpop.permute.xlu0 %882
  %s885 = sor.u32 256, 88
  %886 = vbcast.lane.b32.xlu0 %v759, %s885
  %v887 = vpop.permute.xlu0 %886
  %v888 = vmul.f32 %v591, 0.0
  %v889 = vmul.f32 %v593, 0.0
  %v890 = vadd.f32 %v888, %v808
  %v891 = vadd.f32 %v889, %v809
  %v892 = vmul.f32 %v890, %v827
  %v893 = vmul.f32 %v891, %v831
  %v894 = vsel %vm375, %v892, 0.0
  %v895 = vsel %vm375, %v893, 0.0
  %v896 = vadd.f32 %v894, %v895
  %v897 = vrot.slane %v896, 4
  %v898 = vadd.f32 %v896, %v897
  %v899 = vrot.slane %v898, 2
  %v900 = vadd.f32 %v898, %v899
  %v901 = vrot.slane %v900, 1
  %v902 = vadd.f32 %v900, %v901
  %v903 = vmul.f32 %v595, %v890
  %v904 = vmul.f32 %v597, %v891
  %v905 = vadd.f32 %v903, %v810
  %v906 = vadd.f32 %v904, %v811
  %v907 = vmul.f32 %v905, %v835
  %v908 = vmul.f32 %v906, %v839
  %v909 = vsel %vm375, %v907, 0.0
  %v910 = vsel %vm375, %v908, 0.0
  %v911 = vadd.f32 %v909, %v910
  %v912 = vrot.slane %v911, 4
  %v913 = vadd.f32 %v911, %v912
  %v914 = vrot.slane %v913, 2
  %v915 = vadd.f32 %v913, %v914
  %v916 = vrot.slane %v915, 1
  %v917 = vadd.f32 %v915, %v916
  %v918 = vmul.f32 %v599, %v905
  %v919 = vmul.f32 %v601, %v906
  %v920 = vadd.f32 %v918, %v812
  %v921 = vadd.f32 %v919, %v813
  %v922 = vmul.f32 %v920, %v843
  %v923 = vmul.f32 %v921, %v847
  %v924 = vsel %vm375, %v922, 0.0
  %v925 = vsel %vm375, %v923, 0.0
  %v926 = vadd.f32 %v924, %v925
  %v927 = vrot.slane %v926, 4
  %v928 = vadd.f32 %v926, %v927
  %v929 = vrot.slane %v928, 2
  %v930 = vadd.f32 %v928, %v929
  %v931 = vrot.slane %v930, 1
  %v932 = vadd.f32 %v930, %v931
  %v933 = vmul.f32 %v603, %v920
  %v934 = vmul.f32 %v605, %v921
  %v935 = vadd.f32 %v933, %v814
  %v936 = vadd.f32 %v934, %v815
  %v937 = vmul.f32 %v935, %v851
  %v938 = vmul.f32 %v936, %v855
  %v939 = vsel %vm375, %v937, 0.0
  %v940 = vsel %vm375, %v938, 0.0
  %v941 = vadd.f32 %v939, %v940
  %v942 = vrot.slane %v941, 4
  %v943 = vadd.f32 %v941, %v942
  %v944 = vrot.slane %v943, 2
  %v945 = vadd.f32 %v943, %v944
  %v946 = vrot.slane %v945, 1
  %v947 = vadd.f32 %v945, %v946
  %v948 = vmul.f32 %v607, %v935
  %v949 = vmul.f32 %v609, %v936
  %v950 = vadd.f32 %v948, %v816
  %v951 = vadd.f32 %v949, %v817
  %v952 = vmul.f32 %v950, %v859
  %v953 = vmul.f32 %v951, %v863
  %v954 = vsel %vm375, %v952, 0.0
  %v955 = vsel %vm375, %v953, 0.0
  %v956 = vadd.f32 %v954, %v955
  %v957 = vrot.slane %v956, 4
  %v958 = vadd.f32 %v956, %v957
  %v959 = vrot.slane %v958, 2
  %v960 = vadd.f32 %v958, %v959
  %v961 = vrot.slane %v960, 1
  %v962 = vadd.f32 %v960, %v961
  %v963 = vmul.f32 %v611, %v950
  %v964 = vmul.f32 %v613, %v951
  %v965 = vadd.f32 %v963, %v818
  %v966 = vadd.f32 %v964, %v819
  %v967 = vmul.f32 %v965, %v867
  %v968 = vmul.f32 %v966, %v871
  %v969 = vsel %vm375, %v967, 0.0
  %v970 = vsel %vm375, %v968, 0.0
  %v971 = vadd.f32 %v969, %v970
  %v972 = vrot.slane %v971, 4
  %v973 = vadd.f32 %v971, %v972
  %v974 = vrot.slane %v973, 2
  %v975 = vadd.f32 %v973, %v974
  %v976 = vrot.slane %v975, 1
  %v977 = vadd.f32 %v975, %v976
  %v978 = vmul.f32 %v615, %v965
  %v979 = vmul.f32 %v617, %v966
  %v980 = vadd.f32 %v978, %v820
  %v981 = vadd.f32 %v979, %v821
  %v982 = vmul.f32 %v980, %v875
  %v983 = vmul.f32 %v981, %v879
  %v984 = vsel %vm375, %v982, 0.0
  %v985 = vsel %vm375, %v983, 0.0
  %v986 = vadd.f32 %v984, %v985
  %v987 = vrot.slane %v986, 4
  %v988 = vadd.f32 %v986, %v987
  %v989 = vrot.slane %v988, 2
  %v990 = vadd.f32 %v988, %v989
  %v991 = vrot.slane %v990, 1
  %v992 = vadd.f32 %v990, %v991
  %v993 = vmul.f32 %v619, %v980
  %v994 = vmul.f32 %v621, %v981
  %v995 = vadd.f32 %v993, %v822
  %v996 = vadd.f32 %v994, %v823
  %v997 = vmul.f32 %v995, %v883
  %v998 = vmul.f32 %v996, %v887
  %v999 = vsel %vm375, %v997, 0.0
  %v1000 = vsel %vm375, %v998, 0.0
  %v1001 = vadd.f32 %v999, %v1000
  %v1002 = vrot.slane %v1001, 4
  %v1003 = vadd.f32 %v1001, %v1002
  %v1004 = vrot.slane %v1003, 2
  %v1005 = vadd.f32 %v1003, %v1004
  %v1006 = vrot.slane %v1005, 1
  %v1007 = vadd.f32 %v1005, %v1006
  %v1008 = vsel %vm289, %v902, %v917
  %v1009 = vsel %vm308, %v1008, %v932
  %v1010 = vsel %vm327, %v1009, %v947
  %v1011 = vsel %vm64, %v1010, %v962
  %vm1012 = vcmask 1044480
  %v1013 = vsel %vm1012, %v1011, %v977
  %vm1014 = vcmask 1045504
  %v1015 = vsel %vm1014, %v1013, %v992
  %vm1016 = vcmask 1046528
  %v1017 = vsel %vm1016, %v1015, %v1007
  %v1019 = vcombine.high %v479, %v479
  %v1021 = vunpack.c.l.s4 1966171168
  %v1022 = vunpack.c.0.s8 %v1021
  %v1023 = vlaneseq
  %v1024 = vshrl.u32 %v1023, 7
  %v1025 = vsub.s32 %v1022, %v1024
  %v1026 = vrot.slane %v479, %v1025
  %v1028 = vunpack.c.l.s4 1966171168
  %v1029 = vunpack.c.0.s8 %v1028
  %v1030 = vlaneseq
  %v1031 = vshrl.u32 %v1030, 7
  %v1032 = vsub.s32 %v1029, %v1031
  %v1033 = vrot.slane %v1019, %v1032
  %v1034 = vcombine.high %v1026, %v1026
  %v1035 = vcombine.high %v1033, %v1033
  %v1037 = vunpack.c.l.s4 1966171168
  %v1038 = vunpack.c.0.s8 %v1037
  %v1039 = vlaneseq
  %v1040 = vshrl.u32 %v1039, 7
  %v1041 = vsub.s32 %v1038, %v1040
  %v1042 = vrot.slane %v1026, %v1041
  %v1044 = vunpack.c.l.s4 1966171168
  %v1045 = vunpack.c.0.s8 %v1044
  %v1046 = vlaneseq
  %v1047 = vshrl.u32 %v1046, 7
  %v1048 = vsub.s32 %v1045, %v1047
  %v1049 = vrot.slane %v1033, %v1048
  %v1051 = vunpack.c.l.s4 1966171168
  %v1052 = vunpack.c.0.s8 %v1051
  %v1053 = vlaneseq
  %v1054 = vshrl.u32 %v1053, 7
  %v1055 = vsub.s32 %v1052, %v1054
  %v1056 = vrot.slane %v1034, %v1055
  %v1058 = vunpack.c.l.s4 1966171168
  %v1059 = vunpack.c.0.s8 %v1058
  %v1060 = vlaneseq
  %v1061 = vshrl.u32 %v1060, 7
  %v1062 = vsub.s32 %v1059, %v1061
  %v1063 = vrot.slane %v1035, %v1062
  %v1064 = vcombine.high %v1042, %v1042
  %v1065 = vcombine.high %v1049, %v1049
  %v1066 = vcombine.high %v1056, %v1056
  %v1067 = vcombine.high %v1063, %v1063
  %v1068 = vlaneseq
  %v1069 = vshrl.u32 %v1068, 7
  %v1070 = vsub.s32 0, %v1069
  %v1071 = vrot.slane %v1042, %v1070
  %v1072 = vlaneseq
  %v1073 = vshrl.u32 %v1072, 7
  %v1074 = vsub.s32 0, %v1073
  %v1075 = vrot.slane %v1056, %v1074
  %v1076 = vlaneseq
  %v1077 = vshrl.u32 %v1076, 7
  %v1078 = vsub.s32 0, %v1077
  %v1079 = vrot.slane %v1064, %v1078
  %v1080 = vlaneseq
  %v1081 = vshrl.u32 %v1080, 7
  %v1082 = vsub.s32 0, %v1081
  %v1083 = vrot.slane %v1066, %v1082
  %v1084 = vlaneseq
  %v1085 = vshrl.u32 %v1084, 7
  %v1086 = vsub.s32 0, %v1085
  %v1087 = vrot.slane %v1049, %v1086
  %v1088 = vlaneseq
  %v1089 = vshrl.u32 %v1088, 7
  %v1090 = vsub.s32 0, %v1089
  %v1091 = vrot.slane %v1063, %v1090
  %v1092 = vlaneseq
  %v1093 = vshrl.u32 %v1092, 7
  %v1094 = vsub.s32 0, %v1093
  %v1095 = vrot.slane %v1065, %v1094
  %v1096 = vlaneseq
  %v1097 = vshrl.u32 %v1096, 7
  %v1098 = vsub.s32 0, %v1097
  %v1099 = vrot.slane %v1067, %v1098
  %v1108 = vmul.f32 %v1071, %v480
  %v1109 = vmul.f32 %v1071, %v481
  %v1110 = vmul.f32 %v1075, %v480
  %v1111 = vmul.f32 %v1075, %v481
  %v1112 = vmul.f32 %v1079, %v480
  %v1113 = vmul.f32 %v1079, %v481
  %v1114 = vmul.f32 %v1083, %v480
  %v1115 = vmul.f32 %v1083, %v481
  %v1116 = vmul.f32 %v1087, %v480
  %v1117 = vmul.f32 %v1087, %v481
  %v1118 = vmul.f32 %v1091, %v480
  %v1119 = vmul.f32 %v1091, %v481
  %v1120 = vmul.f32 %v1095, %v480
  %v1121 = vmul.f32 %v1095, %v481
  %v1122 = vmul.f32 %v1099, %v480
  %v1123 = vmul.f32 %v1099, %v481
  %v1124 = vmul.f32 %v1108, 1.442695
  %v1125 = vpow.pop %v1124
  %v1126 = vmul.f32 %v1109, 1.442695
  %v1127 = vpow.pop %v1126
  %v1128 = vmul.f32 %v1110, 1.442695
  %v1129 = vpow.pop %v1128
  %v1130 = vmul.f32 %v1111, 1.442695
  %v1131 = vpow.pop %v1130
  %v1132 = vmul.f32 %v1112, 1.442695
  %v1133 = vpow.pop %v1132
  %v1134 = vmul.f32 %v1113, 1.442695
  %v1135 = vpow.pop %v1134
  %v1136 = vmul.f32 %v1114, 1.442695
  %v1137 = vpow.pop %v1136
  %v1138 = vmul.f32 %v1115, 1.442695
  %v1139 = vpow.pop %v1138
  %v1140 = vmul.f32 %v1116, 1.442695
  %v1141 = vpow.pop %v1140
  %v1142 = vmul.f32 %v1117, 1.442695
  %v1143 = vpow.pop %v1142
  %v1144 = vmul.f32 %v1118, 1.442695
  %v1145 = vpow.pop %v1144
  %v1146 = vmul.f32 %v1119, 1.442695
  %v1147 = vpow.pop %v1146
  %v1148 = vmul.f32 %v1120, 1.442695
  %v1149 = vpow.pop %v1148
  %v1150 = vmul.f32 %v1121, 1.442695
  %v1151 = vpow.pop %v1150
  %v1152 = vmul.f32 %v1122, 1.442695
  %v1153 = vpow.pop %v1152
  %v1154 = vmul.f32 %v1123, 1.442695
  %v1155 = vpow.pop %v1154
  %v1157 = vcombine.high %v483, %v483
  %v1159 = vunpack.c.l.s4 1966171168
  %v1160 = vunpack.c.0.s8 %v1159
  %v1161 = vlaneseq
  %v1162 = vshrl.u32 %v1161, 7
  %v1163 = vsub.s32 %v1160, %v1162
  %v1164 = vrot.slane %v483, %v1163
  %v1166 = vunpack.c.l.s4 1966171168
  %v1167 = vunpack.c.0.s8 %v1166
  %v1168 = vlaneseq
  %v1169 = vshrl.u32 %v1168, 7
  %v1170 = vsub.s32 %v1167, %v1169
  %v1171 = vrot.slane %v1157, %v1170
  %v1172 = vcombine.high %v1164, %v1164
  %v1173 = vcombine.high %v1171, %v1171
  %v1175 = vunpack.c.l.s4 1966171168
  %v1176 = vunpack.c.0.s8 %v1175
  %v1177 = vlaneseq
  %v1178 = vshrl.u32 %v1177, 7
  %v1179 = vsub.s32 %v1176, %v1178
  %v1180 = vrot.slane %v1164, %v1179
  %v1182 = vunpack.c.l.s4 1966171168
  %v1183 = vunpack.c.0.s8 %v1182
  %v1184 = vlaneseq
  %v1185 = vshrl.u32 %v1184, 7
  %v1186 = vsub.s32 %v1183, %v1185
  %v1187 = vrot.slane %v1171, %v1186
  %v1189 = vunpack.c.l.s4 1966171168
  %v1190 = vunpack.c.0.s8 %v1189
  %v1191 = vlaneseq
  %v1192 = vshrl.u32 %v1191, 7
  %v1193 = vsub.s32 %v1190, %v1192
  %v1194 = vrot.slane %v1172, %v1193
  %v1196 = vunpack.c.l.s4 1966171168
  %v1197 = vunpack.c.0.s8 %v1196
  %v1198 = vlaneseq
  %v1199 = vshrl.u32 %v1198, 7
  %v1200 = vsub.s32 %v1197, %v1199
  %v1201 = vrot.slane %v1173, %v1200
  %v1202 = vcombine.high %v1180, %v1180
  %v1203 = vcombine.high %v1187, %v1187
  %v1204 = vcombine.high %v1194, %v1194
  %v1205 = vcombine.high %v1201, %v1201
  %v1206 = vlaneseq
  %v1207 = vshrl.u32 %v1206, 7
  %v1208 = vsub.s32 0, %v1207
  %v1209 = vrot.slane %v454, %v1208
  %s1211 = sor.u32 256, 64
  %1212 = vbcast.lane.b32.xlu0 %v1209, %s1211
  %v1213 = vpop.permute.xlu0 %1212
  %s1215 = sor.u32 256, 72
  %1216 = vbcast.lane.b32.xlu0 %v1209, %s1215
  %v1217 = vpop.permute.xlu0 %1216
  %v1218 = vlaneseq
  %v1219 = vshrl.u32 %v1218, 7
  %v1220 = vsub.s32 1, %v1219
  %v1221 = vrot.slane %v454, %v1220
  %s1223 = sor.u32 256, 64
  %1224 = vbcast.lane.b32.xlu0 %v1221, %s1223
  %v1225 = vpop.permute.xlu0 %1224
  %s1227 = sor.u32 256, 72
  %1228 = vbcast.lane.b32.xlu0 %v1221, %s1227
  %v1229 = vpop.permute.xlu0 %1228
  %v1230 = vlaneseq
  %v1231 = vshrl.u32 %v1230, 7
  %v1232 = vsub.s32 2, %v1231
  %v1233 = vrot.slane %v454, %v1232
  %s1235 = sor.u32 256, 64
  %1236 = vbcast.lane.b32.xlu0 %v1233, %s1235
  %v1237 = vpop.permute.xlu0 %1236
  %s1239 = sor.u32 256, 72
  %1240 = vbcast.lane.b32.xlu0 %v1233, %s1239
  %v1241 = vpop.permute.xlu0 %1240
  %v1242 = vlaneseq
  %v1243 = vshrl.u32 %v1242, 7
  %v1244 = vsub.s32 3, %v1243
  %v1245 = vrot.slane %v454, %v1244
  %s1247 = sor.u32 256, 64
  %1248 = vbcast.lane.b32.xlu0 %v1245, %s1247
  %v1249 = vpop.permute.xlu0 %1248
  %s1251 = sor.u32 256, 72
  %1252 = vbcast.lane.b32.xlu0 %v1245, %s1251
  %v1253 = vpop.permute.xlu0 %1252
  %v1254 = vlaneseq
  %v1255 = vshrl.u32 %v1254, 7
  %v1256 = vsub.s32 4, %v1255
  %v1257 = vrot.slane %v454, %v1256
  %s1259 = sor.u32 256, 64
  %1260 = vbcast.lane.b32.xlu0 %v1257, %s1259
  %v1261 = vpop.permute.xlu0 %1260
  %s1263 = sor.u32 256, 72
  %1264 = vbcast.lane.b32.xlu0 %v1257, %s1263
  %v1265 = vpop.permute.xlu0 %1264
  %v1266 = vlaneseq
  %v1267 = vshrl.u32 %v1266, 7
  %v1268 = vsub.s32 5, %v1267
  %v1269 = vrot.slane %v454, %v1268
  %s1271 = sor.u32 256, 64
  %1272 = vbcast.lane.b32.xlu0 %v1269, %s1271
  %v1273 = vpop.permute.xlu0 %1272
  %s1275 = sor.u32 256, 72
  %1276 = vbcast.lane.b32.xlu0 %v1269, %s1275
  %v1277 = vpop.permute.xlu0 %1276
  %v1278 = vlaneseq
  %v1279 = vshrl.u32 %v1278, 7
  %v1280 = vsub.s32 6, %v1279
  %v1281 = vrot.slane %v454, %v1280
  %s1283 = sor.u32 256, 64
  %1284 = vbcast.lane.b32.xlu0 %v1281, %s1283
  %v1285 = vpop.permute.xlu0 %1284
  %s1287 = sor.u32 256, 72
  %1288 = vbcast.lane.b32.xlu0 %v1281, %s1287
  %v1289 = vpop.permute.xlu0 %1288
  %v1290 = vlaneseq
  %v1291 = vshrl.u32 %v1290, 7
  %v1292 = vsub.s32 7, %v1291
  %v1293 = vrot.slane %v454, %v1292
  %s1295 = sor.u32 256, 64
  %1296 = vbcast.lane.b32.xlu0 %v1293, %s1295
  %v1297 = vpop.permute.xlu0 %1296
  %s1299 = sor.u32 256, 72
  %1300 = vbcast.lane.b32.xlu0 %v1293, %s1299
  %v1301 = vpop.permute.xlu0 %1300
  %v1302 = vlaneseq
  %v1303 = vshrl.u32 %v1302, 7
  %v1304 = vsub.s32 0, %v1303
  %v1305 = vrot.slane %v1180, %v1304
  %v1306 = vlaneseq
  %v1307 = vshrl.u32 %v1306, 7
  %v1308 = vsub.s32 0, %v1307
  %v1309 = vrot.slane %v1194, %v1308
  %v1310 = vlaneseq
  %v1311 = vshrl.u32 %v1310, 7
  %v1312 = vsub.s32 0, %v1311
  %v1313 = vrot.slane %v1202, %v1312
  %v1314 = vlaneseq
  %v1315 = vshrl.u32 %v1314, 7
  %v1316 = vsub.s32 0, %v1315
  %v1317 = vrot.slane %v1204, %v1316
  %v1318 = vlaneseq
  %v1319 = vshrl.u32 %v1318, 7
  %v1320 = vsub.s32 0, %v1319
  %v1321 = vrot.slane %v1187, %v1320
  %v1322 = vlaneseq
  %v1323 = vshrl.u32 %v1322, 7
  %v1324 = vsub.s32 0, %v1323
  %v1325 = vrot.slane %v1201, %v1324
  %v1326 = vlaneseq
  %v1327 = vshrl.u32 %v1326, 7
  %v1328 = vsub.s32 0, %v1327
  %v1329 = vrot.slane %v1203, %v1328
  %v1330 = vlaneseq
  %v1331 = vshrl.u32 %v1330, 7
  %v1332 = vsub.s32 0, %v1331
  %v1333 = vrot.slane %v1205, %v1332
  %v1342 = vmul.f32 %v1305, %v1213
  %v1343 = vmul.f32 %v1305, %v1217
  %v1344 = vmul.f32 %v1309, %v1225
  %v1345 = vmul.f32 %v1309, %v1229
  %v1346 = vmul.f32 %v1313, %v1237
  %v1347 = vmul.f32 %v1313, %v1241
  %v1348 = vmul.f32 %v1317, %v1249
  %v1349 = vmul.f32 %v1317, %v1253
  %v1350 = vmul.f32 %v1321, %v1261
  %v1351 = vmul.f32 %v1321, %v1265
  %v1352 = vmul.f32 %v1325, %v1273
  %v1353 = vmul.f32 %v1325, %v1277
  %v1354 = vmul.f32 %v1329, %v1285
  %v1355 = vmul.f32 %v1329, %v1289
  %v1356 = vmul.f32 %v1333, %v1297
  %v1357 = vmul.f32 %v1333, %v1301
  %s1359 = sor.u32 256, 80
  %1360 = vbcast.lane.b32.xlu0 %v1209, %s1359
  %v1361 = vpop.permute.xlu0 %1360
  %s1363 = sor.u32 256, 88
  %1364 = vbcast.lane.b32.xlu0 %v1209, %s1363
  %v1365 = vpop.permute.xlu0 %1364
  %s1367 = sor.u32 256, 80
  %1368 = vbcast.lane.b32.xlu0 %v1221, %s1367
  %v1369 = vpop.permute.xlu0 %1368
  %s1371 = sor.u32 256, 88
  %1372 = vbcast.lane.b32.xlu0 %v1221, %s1371
  %v1373 = vpop.permute.xlu0 %1372
  %s1375 = sor.u32 256, 80
  %1376 = vbcast.lane.b32.xlu0 %v1233, %s1375
  %v1377 = vpop.permute.xlu0 %1376
  %s1379 = sor.u32 256, 88
  %1380 = vbcast.lane.b32.xlu0 %v1233, %s1379
  %v1381 = vpop.permute.xlu0 %1380
  %s1383 = sor.u32 256, 80
  %1384 = vbcast.lane.b32.xlu0 %v1245, %s1383
  %v1385 = vpop.permute.xlu0 %1384
  %s1387 = sor.u32 256, 88
  %1388 = vbcast.lane.b32.xlu0 %v1245, %s1387
  %v1389 = vpop.permute.xlu0 %1388
  %s1391 = sor.u32 256, 80
  %1392 = vbcast.lane.b32.xlu0 %v1257, %s1391
  %v1393 = vpop.permute.xlu0 %1392
  %s1395 = sor.u32 256, 88
  %1396 = vbcast.lane.b32.xlu0 %v1257, %s1395
  %v1397 = vpop.permute.xlu0 %1396
  %s1399 = sor.u32 256, 80
  %1400 = vbcast.lane.b32.xlu0 %v1269, %s1399
  %v1401 = vpop.permute.xlu0 %1400
  %s1403 = sor.u32 256, 88
  %1404 = vbcast.lane.b32.xlu0 %v1269, %s1403
  %v1405 = vpop.permute.xlu0 %1404
  %s1407 = sor.u32 256, 80
  %1408 = vbcast.lane.b32.xlu0 %v1281, %s1407
  %v1409 = vpop.permute.xlu0 %1408
  %s1411 = sor.u32 256, 88
  %1412 = vbcast.lane.b32.xlu0 %v1281, %s1411
  %v1413 = vpop.permute.xlu0 %1412
  %s1415 = sor.u32 256, 80
  %1416 = vbcast.lane.b32.xlu0 %v1293, %s1415
  %v1417 = vpop.permute.xlu0 %1416
  %s1419 = sor.u32 256, 88
  %1420 = vbcast.lane.b32.xlu0 %v1293, %s1419
  %v1421 = vpop.permute.xlu0 %1420
  %v1422 = vmul.f32 %v1125, 0.0
  %v1423 = vmul.f32 %v1127, 0.0
  %v1424 = vadd.f32 %v1422, %v1342
  %v1425 = vadd.f32 %v1423, %v1343
  %v1426 = vmul.f32 %v1424, %v1361
  %v1427 = vmul.f32 %v1425, %v1365
  %v1428 = vsel %vm375, %v1426, 0.0
  %v1429 = vsel %vm375, %v1427, 0.0
  %v1430 = vadd.f32 %v1428, %v1429
  %v1431 = vrot.slane %v1430, 4
  %v1432 = vadd.f32 %v1430, %v1431
  %v1433 = vrot.slane %v1432, 2
  %v1434 = vadd.f32 %v1432, %v1433
  %v1435 = vrot.slane %v1434, 1
  %v1436 = vadd.f32 %v1434, %v1435
  %v1437 = vmul.f32 %v1129, %v1424
  %v1438 = vmul.f32 %v1131, %v1425
  %v1439 = vadd.f32 %v1437, %v1344
  %v1440 = vadd.f32 %v1438, %v1345
  %v1441 = vmul.f32 %v1439, %v1369
  %v1442 = vmul.f32 %v1440, %v1373
  %v1443 = vsel %vm375, %v1441, 0.0
  %v1444 = vsel %vm375, %v1442, 0.0
  %v1445 = vadd.f32 %v1443, %v1444
  %v1446 = vrot.slane %v1445, 4
  %v1447 = vadd.f32 %v1445, %v1446
  %v1448 = vrot.slane %v1447, 2
  %v1449 = vadd.f32 %v1447, %v1448
  %v1450 = vrot.slane %v1449, 1
  %v1451 = vadd.f32 %v1449, %v1450
  %v1452 = vmul.f32 %v1133, %v1439
  %v1453 = vmul.f32 %v1135, %v1440
  %v1454 = vadd.f32 %v1452, %v1346
  %v1455 = vadd.f32 %v1453, %v1347
  %v1456 = vmul.f32 %v1454, %v1377
  %v1457 = vmul.f32 %v1455, %v1381
  %v1458 = vsel %vm375, %v1456, 0.0
  %v1459 = vsel %vm375, %v1457, 0.0
  %v1460 = vadd.f32 %v1458, %v1459
  %v1461 = vrot.slane %v1460, 4
  %v1462 = vadd.f32 %v1460, %v1461
  %v1463 = vrot.slane %v1462, 2
  %v1464 = vadd.f32 %v1462, %v1463
  %v1465 = vrot.slane %v1464, 1
  %v1466 = vadd.f32 %v1464, %v1465
  %v1467 = vmul.f32 %v1137, %v1454
  %v1468 = vmul.f32 %v1139, %v1455
  %v1469 = vadd.f32 %v1467, %v1348
  %v1470 = vadd.f32 %v1468, %v1349
  %v1471 = vmul.f32 %v1469, %v1385
  %v1472 = vmul.f32 %v1470, %v1389
  %v1473 = vsel %vm375, %v1471, 0.0
  %v1474 = vsel %vm375, %v1472, 0.0
  %v1475 = vadd.f32 %v1473, %v1474
  %v1476 = vrot.slane %v1475, 4
  %v1477 = vadd.f32 %v1475, %v1476
  %v1478 = vrot.slane %v1477, 2
  %v1479 = vadd.f32 %v1477, %v1478
  %v1480 = vrot.slane %v1479, 1
  %v1481 = vadd.f32 %v1479, %v1480
  %v1482 = vmul.f32 %v1141, %v1469
  %v1483 = vmul.f32 %v1143, %v1470
  %v1484 = vadd.f32 %v1482, %v1350
  %v1485 = vadd.f32 %v1483, %v1351
  %v1486 = vmul.f32 %v1484, %v1393
  %v1487 = vmul.f32 %v1485, %v1397
  %v1488 = vsel %vm375, %v1486, 0.0
  %v1489 = vsel %vm375, %v1487, 0.0
  %v1490 = vadd.f32 %v1488, %v1489
  %v1491 = vrot.slane %v1490, 4
  %v1492 = vadd.f32 %v1490, %v1491
  %v1493 = vrot.slane %v1492, 2
  %v1494 = vadd.f32 %v1492, %v1493
  %v1495 = vrot.slane %v1494, 1
  %v1496 = vadd.f32 %v1494, %v1495
  %v1497 = vmul.f32 %v1145, %v1484
  %v1498 = vmul.f32 %v1147, %v1485
  %v1499 = vadd.f32 %v1497, %v1352
  %v1500 = vadd.f32 %v1498, %v1353
  %v1501 = vmul.f32 %v1499, %v1401
  %v1502 = vmul.f32 %v1500, %v1405
  %v1503 = vsel %vm375, %v1501, 0.0
  %v1504 = vsel %vm375, %v1502, 0.0
  %v1505 = vadd.f32 %v1503, %v1504
  %v1506 = vrot.slane %v1505, 4
  %v1507 = vadd.f32 %v1505, %v1506
  %v1508 = vrot.slane %v1507, 2
  %v1509 = vadd.f32 %v1507, %v1508
  %v1510 = vrot.slane %v1509, 1
  %v1511 = vadd.f32 %v1509, %v1510
  %v1512 = vmul.f32 %v1149, %v1499
  %v1513 = vmul.f32 %v1151, %v1500
  %v1514 = vadd.f32 %v1512, %v1354
  %v1515 = vadd.f32 %v1513, %v1355
  %v1516 = vmul.f32 %v1514, %v1409
  %v1517 = vmul.f32 %v1515, %v1413
  %v1518 = vsel %vm375, %v1516, 0.0
  %v1519 = vsel %vm375, %v1517, 0.0
  %v1520 = vadd.f32 %v1518, %v1519
  %v1521 = vrot.slane %v1520, 4
  %v1522 = vadd.f32 %v1520, %v1521
  %v1523 = vrot.slane %v1522, 2
  %v1524 = vadd.f32 %v1522, %v1523
  %v1525 = vrot.slane %v1524, 1
  %v1526 = vadd.f32 %v1524, %v1525
  %v1527 = vmul.f32 %v1153, %v1514
  %v1528 = vmul.f32 %v1155, %v1515
  %v1529 = vadd.f32 %v1527, %v1356
  %v1530 = vadd.f32 %v1528, %v1357
  %v1531 = vmul.f32 %v1529, %v1417
  %v1532 = vmul.f32 %v1530, %v1421
  %v1533 = vsel %vm375, %v1531, 0.0
  %v1534 = vsel %vm375, %v1532, 0.0
  %v1535 = vadd.f32 %v1533, %v1534
  %v1536 = vrot.slane %v1535, 4
  %v1537 = vadd.f32 %v1535, %v1536
  %v1538 = vrot.slane %v1537, 2
  %v1539 = vadd.f32 %v1537, %v1538
  %v1540 = vrot.slane %v1539, 1
  %v1541 = vadd.f32 %v1539, %v1540
  %v1542 = vsel %vm289, %v1436, %v1451
  %v1543 = vsel %vm308, %v1542, %v1466
  %v1544 = vsel %vm327, %v1543, %v1481
  %v1545 = vsel %vm64, %v1544, %v1496
  %v1546 = vsel %vm1012, %v1545, %v1511
  %v1547 = vsel %vm1014, %v1546, %v1526
  %v1548 = vsel %vm1016, %v1547, %v1541
  %v1549 = vld [vmem:[%s10] sm:$0x1]
  %v1550 = vlaneseq
  %v1551 = vshrl.u32 %v1550, 7
  %v1552 = vsub.s32 0, %v1551
  %v1553 = vrot.slane %v1549, %v1552
  %v1554 = vmul.f32 %v1553, %v365
  %v1555 = vmul.f32 %v1553, %v366
  %v1556 = vadd.f32 %v1017, %v1554
  %v1557 = vadd.f32 %v1548, %v1555
  %v1558 = vsub.f32 0.0, %v272
  %v1559 = vsub.f32 0.0, %v277
  %v1560 = vmul.f32 %v1558, 1.442695
  %v1561 = vpow.pop %v1560
  %v1562 = vmul.f32 %v1559, 1.442695
  %v1563 = vpow.pop %v1562
  %v1564 = vadd.f32 %v1561, 1.0
  %v1565 = vadd.f32 %v1563, 1.0
  %v1566 = vrcp.pop %v1564
  %v1567 = vmul.f32 1.0, %v1566
  %v1568 = vrcp.pop %v1565
  %v1569 = vmul.f32 1.0, %v1568
  %v1570 = vmul.f32 %v272, %v1567
  %v1571 = vmul.f32 %v277, %v1569
  %1574 = vrot.lane.b32.xlu0 %v1570, 64
  %v1575 = vpop.permute.xlu0 %1574
  %1576 = vrot.lane.b32.xlu0 %v1571, 64
  %v1577 = vpop.permute.xlu0 %1576
  %v1580 = vmul.f32 %v1556, %v1575
  %v1581 = vmul.f32 %v1557, %v1577
  %v1582 = vld [vmem:[%s11] sm:$0xff]
  %v1583 = vld [vmem:[%s11 + $0x8] sm:$0xff]
  %v1584 = vld [vmem:[%s11 + $0x10] sm:$0xff]
  %v1585 = vld [vmem:[%s11 + $0x18] sm:$0xff]
  %v1586 = vld [vmem:[%s11 + $0x20] sm:$0xff]
  %v1587 = vld [vmem:[%s11 + $0x28] sm:$0xff]
  %v1588 = vld [vmem:[%s11 + $0x30] sm:$0xff]
  %v1589 = vld [vmem:[%s11 + $0x38] sm:$0xff]
  %v1591 = vsel %vm375, %v1580, 0
  %v1594 = vsel %vm375, %v1581, 0
  %1596 = vmatprep.subr.mxu0 0.0
  %1597 = vmatpush1.msra.mxu0 %v1582
  %1598 = vmatprep.subr.mxu0 0.0
  %1599 = vmatpush1.msra.mxu0 %v1583
  %1600 = vmatprep.subr.mxu0 0.0
  %1601 = vmatpush1.msra.mxu0 %v1584
  %1602 = vmatprep.subr.mxu0 0.0
  %1603 = vmatpush1.msra.mxu0 %v1585
  %1604 = vmatprep.subr.mxu0 0.0
  %1605 = vmatpush1.msra.mxu0 %v1586
  %1606 = vmatprep.subr.mxu0 0.0
  %1607 = vmatpush1.msra.mxu0 %v1587
  %1608 = vmatprep.subr.mxu0 0.0
  %1609 = vmatpush1.msra.mxu0 %v1588
  %1610 = vmatprep.subr.mxu0 0.0
  %1611 = vmatpush1.msra.mxu0 %v1589
  %1612 = vmatprep.subr.mxu0 0.0
  %1613 = vmatpush1.msra.mxu0 0.0
  %1614 = vmatprep.subr.mxu0 0.0
  %1615 = vmatpush1.msra.mxu0 0.0
  %1616 = vmatprep.subr.mxu0 0.0
  %1617 = vmatpush1.msra.mxu0 0.0
  %1618 = vmatprep.subr.mxu0 0.0
  %1619 = vmatpush1.msra.mxu0 0.0
  %1620 = vmatprep.subr.mxu0 0.0
  %1621 = vmatpush1.msra.mxu0 0.0
  %1622 = vmatprep.subr.mxu0 0.0
  %1623 = vmatpush1.msra.mxu0 0.0
  %1624 = vmatprep.subr.mxu0 0.0
  %1625 = vmatpush1.msra.mxu0 0.0
  %1626 = vmatprep.subr.mxu0 0.0
  %1627 = vmatpush1.msra.mxu0 0.0
  %1628 = vmatprep.subr.mxu0 0.0
  %1629 = vmatpush1.msra.mxu0 0.0
  %1630 = vmatprep.subr.mxu0 0.0
  %1631 = vmatpush1.msra.mxu0 0.0
  %1632 = vmatprep.subr.mxu0 0.0
  %1633 = vmatpush1.msra.mxu0 0.0
  %1634 = vmatprep.subr.mxu0 0.0
  %1635 = vmatpush1.msra.mxu0 0.0
  %1636 = vmatprep.subr.mxu0 0.0
  %1637 = vmatpush1.msra.mxu0 0.0
  %1638 = vmatprep.subr.mxu0 0.0
  %1639 = vmatpush1.msra.mxu0 0.0
  %1640 = vmatprep.subr.mxu0 0.0
  %1641 = vmatpush1.msra.mxu0 0.0
  %1642 = vmatprep.subr.mxu0 0.0
  %1643 = vmatpush1.msra.mxu0 0.0
  %1644 = vmatprep.subr.mxu0 0.0
  %1645 = vmatpush1.msra.mxu0 0.0
  %1646 = vmatprep.subr.mxu0 0.0
  %1647 = vmatpush1.msra.mxu0 0.0
  %1648 = vmatprep.subr.mxu0 0.0
  %1649 = vmatpush1.msra.mxu0 0.0
  %1650 = vmatprep.subr.mxu0 0.0
  %1651 = vmatpush1.msra.mxu0 0.0
  %1652 = vmatprep.subr.mxu0 0.0
  %1653 = vmatpush1.msra.mxu0 0.0
  %1654 = vmatprep.subr.mxu0 0.0
  %1655 = vmatpush1.msra.mxu0 0.0
  %1656 = vmatprep.subr.mxu0 0.0
  %1657 = vmatpush1.msra.mxu0 0.0
  %1658 = vmatprep.subr.mxu0 0.0
  %1659 = vmatpush1.msra.mxu0 0.0
  %1660 = vmatprep.mubr.f32.mxu0 0.0
  %1661 = vmatmul.mubr.f32.gmra.mrb[0].mxu0 %v1591
  %v1662 = vpop.f32.mrb[0].mxu0
  %v1663 = vadd.f32 %v135, %v1662
  %v1664 = vpop.f32.mrb[0].mxu0
  %1665 = vmatprep.mubr.f32.mxu0 0.0
  %1666 = vmatmul.mubr.f32.gmra.mrb[0].mxu0 %v1594
  %v1667 = vpop.f32.mrb[0].mxu0
  %v1668 = vadd.f32 %v140, %v1667
  %v1669 = vpop.f32.mrb[0].mxu0
  %1670 = vdwg.mxu0
  %v1671 = vmul.f32 %v1663, %v1663
  %v1672 = vmul.f32 %v1668, %v1668
  %v1673 = vsel %vm172, %v1671, 0.0
  %1674 = vadd.xlane.f32.xlu0 %v1673
  %v1675 = vpop.xlane.xlu0 %1674
  %v1676 = vsel %vm172, %v1672, 0.0
  %1677 = vadd.xlane.f32.xlu0 %v1676
  %v1678 = vpop.xlane.xlu0 %1677
  %v1679 = vmul.f32 %v1675, %v179
  %v1680 = vmul.f32 %v1678, %v179
  %v1681 = vadd.f32 %v1679, 1e-05
  %v1682 = vadd.f32 %v1680, 1e-05
  %v1683 = vrsqrt.pop %v1681
  %v1684 = vrsqrt.pop %v1682
  %v1685 = vmul.f32 %v1663, %v1683
  %v1686 = vmul.f32 %v1668, %v1684
  %v1687 = vld [vmem:[%s3 + $0x1] sm:$0x1]
  %v1688 = vlaneseq
  %v1689 = vshrl.u32 %v1688, 7
  %v1690 = vsub.s32 0, %v1689
  %v1691 = vrot.slane %v1687, %v1690
  %v1692 = vmul.f32 %v1685, %v1691
  %v1693 = vmul.f32 %v1686, %v1691
  %s1694 = scalar_lea.vmem %s4, 32
  %v1695 = vld [vmem:[%s1694] sm:$0xff]
  %v1696 = vld [vmem:[%s1694 + $0x8] sm:$0xff]
  %v1697 = vld [vmem:[%s1694 + $0x10] sm:$0xff]
  %v1698 = vld [vmem:[%s1694 + $0x18] sm:$0xff]
  %v1700 = vsel %vm172, %v1692, 0
  %v1703 = vsel %vm172, %v1693, 0
  %1705 = vmatprep.subr.mxu0 0.0
  %1706 = vmatpush1.msra.mxu0 %v1695
  %1707 = vmatprep.subr.mxu0 0.0
  %1708 = vmatpush1.msra.mxu0 %v1696
  %1709 = vmatprep.subr.mxu0 0.0
  %1710 = vmatpush1.msra.mxu0 %v1697
  %1711 = vmatprep.subr.mxu0 0.0
  %1712 = vmatpush1.msra.mxu0 %v1698
  %1713 = vmatprep.subr.mxu0 0.0
  %1714 = vmatpush1.msra.mxu0 0.0
  %1715 = vmatprep.subr.mxu0 0.0
  %1716 = vmatpush1.msra.mxu0 0.0
  %1717 = vmatprep.subr.mxu0 0.0
  %1718 = vmatpush1.msra.mxu0 0.0
  %1719 = vmatprep.subr.mxu0 0.0
  %1720 = vmatpush1.msra.mxu0 0.0
  %1721 = vmatprep.subr.mxu0 0.0
  %1722 = vmatpush1.msra.mxu0 0.0
  %1723 = vmatprep.subr.mxu0 0.0
  %1724 = vmatpush1.msra.mxu0 0.0
  %1725 = vmatprep.subr.mxu0 0.0
  %1726 = vmatpush1.msra.mxu0 0.0
  %1727 = vmatprep.subr.mxu0 0.0
  %1728 = vmatpush1.msra.mxu0 0.0
  %1729 = vmatprep.subr.mxu0 0.0
  %1730 = vmatpush1.msra.mxu0 0.0
  %1731 = vmatprep.subr.mxu0 0.0
  %1732 = vmatpush1.msra.mxu0 0.0
  %1733 = vmatprep.subr.mxu0 0.0
  %1734 = vmatpush1.msra.mxu0 0.0
  %1735 = vmatprep.subr.mxu0 0.0
  %1736 = vmatpush1.msra.mxu0 0.0
  %1737 = vmatprep.subr.mxu0 0.0
  %1738 = vmatpush1.msra.mxu0 0.0
  %1739 = vmatprep.subr.mxu0 0.0
  %1740 = vmatpush1.msra.mxu0 0.0
  %1741 = vmatprep.subr.mxu0 0.0
  %1742 = vmatpush1.msra.mxu0 0.0
  %1743 = vmatprep.subr.mxu0 0.0
  %1744 = vmatpush1.msra.mxu0 0.0
  %1745 = vmatprep.subr.mxu0 0.0
  %1746 = vmatpush1.msra.mxu0 0.0
  %1747 = vmatprep.subr.mxu0 0.0
  %1748 = vmatpush1.msra.mxu0 0.0
  %1749 = vmatprep.subr.mxu0 0.0
  %1750 = vmatpush1.msra.mxu0 0.0
  %1751 = vmatprep.subr.mxu0 0.0
  %1752 = vmatpush1.msra.mxu0 0.0
  %1753 = vmatprep.subr.mxu0 0.0
  %1754 = vmatpush1.msra.mxu0 0.0
  %1755 = vmatprep.subr.mxu0 0.0
  %1756 = vmatpush1.msra.mxu0 0.0
  %1757 = vmatprep.subr.mxu0 0.0
  %1758 = vmatpush1.msra.mxu0 0.0
  %1759 = vmatprep.subr.mxu0 0.0
  %1760 = vmatpush1.msra.mxu0 0.0
  %1761 = vmatprep.subr.mxu0 0.0
  %1762 = vmatpush1.msra.mxu0 0.0
  %1763 = vmatprep.subr.mxu0 0.0
  %1764 = vmatpush1.msra.mxu0 0.0
  %1765 = vmatprep.subr.mxu0 0.0
  %1766 = vmatpush1.msra.mxu0 0.0
  %1767 = vmatprep.subr.mxu0 0.0
  %1768 = vmatpush1.msra.mxu0 0.0
  %1769 = vmatprep.mubr.f32.mxu0 0.0
  %1770 = vmatmul.mubr.f32.gmra.mrb[0].mxu0 %v1700
  %v1771 = vpop.f32.mrb[0].mxu0
  %v1772 = vadd.f32 0.0, %v1771
  %v1773 = vpop.f32.mrb[0].mxu0
  %1774 = vmatprep.mubr.f32.mxu0 0.0
  %1775 = vmatmul.mubr.f32.gmra.mrb[0].mxu0 %v1703
  %v1776 = vpop.f32.mrb[0].mxu0
  %v1777 = vadd.f32 0.0, %v1776
  %v1778 = vpop.f32.mrb[0].mxu0
  %1779 = vdwg.mxu0
  %s1780 = scalar_lea.vmem %s5, 4
  %v1781 = vld [vmem:[%s1780] sm:$0xf]
  %v1782 = vlaneseq
  %v1783 = vshrl.u32 %v1782, 7
  %v1784 = vsub.s32 3, %v1783
  %v1785 = vrot.slane %v1781, %v1784
  %v1786 = vmul.f32 %v1772, %v1785
  %v1787 = vmul.f32 %v1777, %v1785
  %v1790 = vrot.slane %v1772, 7
  %v1791 = vrot.slane %v1777, 7
  %v1792 = vsel %vm289, %v1790, %v1791
  %v1795 = vsel %vm289, 0.0, %v1790
  %v1796 = vsel %vm296, %v1795, 0.0
  %v1797 = vsel %vm297, %v1792, 0.0
  %v1798 = vlaneseq
  %v1799 = vshrl.u32 %v1798, 7
  %v1800 = vsub.s32 2, %v1799
  %v1801 = vrot.slane %v1781, %v1800
  %v1802 = vmul.f32 %v1796, %v1801
  %v1803 = vmul.f32 %v1797, %v1801
  %v1804 = vadd.f32 %v1786, %v1802
  %v1805 = vadd.f32 %v1787, %v1803
  %v1806 = vrot.slane %v1772, 6
  %v1807 = vrot.slane %v1777, 6
  %v1808 = vsel %vm308, %v1806, %v1807
  %v1811 = vsel %vm308, 0.0, %v1806
  %v1812 = vsel %vm315, %v1811, 0.0
  %v1813 = vsel %vm316, %v1808, 0.0
  %v1814 = vlaneseq
  %v1815 = vshrl.u32 %v1814, 7
  %v1816 = vsub.s32 1, %v1815
  %v1817 = vrot.slane %v1781, %v1816
  %v1818 = vmul.f32 %v1812, %v1817
  %v1819 = vmul.f32 %v1813, %v1817
  %v1820 = vadd.f32 %v1804, %v1818
  %v1821 = vadd.f32 %v1805, %v1819
  %v1822 = vrot.slane %v1772, 5
  %v1823 = vrot.slane %v1777, 5
  %v1824 = vsel %vm327, %v1822, %v1823
  %v1827 = vsel %vm327, 0.0, %v1822
  %v1828 = vsel %vm334, %v1827, 0.0
  %v1829 = vsel %vm335, %v1824, 0.0
  %v1830 = vlaneseq
  %v1831 = vshrl.u32 %v1830, 7
  %v1832 = vsub.s32 0, %v1831
  %v1833 = vrot.slane %v1781, %v1832
  %v1834 = vmul.f32 %v1828, %v1833
  %v1835 = vmul.f32 %v1829, %v1833
  %v1836 = vadd.f32 %v1820, %v1834
  %v1837 = vadd.f32 %v1821, %v1835
  %v1838 = vld [vmem:[%s6 + $0x1] sm:$0x1]
  %v1839 = vlaneseq
  %v1840 = vshrl.u32 %v1839, 7
  %v1841 = vsub.s32 0, %v1840
  %v1842 = vrot.slane %v1838, %v1841
  %v1843 = vadd.f32 %v1836, %v1842
  %v1844 = vadd.f32 %v1837, %v1842
  %v1845 = vsub.f32 0.0, %v1843
  %v1846 = vsub.f32 0.0, %v1844
  %v1847 = vmul.f32 %v1845, 1.442695
  %v1848 = vpow.pop %v1847
  %v1849 = vmul.f32 %v1846, 1.442695
  %v1850 = vpow.pop %v1849
  %v1851 = vadd.f32 %v1848, 1.0
  %v1852 = vadd.f32 %v1850, 1.0
  %v1853 = vrcp.pop %v1851
  %v1854 = vmul.f32 1.0, %v1853
  %v1855 = vrcp.pop %v1852
  %v1856 = vmul.f32 1.0, %v1855
  %v1857 = vmul.f32 %v1843, %v1854
  %v1858 = vmul.f32 %v1844, %v1856
  %s1859 = scalar_lea.vmem %s7, 64
  %v1860 = vld [vmem:[%s1859] sm:$0xff]
  %v1861 = vld [vmem:[%s1859 + $0x8] sm:$0xff]
  %v1862 = vld [vmem:[%s1859 + $0x10] sm:$0xff]
  %v1863 = vld [vmem:[%s1859 + $0x18] sm:$0xff]
  %v1864 = vld [vmem:[%s1859 + $0x20] sm:$0xff]
  %v1865 = vld [vmem:[%s1859 + $0x28] sm:$0xff]
  %v1866 = vld [vmem:[%s1859 + $0x30] sm:$0xff]
  %v1867 = vld [vmem:[%s1859 + $0x38] sm:$0xff]
  %v1869 = vsel %vm375, %v1857, 0
  %v1872 = vsel %vm375, %v1858, 0
  %1874 = vmatprep.subr.mxu0 0.0
  %1875 = vmatpush1.msra.mxu0 %v1860
  %1876 = vmatprep.subr.mxu0 0.0
  %1877 = vmatpush1.msra.mxu0 %v1861
  %1878 = vmatprep.subr.mxu0 0.0
  %1879 = vmatpush1.msra.mxu0 %v1862
  %1880 = vmatprep.subr.mxu0 0.0
  %1881 = vmatpush1.msra.mxu0 %v1863
  %1882 = vmatprep.subr.mxu0 0.0
  %1883 = vmatpush1.msra.mxu0 %v1864
  %1884 = vmatprep.subr.mxu0 0.0
  %1885 = vmatpush1.msra.mxu0 %v1865
  %1886 = vmatprep.subr.mxu0 0.0
  %1887 = vmatpush1.msra.mxu0 %v1866
  %1888 = vmatprep.subr.mxu0 0.0
  %1889 = vmatpush1.msra.mxu0 %v1867
  %1890 = vmatprep.subr.mxu0 0.0
  %1891 = vmatpush1.msra.mxu0 0.0
  %1892 = vmatprep.subr.mxu0 0.0
  %1893 = vmatpush1.msra.mxu0 0.0
  %1894 = vmatprep.subr.mxu0 0.0
  %1895 = vmatpush1.msra.mxu0 0.0
  %1896 = vmatprep.subr.mxu0 0.0
  %1897 = vmatpush1.msra.mxu0 0.0
  %1898 = vmatprep.subr.mxu0 0.0
  %1899 = vmatpush1.msra.mxu0 0.0
  %1900 = vmatprep.subr.mxu0 0.0
  %1901 = vmatpush1.msra.mxu0 0.0
  %1902 = vmatprep.subr.mxu0 0.0
  %1903 = vmatpush1.msra.mxu0 0.0
  %1904 = vmatprep.subr.mxu0 0.0
  %1905 = vmatpush1.msra.mxu0 0.0
  %1906 = vmatprep.subr.mxu0 0.0
  %1907 = vmatpush1.msra.mxu0 0.0
  %1908 = vmatprep.subr.mxu0 0.0
  %1909 = vmatpush1.msra.mxu0 0.0
  %1910 = vmatprep.subr.mxu0 0.0
  %1911 = vmatpush1.msra.mxu0 0.0
  %1912 = vmatprep.subr.mxu0 0.0
  %1913 = vmatpush1.msra.mxu0 0.0
  %1914 = vmatprep.subr.mxu0 0.0
  %1915 = vmatpush1.msra.mxu0 0.0
  %1916 = vmatprep.subr.mxu0 0.0
  %1917 = vmatpush1.msra.mxu0 0.0
  %1918 = vmatprep.subr.mxu0 0.0
  %1919 = vmatpush1.msra.mxu0 0.0
  %1920 = vmatprep.subr.mxu0 0.0
  %1921 = vmatpush1.msra.mxu0 0.0
  %1922 = vmatprep.subr.mxu0 0.0
  %1923 = vmatpush1.msra.mxu0 0.0
  %1924 = vmatprep.subr.mxu0 0.0
  %1925 = vmatpush1.msra.mxu0 0.0
  %1926 = vmatprep.subr.mxu0 0.0
  %1927 = vmatpush1.msra.mxu0 0.0
  %1928 = vmatprep.subr.mxu0 0.0
  %1929 = vmatpush1.msra.mxu0 0.0
  %1930 = vmatprep.subr.mxu0 0.0
  %1931 = vmatpush1.msra.mxu0 0.0
  %1932 = vmatprep.subr.mxu0 0.0
  %1933 = vmatpush1.msra.mxu0 0.0
  %1934 = vmatprep.subr.mxu0 0.0
  %1935 = vmatpush1.msra.mxu0 0.0
  %1936 = vmatprep.subr.mxu0 0.0
  %1937 = vmatpush1.msra.mxu0 0.0
  %1938 = vmatprep.mubr.f32.mxu0 0.0
  %1939 = vmatmul.mubr.f32.gmra.mrb[0].mxu0 %v1869
  %v1940 = vpop.f32.mrb[0].mxu0
  %v1941 = vadd.f32 0.0, %v1940
  %v1942 = vpop.f32.mrb[0].mxu0
  %1943 = vmatprep.mubr.f32.mxu0 0.0
  %1944 = vmatmul.mubr.f32.gmra.mrb[0].mxu0 %v1872
  %v1945 = vpop.f32.mrb[0].mxu0
  %v1946 = vadd.f32 0.0, %v1945
  %v1947 = vpop.f32.mrb[0].mxu0
  %1948 = vdwg.mxu0
  %v1949 = vld [vmem:[%s8 + $0x1] sm:$0x1]
  %v1950 = vlaneseq
  %v1951 = vshrl.u32 %v1950, 7
  %v1952 = vsub.s32 0, %v1951
  %v1953 = vrot.slane %v1949, %v1952
  %v1954 = vadd.f32 %v1941, %v1953
  %v1955 = vadd.f32 %v1946, %v1953
  %vm1956 = vcmp.gt.f32.partialorder %v1954, 20.0
  %vm1957 = vcmp.gt.f32.partialorder %v1955, 20.0
  %v1958 = vmin.f32 %v1954, 20.0
  %v1959 = vmin.f32 %v1955, 20.0
  %v1960 = vmul.f32 %v1958, 1.442695
  %v1961 = vpow.pop %v1960
  %v1962 = vmul.f32 %v1959, 1.442695
  %v1963 = vpow.pop %v1962
  %v1964 = vadd.f32 %v1961, 1.0
  %v1965 = vadd.f32 %v1963, 1.0
  %v1966 = vlog2.pop %v1964
  %v1967 = vmul.f32 %v1966, 0.6931472
  %v1968 = vlog2.pop %v1965
  %v1969 = vmul.f32 %v1968, 0.6931472
  %v1970 = vsel %vm1956, %v1954, %v1967
  %v1971 = vsel %vm1957, %v1955, %v1969
  %s1972 = scalar_lea.vmem %s9, 16
  %v1973 = vld [vmem:[%s1972] sm:$0xff]
  %v1974 = vld [vmem:[%s1972 + $0x8] sm:$0xff]
  %v1975 = vmul.f32 %v1970, %v1857
  %v1976 = vmul.f32 %v1971, %v1858
  %v1978 = vcombine.high %v1970, %v1970
  %v1980 = vunpack.c.l.s4 1966171168
  %v1981 = vunpack.c.0.s8 %v1980
  %v1982 = vlaneseq
  %v1983 = vshrl.u32 %v1982, 7
  %v1984 = vsub.s32 %v1981, %v1983
  %v1985 = vrot.slane %v1970, %v1984
  %v1987 = vunpack.c.l.s4 1966171168
  %v1988 = vunpack.c.0.s8 %v1987
  %v1989 = vlaneseq
  %v1990 = vshrl.u32 %v1989, 7
  %v1991 = vsub.s32 %v1988, %v1990
  %v1992 = vrot.slane %v1978, %v1991
  %v1993 = vcombine.high %v1985, %v1985
  %v1994 = vcombine.high %v1992, %v1992
  %v1996 = vunpack.c.l.s4 1966171168
  %v1997 = vunpack.c.0.s8 %v1996
  %v1998 = vlaneseq
  %v1999 = vshrl.u32 %v1998, 7
  %v2000 = vsub.s32 %v1997, %v1999
  %v2001 = vrot.slane %v1985, %v2000
  %v2003 = vunpack.c.l.s4 1966171168
  %v2004 = vunpack.c.0.s8 %v2003
  %v2005 = vlaneseq
  %v2006 = vshrl.u32 %v2005, 7
  %v2007 = vsub.s32 %v2004, %v2006
  %v2008 = vrot.slane %v1992, %v2007
  %v2010 = vunpack.c.l.s4 1966171168
  %v2011 = vunpack.c.0.s8 %v2010
  %v2012 = vlaneseq
  %v2013 = vshrl.u32 %v2012, 7
  %v2014 = vsub.s32 %v2011, %v2013
  %v2015 = vrot.slane %v1993, %v2014
  %v2017 = vunpack.c.l.s4 1966171168
  %v2018 = vunpack.c.0.s8 %v2017
  %v2019 = vlaneseq
  %v2020 = vshrl.u32 %v2019, 7
  %v2021 = vsub.s32 %v2018, %v2020
  %v2022 = vrot.slane %v1994, %v2021
  %v2023 = vcombine.high %v2001, %v2001
  %v2024 = vcombine.high %v2008, %v2008
  %v2025 = vcombine.high %v2015, %v2015
  %v2026 = vcombine.high %v2022, %v2022
  %v2027 = vlaneseq
  %v2028 = vshrl.u32 %v2027, 7
  %v2029 = vsub.s32 0, %v2028
  %v2030 = vrot.slane %v2001, %v2029
  %v2031 = vlaneseq
  %v2032 = vshrl.u32 %v2031, 7
  %v2033 = vsub.s32 0, %v2032
  %v2034 = vrot.slane %v2015, %v2033
  %v2035 = vlaneseq
  %v2036 = vshrl.u32 %v2035, 7
  %v2037 = vsub.s32 0, %v2036
  %v2038 = vrot.slane %v2023, %v2037
  %v2039 = vlaneseq
  %v2040 = vshrl.u32 %v2039, 7
  %v2041 = vsub.s32 0, %v2040
  %v2042 = vrot.slane %v2025, %v2041
  %v2043 = vlaneseq
  %v2044 = vshrl.u32 %v2043, 7
  %v2045 = vsub.s32 0, %v2044
  %v2046 = vrot.slane %v2008, %v2045
  %v2047 = vlaneseq
  %v2048 = vshrl.u32 %v2047, 7
  %v2049 = vsub.s32 0, %v2048
  %v2050 = vrot.slane %v2022, %v2049
  %v2051 = vlaneseq
  %v2052 = vshrl.u32 %v2051, 7
  %v2053 = vsub.s32 0, %v2052
  %v2054 = vrot.slane %v2024, %v2053
  %v2055 = vlaneseq
  %v2056 = vshrl.u32 %v2055, 7
  %v2057 = vsub.s32 0, %v2056
  %v2058 = vrot.slane %v2026, %v2057
  %v2067 = vmul.f32 %v2030, %v1973
  %v2068 = vmul.f32 %v2030, %v1974
  %v2069 = vmul.f32 %v2034, %v1973
  %v2070 = vmul.f32 %v2034, %v1974
  %v2071 = vmul.f32 %v2038, %v1973
  %v2072 = vmul.f32 %v2038, %v1974
  %v2073 = vmul.f32 %v2042, %v1973
  %v2074 = vmul.f32 %v2042, %v1974
  %v2075 = vmul.f32 %v2046, %v1973
  %v2076 = vmul.f32 %v2046, %v1974
  %v2077 = vmul.f32 %v2050, %v1973
  %v2078 = vmul.f32 %v2050, %v1974
  %v2079 = vmul.f32 %v2054, %v1973
  %v2080 = vmul.f32 %v2054, %v1974
  %v2081 = vmul.f32 %v2058, %v1973
  %v2082 = vmul.f32 %v2058, %v1974
  %v2083 = vmul.f32 %v2067, 1.442695
  %v2084 = vpow.pop %v2083
  %v2085 = vmul.f32 %v2068, 1.442695
  %v2086 = vpow.pop %v2085
  %v2087 = vmul.f32 %v2069, 1.442695
  %v2088 = vpow.pop %v2087
  %v2089 = vmul.f32 %v2070, 1.442695
  %v2090 = vpow.pop %v2089
  %v2091 = vmul.f32 %v2071, 1.442695
  %v2092 = vpow.pop %v2091
  %v2093 = vmul.f32 %v2072, 1.442695
  %v2094 = vpow.pop %v2093
  %v2095 = vmul.f32 %v2073, 1.442695
  %v2096 = vpow.pop %v2095
  %v2097 = vmul.f32 %v2074, 1.442695
  %v2098 = vpow.pop %v2097
  %v2099 = vmul.f32 %v2075, 1.442695
  %v2100 = vpow.pop %v2099
  %v2101 = vmul.f32 %v2076, 1.442695
  %v2102 = vpow.pop %v2101
  %v2103 = vmul.f32 %v2077, 1.442695
  %v2104 = vpow.pop %v2103
  %v2105 = vmul.f32 %v2078, 1.442695
  %v2106 = vpow.pop %v2105
  %v2107 = vmul.f32 %v2079, 1.442695
  %v2108 = vpow.pop %v2107
  %v2109 = vmul.f32 %v2080, 1.442695
  %v2110 = vpow.pop %v2109
  %v2111 = vmul.f32 %v2081, 1.442695
  %v2112 = vpow.pop %v2111
  %v2113 = vmul.f32 %v2082, 1.442695
  %v2114 = vpow.pop %v2113
  %v2116 = vcombine.high %v1975, %v1975
  %v2118 = vunpack.c.l.s4 1966171168
  %v2119 = vunpack.c.0.s8 %v2118
  %v2120 = vlaneseq
  %v2121 = vshrl.u32 %v2120, 7
  %v2122 = vsub.s32 %v2119, %v2121
  %v2123 = vrot.slane %v1975, %v2122
  %v2125 = vunpack.c.l.s4 1966171168
  %v2126 = vunpack.c.0.s8 %v2125
  %v2127 = vlaneseq
  %v2128 = vshrl.u32 %v2127, 7
  %v2129 = vsub.s32 %v2126, %v2128
  %v2130 = vrot.slane %v2116, %v2129
  %v2131 = vcombine.high %v2123, %v2123
  %v2132 = vcombine.high %v2130, %v2130
  %v2134 = vunpack.c.l.s4 1966171168
  %v2135 = vunpack.c.0.s8 %v2134
  %v2136 = vlaneseq
  %v2137 = vshrl.u32 %v2136, 7
  %v2138 = vsub.s32 %v2135, %v2137
  %v2139 = vrot.slane %v2123, %v2138
  %v2141 = vunpack.c.l.s4 1966171168
  %v2142 = vunpack.c.0.s8 %v2141
  %v2143 = vlaneseq
  %v2144 = vshrl.u32 %v2143, 7
  %v2145 = vsub.s32 %v2142, %v2144
  %v2146 = vrot.slane %v2130, %v2145
  %v2148 = vunpack.c.l.s4 1966171168
  %v2149 = vunpack.c.0.s8 %v2148
  %v2150 = vlaneseq
  %v2151 = vshrl.u32 %v2150, 7
  %v2152 = vsub.s32 %v2149, %v2151
  %v2153 = vrot.slane %v2131, %v2152
  %v2155 = vunpack.c.l.s4 1966171168
  %v2156 = vunpack.c.0.s8 %v2155
  %v2157 = vlaneseq
  %v2158 = vshrl.u32 %v2157, 7
  %v2159 = vsub.s32 %v2156, %v2158
  %v2160 = vrot.slane %v2132, %v2159
  %v2161 = vcombine.high %v2139, %v2139
  %v2162 = vcombine.high %v2146, %v2146
  %v2163 = vcombine.high %v2153, %v2153
  %v2164 = vcombine.high %v2160, %v2160
  %v2165 = vlaneseq
  %v2166 = vshrl.u32 %v2165, 7
  %v2167 = vsub.s32 0, %v2166
  %v2168 = vrot.slane %v1941, %v2167
  %s2170 = sor.u32 256, 64
  %2171 = vbcast.lane.b32.xlu0 %v2168, %s2170
  %v2172 = vpop.permute.xlu0 %2171
  %s2174 = sor.u32 256, 72
  %2175 = vbcast.lane.b32.xlu0 %v2168, %s2174
  %v2176 = vpop.permute.xlu0 %2175
  %v2177 = vlaneseq
  %v2178 = vshrl.u32 %v2177, 7
  %v2179 = vsub.s32 1, %v2178
  %v2180 = vrot.slane %v1941, %v2179
  %s2182 = sor.u32 256, 64
  %2183 = vbcast.lane.b32.xlu0 %v2180, %s2182
  %v2184 = vpop.permute.xlu0 %2183
  %s2186 = sor.u32 256, 72
  %2187 = vbcast.lane.b32.xlu0 %v2180, %s2186
  %v2188 = vpop.permute.xlu0 %2187
  %v2189 = vlaneseq
  %v2190 = vshrl.u32 %v2189, 7
  %v2191 = vsub.s32 2, %v2190
  %v2192 = vrot.slane %v1941, %v2191
  %s2194 = sor.u32 256, 64
  %2195 = vbcast.lane.b32.xlu0 %v2192, %s2194
  %v2196 = vpop.permute.xlu0 %2195
  %s2198 = sor.u32 256, 72
  %2199 = vbcast.lane.b32.xlu0 %v2192, %s2198
  %v2200 = vpop.permute.xlu0 %2199
  %v2201 = vlaneseq
  %v2202 = vshrl.u32 %v2201, 7
  %v2203 = vsub.s32 3, %v2202
  %v2204 = vrot.slane %v1941, %v2203
  %s2206 = sor.u32 256, 64
  %2207 = vbcast.lane.b32.xlu0 %v2204, %s2206
  %v2208 = vpop.permute.xlu0 %2207
  %s2210 = sor.u32 256, 72
  %2211 = vbcast.lane.b32.xlu0 %v2204, %s2210
  %v2212 = vpop.permute.xlu0 %2211
  %v2213 = vlaneseq
  %v2214 = vshrl.u32 %v2213, 7
  %v2215 = vsub.s32 4, %v2214
  %v2216 = vrot.slane %v1941, %v2215
  %s2218 = sor.u32 256, 64
  %2219 = vbcast.lane.b32.xlu0 %v2216, %s2218
  %v2220 = vpop.permute.xlu0 %2219
  %s2222 = sor.u32 256, 72
  %2223 = vbcast.lane.b32.xlu0 %v2216, %s2222
  %v2224 = vpop.permute.xlu0 %2223
  %v2225 = vlaneseq
  %v2226 = vshrl.u32 %v2225, 7
  %v2227 = vsub.s32 5, %v2226
  %v2228 = vrot.slane %v1941, %v2227
  %s2230 = sor.u32 256, 64
  %2231 = vbcast.lane.b32.xlu0 %v2228, %s2230
  %v2232 = vpop.permute.xlu0 %2231
  %s2234 = sor.u32 256, 72
  %2235 = vbcast.lane.b32.xlu0 %v2228, %s2234
  %v2236 = vpop.permute.xlu0 %2235
  %v2237 = vlaneseq
  %v2238 = vshrl.u32 %v2237, 7
  %v2239 = vsub.s32 6, %v2238
  %v2240 = vrot.slane %v1941, %v2239
  %s2242 = sor.u32 256, 64
  %2243 = vbcast.lane.b32.xlu0 %v2240, %s2242
  %v2244 = vpop.permute.xlu0 %2243
  %s2246 = sor.u32 256, 72
  %2247 = vbcast.lane.b32.xlu0 %v2240, %s2246
  %v2248 = vpop.permute.xlu0 %2247
  %v2249 = vlaneseq
  %v2250 = vshrl.u32 %v2249, 7
  %v2251 = vsub.s32 7, %v2250
  %v2252 = vrot.slane %v1941, %v2251
  %s2254 = sor.u32 256, 64
  %2255 = vbcast.lane.b32.xlu0 %v2252, %s2254
  %v2256 = vpop.permute.xlu0 %2255
  %s2258 = sor.u32 256, 72
  %2259 = vbcast.lane.b32.xlu0 %v2252, %s2258
  %v2260 = vpop.permute.xlu0 %2259
  %v2261 = vlaneseq
  %v2262 = vshrl.u32 %v2261, 7
  %v2263 = vsub.s32 0, %v2262
  %v2264 = vrot.slane %v2139, %v2263
  %v2265 = vlaneseq
  %v2266 = vshrl.u32 %v2265, 7
  %v2267 = vsub.s32 0, %v2266
  %v2268 = vrot.slane %v2153, %v2267
  %v2269 = vlaneseq
  %v2270 = vshrl.u32 %v2269, 7
  %v2271 = vsub.s32 0, %v2270
  %v2272 = vrot.slane %v2161, %v2271
  %v2273 = vlaneseq
  %v2274 = vshrl.u32 %v2273, 7
  %v2275 = vsub.s32 0, %v2274
  %v2276 = vrot.slane %v2163, %v2275
  %v2277 = vlaneseq
  %v2278 = vshrl.u32 %v2277, 7
  %v2279 = vsub.s32 0, %v2278
  %v2280 = vrot.slane %v2146, %v2279
  %v2281 = vlaneseq
  %v2282 = vshrl.u32 %v2281, 7
  %v2283 = vsub.s32 0, %v2282
  %v2284 = vrot.slane %v2160, %v2283
  %v2285 = vlaneseq
  %v2286 = vshrl.u32 %v2285, 7
  %v2287 = vsub.s32 0, %v2286
  %v2288 = vrot.slane %v2162, %v2287
  %v2289 = vlaneseq
  %v2290 = vshrl.u32 %v2289, 7
  %v2291 = vsub.s32 0, %v2290
  %v2292 = vrot.slane %v2164, %v2291
  %v2301 = vmul.f32 %v2264, %v2172
  %v2302 = vmul.f32 %v2264, %v2176
  %v2303 = vmul.f32 %v2268, %v2184
  %v2304 = vmul.f32 %v2268, %v2188
  %v2305 = vmul.f32 %v2272, %v2196
  %v2306 = vmul.f32 %v2272, %v2200
  %v2307 = vmul.f32 %v2276, %v2208
  %v2308 = vmul.f32 %v2276, %v2212
  %v2309 = vmul.f32 %v2280, %v2220
  %v2310 = vmul.f32 %v2280, %v2224
  %v2311 = vmul.f32 %v2284, %v2232
  %v2312 = vmul.f32 %v2284, %v2236
  %v2313 = vmul.f32 %v2288, %v2244
  %v2314 = vmul.f32 %v2288, %v2248
  %v2315 = vmul.f32 %v2292, %v2256
  %v2316 = vmul.f32 %v2292, %v2260
  %s2318 = sor.u32 256, 80
  %2319 = vbcast.lane.b32.xlu0 %v2168, %s2318
  %v2320 = vpop.permute.xlu0 %2319
  %s2322 = sor.u32 256, 88
  %2323 = vbcast.lane.b32.xlu0 %v2168, %s2322
  %v2324 = vpop.permute.xlu0 %2323
  %s2326 = sor.u32 256, 80
  %2327 = vbcast.lane.b32.xlu0 %v2180, %s2326
  %v2328 = vpop.permute.xlu0 %2327
  %s2330 = sor.u32 256, 88
  %2331 = vbcast.lane.b32.xlu0 %v2180, %s2330
  %v2332 = vpop.permute.xlu0 %2331
  %s2334 = sor.u32 256, 80
  %2335 = vbcast.lane.b32.xlu0 %v2192, %s2334
  %v2336 = vpop.permute.xlu0 %2335
  %s2338 = sor.u32 256, 88
  %2339 = vbcast.lane.b32.xlu0 %v2192, %s2338
  %v2340 = vpop.permute.xlu0 %2339
  %s2342 = sor.u32 256, 80
  %2343 = vbcast.lane.b32.xlu0 %v2204, %s2342
  %v2344 = vpop.permute.xlu0 %2343
  %s2346 = sor.u32 256, 88
  %2347 = vbcast.lane.b32.xlu0 %v2204, %s2346
  %v2348 = vpop.permute.xlu0 %2347
  %s2350 = sor.u32 256, 80
  %2351 = vbcast.lane.b32.xlu0 %v2216, %s2350
  %v2352 = vpop.permute.xlu0 %2351
  %s2354 = sor.u32 256, 88
  %2355 = vbcast.lane.b32.xlu0 %v2216, %s2354
  %v2356 = vpop.permute.xlu0 %2355
  %s2358 = sor.u32 256, 80
  %2359 = vbcast.lane.b32.xlu0 %v2228, %s2358
  %v2360 = vpop.permute.xlu0 %2359
  %s2362 = sor.u32 256, 88
  %2363 = vbcast.lane.b32.xlu0 %v2228, %s2362
  %v2364 = vpop.permute.xlu0 %2363
  %s2366 = sor.u32 256, 80
  %2367 = vbcast.lane.b32.xlu0 %v2240, %s2366
  %v2368 = vpop.permute.xlu0 %2367
  %s2370 = sor.u32 256, 88
  %2371 = vbcast.lane.b32.xlu0 %v2240, %s2370
  %v2372 = vpop.permute.xlu0 %2371
  %s2374 = sor.u32 256, 80
  %2375 = vbcast.lane.b32.xlu0 %v2252, %s2374
  %v2376 = vpop.permute.xlu0 %2375
  %s2378 = sor.u32 256, 88
  %2379 = vbcast.lane.b32.xlu0 %v2252, %s2378
  %v2380 = vpop.permute.xlu0 %2379
  %v2381 = vmul.f32 %v2084, 0.0
  %v2382 = vmul.f32 %v2086, 0.0
  %v2383 = vadd.f32 %v2381, %v2301
  %v2384 = vadd.f32 %v2382, %v2302
  %v2385 = vmul.f32 %v2383, %v2320
  %v2386 = vmul.f32 %v2384, %v2324
  %v2387 = vsel %vm375, %v2385, 0.0
  %v2388 = vsel %vm375, %v2386, 0.0
  %v2389 = vadd.f32 %v2387, %v2388
  %v2390 = vrot.slane %v2389, 4
  %v2391 = vadd.f32 %v2389, %v2390
  %v2392 = vrot.slane %v2391, 2
  %v2393 = vadd.f32 %v2391, %v2392
  %v2394 = vrot.slane %v2393, 1
  %v2395 = vadd.f32 %v2393, %v2394
  %v2396 = vmul.f32 %v2088, %v2383
  %v2397 = vmul.f32 %v2090, %v2384
  %v2398 = vadd.f32 %v2396, %v2303
  %v2399 = vadd.f32 %v2397, %v2304
  %v2400 = vmul.f32 %v2398, %v2328
  %v2401 = vmul.f32 %v2399, %v2332
  %v2402 = vsel %vm375, %v2400, 0.0
  %v2403 = vsel %vm375, %v2401, 0.0
  %v2404 = vadd.f32 %v2402, %v2403
  %v2405 = vrot.slane %v2404, 4
  %v2406 = vadd.f32 %v2404, %v2405
  %v2407 = vrot.slane %v2406, 2
  %v2408 = vadd.f32 %v2406, %v2407
  %v2409 = vrot.slane %v2408, 1
  %v2410 = vadd.f32 %v2408, %v2409
  %v2411 = vmul.f32 %v2092, %v2398
  %v2412 = vmul.f32 %v2094, %v2399
  %v2413 = vadd.f32 %v2411, %v2305
  %v2414 = vadd.f32 %v2412, %v2306
  %v2415 = vmul.f32 %v2413, %v2336
  %v2416 = vmul.f32 %v2414, %v2340
  %v2417 = vsel %vm375, %v2415, 0.0
  %v2418 = vsel %vm375, %v2416, 0.0
  %v2419 = vadd.f32 %v2417, %v2418
  %v2420 = vrot.slane %v2419, 4
  %v2421 = vadd.f32 %v2419, %v2420
  %v2422 = vrot.slane %v2421, 2
  %v2423 = vadd.f32 %v2421, %v2422
  %v2424 = vrot.slane %v2423, 1
  %v2425 = vadd.f32 %v2423, %v2424
  %v2426 = vmul.f32 %v2096, %v2413
  %v2427 = vmul.f32 %v2098, %v2414
  %v2428 = vadd.f32 %v2426, %v2307
  %v2429 = vadd.f32 %v2427, %v2308
  %v2430 = vmul.f32 %v2428, %v2344
  %v2431 = vmul.f32 %v2429, %v2348
  %v2432 = vsel %vm375, %v2430, 0.0
  %v2433 = vsel %vm375, %v2431, 0.0
  %v2434 = vadd.f32 %v2432, %v2433
  %v2435 = vrot.slane %v2434, 4
  %v2436 = vadd.f32 %v2434, %v2435
  %v2437 = vrot.slane %v2436, 2
  %v2438 = vadd.f32 %v2436, %v2437
  %v2439 = vrot.slane %v2438, 1
  %v2440 = vadd.f32 %v2438, %v2439
  %v2441 = vmul.f32 %v2100, %v2428
  %v2442 = vmul.f32 %v2102, %v2429
  %v2443 = vadd.f32 %v2441, %v2309
  %v2444 = vadd.f32 %v2442, %v2310
  %v2445 = vmul.f32 %v2443, %v2352
  %v2446 = vmul.f32 %v2444, %v2356
  %v2447 = vsel %vm375, %v2445, 0.0
  %v2448 = vsel %vm375, %v2446, 0.0
  %v2449 = vadd.f32 %v2447, %v2448
  %v2450 = vrot.slane %v2449, 4
  %v2451 = vadd.f32 %v2449, %v2450
  %v2452 = vrot.slane %v2451, 2
  %v2453 = vadd.f32 %v2451, %v2452
  %v2454 = vrot.slane %v2453, 1
  %v2455 = vadd.f32 %v2453, %v2454
  %v2456 = vmul.f32 %v2104, %v2443
  %v2457 = vmul.f32 %v2106, %v2444
  %v2458 = vadd.f32 %v2456, %v2311
  %v2459 = vadd.f32 %v2457, %v2312
  %v2460 = vmul.f32 %v2458, %v2360
  %v2461 = vmul.f32 %v2459, %v2364
  %v2462 = vsel %vm375, %v2460, 0.0
  %v2463 = vsel %vm375, %v2461, 0.0
  %v2464 = vadd.f32 %v2462, %v2463
  %v2465 = vrot.slane %v2464, 4
  %v2466 = vadd.f32 %v2464, %v2465
  %v2467 = vrot.slane %v2466, 2
  %v2468 = vadd.f32 %v2466, %v2467
  %v2469 = vrot.slane %v2468, 1
  %v2470 = vadd.f32 %v2468, %v2469
  %v2471 = vmul.f32 %v2108, %v2458
  %v2472 = vmul.f32 %v2110, %v2459
  %v2473 = vadd.f32 %v2471, %v2313
  %v2474 = vadd.f32 %v2472, %v2314
  %v2475 = vmul.f32 %v2473, %v2368
  %v2476 = vmul.f32 %v2474, %v2372
  %v2477 = vsel %vm375, %v2475, 0.0
  %v2478 = vsel %vm375, %v2476, 0.0
  %v2479 = vadd.f32 %v2477, %v2478
  %v2480 = vrot.slane %v2479, 4
  %v2481 = vadd.f32 %v2479, %v2480
  %v2482 = vrot.slane %v2481, 2
  %v2483 = vadd.f32 %v2481, %v2482
  %v2484 = vrot.slane %v2483, 1
  %v2485 = vadd.f32 %v2483, %v2484
  %v2486 = vmul.f32 %v2112, %v2473
  %v2487 = vmul.f32 %v2114, %v2474
  %v2488 = vadd.f32 %v2486, %v2315
  %v2489 = vadd.f32 %v2487, %v2316
  %v2490 = vmul.f32 %v2488, %v2376
  %v2491 = vmul.f32 %v2489, %v2380
  %v2492 = vsel %vm375, %v2490, 0.0
  %v2493 = vsel %vm375, %v2491, 0.0
  %v2494 = vadd.f32 %v2492, %v2493
  %v2495 = vrot.slane %v2494, 4
  %v2496 = vadd.f32 %v2494, %v2495
  %v2497 = vrot.slane %v2496, 2
  %v2498 = vadd.f32 %v2496, %v2497
  %v2499 = vrot.slane %v2498, 1
  %v2500 = vadd.f32 %v2498, %v2499
  %v2501 = vsel %vm289, %v2395, %v2410
  %v2502 = vsel %vm308, %v2501, %v2425
  %v2503 = vsel %vm327, %v2502, %v2440
  %v2504 = vsel %vm64, %v2503, %v2455
  %v2505 = vsel %vm1012, %v2504, %v2470
  %v2506 = vsel %vm1014, %v2505, %v2485
  %v2507 = vsel %vm1016, %v2506, %v2500
  %v2509 = vcombine.high %v1971, %v1971
  %v2511 = vunpack.c.l.s4 1966171168
  %v2512 = vunpack.c.0.s8 %v2511
  %v2513 = vlaneseq
  %v2514 = vshrl.u32 %v2513, 7
  %v2515 = vsub.s32 %v2512, %v2514
  %v2516 = vrot.slane %v1971, %v2515
  %v2518 = vunpack.c.l.s4 1966171168
  %v2519 = vunpack.c.0.s8 %v2518
  %v2520 = vlaneseq
  %v2521 = vshrl.u32 %v2520, 7
  %v2522 = vsub.s32 %v2519, %v2521
  %v2523 = vrot.slane %v2509, %v2522
  %v2524 = vcombine.high %v2516, %v2516
  %v2525 = vcombine.high %v2523, %v2523
  %v2527 = vunpack.c.l.s4 1966171168
  %v2528 = vunpack.c.0.s8 %v2527
  %v2529 = vlaneseq
  %v2530 = vshrl.u32 %v2529, 7
  %v2531 = vsub.s32 %v2528, %v2530
  %v2532 = vrot.slane %v2516, %v2531
  %v2534 = vunpack.c.l.s4 1966171168
  %v2535 = vunpack.c.0.s8 %v2534
  %v2536 = vlaneseq
  %v2537 = vshrl.u32 %v2536, 7
  %v2538 = vsub.s32 %v2535, %v2537
  %v2539 = vrot.slane %v2523, %v2538
  %v2541 = vunpack.c.l.s4 1966171168
  %v2542 = vunpack.c.0.s8 %v2541
  %v2543 = vlaneseq
  %v2544 = vshrl.u32 %v2543, 7
  %v2545 = vsub.s32 %v2542, %v2544
  %v2546 = vrot.slane %v2524, %v2545
  %v2548 = vunpack.c.l.s4 1966171168
  %v2549 = vunpack.c.0.s8 %v2548
  %v2550 = vlaneseq
  %v2551 = vshrl.u32 %v2550, 7
  %v2552 = vsub.s32 %v2549, %v2551
  %v2553 = vrot.slane %v2525, %v2552
  %v2554 = vcombine.high %v2532, %v2532
  %v2555 = vcombine.high %v2539, %v2539
  %v2556 = vcombine.high %v2546, %v2546
  %v2557 = vcombine.high %v2553, %v2553
  %v2558 = vlaneseq
  %v2559 = vshrl.u32 %v2558, 7
  %v2560 = vsub.s32 0, %v2559
  %v2561 = vrot.slane %v2532, %v2560
  %v2562 = vlaneseq
  %v2563 = vshrl.u32 %v2562, 7
  %v2564 = vsub.s32 0, %v2563
  %v2565 = vrot.slane %v2546, %v2564
  %v2566 = vlaneseq
  %v2567 = vshrl.u32 %v2566, 7
  %v2568 = vsub.s32 0, %v2567
  %v2569 = vrot.slane %v2554, %v2568
  %v2570 = vlaneseq
  %v2571 = vshrl.u32 %v2570, 7
  %v2572 = vsub.s32 0, %v2571
  %v2573 = vrot.slane %v2556, %v2572
  %v2574 = vlaneseq
  %v2575 = vshrl.u32 %v2574, 7
  %v2576 = vsub.s32 0, %v2575
  %v2577 = vrot.slane %v2539, %v2576
  %v2578 = vlaneseq
  %v2579 = vshrl.u32 %v2578, 7
  %v2580 = vsub.s32 0, %v2579
  %v2581 = vrot.slane %v2553, %v2580
  %v2582 = vlaneseq
  %v2583 = vshrl.u32 %v2582, 7
  %v2584 = vsub.s32 0, %v2583
  %v2585 = vrot.slane %v2555, %v2584
  %v2586 = vlaneseq
  %v2587 = vshrl.u32 %v2586, 7
  %v2588 = vsub.s32 0, %v2587
  %v2589 = vrot.slane %v2557, %v2588
  %v2598 = vmul.f32 %v2561, %v1973
  %v2599 = vmul.f32 %v2561, %v1974
  %v2600 = vmul.f32 %v2565, %v1973
  %v2601 = vmul.f32 %v2565, %v1974
  %v2602 = vmul.f32 %v2569, %v1973
  %v2603 = vmul.f32 %v2569, %v1974
  %v2604 = vmul.f32 %v2573, %v1973
  %v2605 = vmul.f32 %v2573, %v1974
  %v2606 = vmul.f32 %v2577, %v1973
  %v2607 = vmul.f32 %v2577, %v1974
  %v2608 = vmul.f32 %v2581, %v1973
  %v2609 = vmul.f32 %v2581, %v1974
  %v2610 = vmul.f32 %v2585, %v1973
  %v2611 = vmul.f32 %v2585, %v1974
  %v2612 = vmul.f32 %v2589, %v1973
  %v2613 = vmul.f32 %v2589, %v1974
  %v2614 = vmul.f32 %v2598, 1.442695
  %v2615 = vpow.pop %v2614
  %v2616 = vmul.f32 %v2599, 1.442695
  %v2617 = vpow.pop %v2616
  %v2618 = vmul.f32 %v2600, 1.442695
  %v2619 = vpow.pop %v2618
  %v2620 = vmul.f32 %v2601, 1.442695
  %v2621 = vpow.pop %v2620
  %v2622 = vmul.f32 %v2602, 1.442695
  %v2623 = vpow.pop %v2622
  %v2624 = vmul.f32 %v2603, 1.442695
  %v2625 = vpow.pop %v2624
  %v2626 = vmul.f32 %v2604, 1.442695
  %v2627 = vpow.pop %v2626
  %v2628 = vmul.f32 %v2605, 1.442695
  %v2629 = vpow.pop %v2628
  %v2630 = vmul.f32 %v2606, 1.442695
  %v2631 = vpow.pop %v2630
  %v2632 = vmul.f32 %v2607, 1.442695
  %v2633 = vpow.pop %v2632
  %v2634 = vmul.f32 %v2608, 1.442695
  %v2635 = vpow.pop %v2634
  %v2636 = vmul.f32 %v2609, 1.442695
  %v2637 = vpow.pop %v2636
  %v2638 = vmul.f32 %v2610, 1.442695
  %v2639 = vpow.pop %v2638
  %v2640 = vmul.f32 %v2611, 1.442695
  %v2641 = vpow.pop %v2640
  %v2642 = vmul.f32 %v2612, 1.442695
  %v2643 = vpow.pop %v2642
  %v2644 = vmul.f32 %v2613, 1.442695
  %v2645 = vpow.pop %v2644
  %v2647 = vcombine.high %v1976, %v1976
  %v2649 = vunpack.c.l.s4 1966171168
  %v2650 = vunpack.c.0.s8 %v2649
  %v2651 = vlaneseq
  %v2652 = vshrl.u32 %v2651, 7
  %v2653 = vsub.s32 %v2650, %v2652
  %v2654 = vrot.slane %v1976, %v2653
  %v2656 = vunpack.c.l.s4 1966171168
  %v2657 = vunpack.c.0.s8 %v2656
  %v2658 = vlaneseq
  %v2659 = vshrl.u32 %v2658, 7
  %v2660 = vsub.s32 %v2657, %v2659
  %v2661 = vrot.slane %v2647, %v2660
  %v2662 = vcombine.high %v2654, %v2654
  %v2663 = vcombine.high %v2661, %v2661
  %v2665 = vunpack.c.l.s4 1966171168
  %v2666 = vunpack.c.0.s8 %v2665
  %v2667 = vlaneseq
  %v2668 = vshrl.u32 %v2667, 7
  %v2669 = vsub.s32 %v2666, %v2668
  %v2670 = vrot.slane %v2654, %v2669
  %v2672 = vunpack.c.l.s4 1966171168
  %v2673 = vunpack.c.0.s8 %v2672
  %v2674 = vlaneseq
  %v2675 = vshrl.u32 %v2674, 7
  %v2676 = vsub.s32 %v2673, %v2675
  %v2677 = vrot.slane %v2661, %v2676
  %v2679 = vunpack.c.l.s4 1966171168
  %v2680 = vunpack.c.0.s8 %v2679
  %v2681 = vlaneseq
  %v2682 = vshrl.u32 %v2681, 7
  %v2683 = vsub.s32 %v2680, %v2682
  %v2684 = vrot.slane %v2662, %v2683
  %v2686 = vunpack.c.l.s4 1966171168
  %v2687 = vunpack.c.0.s8 %v2686
  %v2688 = vlaneseq
  %v2689 = vshrl.u32 %v2688, 7
  %v2690 = vsub.s32 %v2687, %v2689
  %v2691 = vrot.slane %v2663, %v2690
  %v2692 = vcombine.high %v2670, %v2670
  %v2693 = vcombine.high %v2677, %v2677
  %v2694 = vcombine.high %v2684, %v2684
  %v2695 = vcombine.high %v2691, %v2691
  %v2696 = vlaneseq
  %v2697 = vshrl.u32 %v2696, 7
  %v2698 = vsub.s32 0, %v2697
  %v2699 = vrot.slane %v1946, %v2698
  %s2701 = sor.u32 256, 64
  %2702 = vbcast.lane.b32.xlu0 %v2699, %s2701
  %v2703 = vpop.permute.xlu0 %2702
  %s2705 = sor.u32 256, 72
  %2706 = vbcast.lane.b32.xlu0 %v2699, %s2705
  %v2707 = vpop.permute.xlu0 %2706
  %v2708 = vlaneseq
  %v2709 = vshrl.u32 %v2708, 7
  %v2710 = vsub.s32 1, %v2709
  %v2711 = vrot.slane %v1946, %v2710
  %s2713 = sor.u32 256, 64
  %2714 = vbcast.lane.b32.xlu0 %v2711, %s2713
  %v2715 = vpop.permute.xlu0 %2714
  %s2717 = sor.u32 256, 72
  %2718 = vbcast.lane.b32.xlu0 %v2711, %s2717
  %v2719 = vpop.permute.xlu0 %2718
  %v2720 = vlaneseq
  %v2721 = vshrl.u32 %v2720, 7
  %v2722 = vsub.s32 2, %v2721
  %v2723 = vrot.slane %v1946, %v2722
  %s2725 = sor.u32 256, 64
  %2726 = vbcast.lane.b32.xlu0 %v2723, %s2725
  %v2727 = vpop.permute.xlu0 %2726
  %s2729 = sor.u32 256, 72
  %2730 = vbcast.lane.b32.xlu0 %v2723, %s2729
  %v2731 = vpop.permute.xlu0 %2730
  %v2732 = vlaneseq
  %v2733 = vshrl.u32 %v2732, 7
  %v2734 = vsub.s32 3, %v2733
  %v2735 = vrot.slane %v1946, %v2734
  %s2737 = sor.u32 256, 64
  %2738 = vbcast.lane.b32.xlu0 %v2735, %s2737
  %v2739 = vpop.permute.xlu0 %2738
  %s2741 = sor.u32 256, 72
  %2742 = vbcast.lane.b32.xlu0 %v2735, %s2741
  %v2743 = vpop.permute.xlu0 %2742
  %v2744 = vlaneseq
  %v2745 = vshrl.u32 %v2744, 7
  %v2746 = vsub.s32 4, %v2745
  %v2747 = vrot.slane %v1946, %v2746
  %s2749 = sor.u32 256, 64
  %2750 = vbcast.lane.b32.xlu0 %v2747, %s2749
  %v2751 = vpop.permute.xlu0 %2750
  %s2753 = sor.u32 256, 72
  %2754 = vbcast.lane.b32.xlu0 %v2747, %s2753
  %v2755 = vpop.permute.xlu0 %2754
  %v2756 = vlaneseq
  %v2757 = vshrl.u32 %v2756, 7
  %v2758 = vsub.s32 5, %v2757
  %v2759 = vrot.slane %v1946, %v2758
  %s2761 = sor.u32 256, 64
  %2762 = vbcast.lane.b32.xlu0 %v2759, %s2761
  %v2763 = vpop.permute.xlu0 %2762
  %s2765 = sor.u32 256, 72
  %2766 = vbcast.lane.b32.xlu0 %v2759, %s2765
  %v2767 = vpop.permute.xlu0 %2766
  %v2768 = vlaneseq
  %v2769 = vshrl.u32 %v2768, 7
  %v2770 = vsub.s32 6, %v2769
  %v2771 = vrot.slane %v1946, %v2770
  %s2773 = sor.u32 256, 64
  %2774 = vbcast.lane.b32.xlu0 %v2771, %s2773
  %v2775 = vpop.permute.xlu0 %2774
  %s2777 = sor.u32 256, 72
  %2778 = vbcast.lane.b32.xlu0 %v2771, %s2777
  %v2779 = vpop.permute.xlu0 %2778
  %v2780 = vlaneseq
  %v2781 = vshrl.u32 %v2780, 7
  %v2782 = vsub.s32 7, %v2781
  %v2783 = vrot.slane %v1946, %v2782
  %s2785 = sor.u32 256, 64
  %2786 = vbcast.lane.b32.xlu0 %v2783, %s2785
  %v2787 = vpop.permute.xlu0 %2786
  %s2789 = sor.u32 256, 72
  %2790 = vbcast.lane.b32.xlu0 %v2783, %s2789
  %v2791 = vpop.permute.xlu0 %2790
  %v2792 = vlaneseq
  %v2793 = vshrl.u32 %v2792, 7
  %v2794 = vsub.s32 0, %v2793
  %v2795 = vrot.slane %v2670, %v2794
  %v2796 = vlaneseq
  %v2797 = vshrl.u32 %v2796, 7
  %v2798 = vsub.s32 0, %v2797
  %v2799 = vrot.slane %v2684, %v2798
  %v2800 = vlaneseq
  %v2801 = vshrl.u32 %v2800, 7
  %v2802 = vsub.s32 0, %v2801
  %v2803 = vrot.slane %v2692, %v2802
  %v2804 = vlaneseq
  %v2805 = vshrl.u32 %v2804, 7
  %v2806 = vsub.s32 0, %v2805
  %v2807 = vrot.slane %v2694, %v2806
  %v2808 = vlaneseq
  %v2809 = vshrl.u32 %v2808, 7
  %v2810 = vsub.s32 0, %v2809
  %v2811 = vrot.slane %v2677, %v2810
  %v2812 = vlaneseq
  %v2813 = vshrl.u32 %v2812, 7
  %v2814 = vsub.s32 0, %v2813
  %v2815 = vrot.slane %v2691, %v2814
  %v2816 = vlaneseq
  %v2817 = vshrl.u32 %v2816, 7
  %v2818 = vsub.s32 0, %v2817
  %v2819 = vrot.slane %v2693, %v2818
  %v2820 = vlaneseq
  %v2821 = vshrl.u32 %v2820, 7
  %v2822 = vsub.s32 0, %v2821
  %v2823 = vrot.slane %v2695, %v2822
  %v2832 = vmul.f32 %v2795, %v2703
  %v2833 = vmul.f32 %v2795, %v2707
  %v2834 = vmul.f32 %v2799, %v2715
  %v2835 = vmul.f32 %v2799, %v2719
  %v2836 = vmul.f32 %v2803, %v2727
  %v2837 = vmul.f32 %v2803, %v2731
  %v2838 = vmul.f32 %v2807, %v2739
  %v2839 = vmul.f32 %v2807, %v2743
  %v2840 = vmul.f32 %v2811, %v2751
  %v2841 = vmul.f32 %v2811, %v2755
  %v2842 = vmul.f32 %v2815, %v2763
  %v2843 = vmul.f32 %v2815, %v2767
  %v2844 = vmul.f32 %v2819, %v2775
  %v2845 = vmul.f32 %v2819, %v2779
  %v2846 = vmul.f32 %v2823, %v2787
  %v2847 = vmul.f32 %v2823, %v2791
  %s2849 = sor.u32 256, 80
  %2850 = vbcast.lane.b32.xlu0 %v2699, %s2849
  %v2851 = vpop.permute.xlu0 %2850
  %s2853 = sor.u32 256, 88
  %2854 = vbcast.lane.b32.xlu0 %v2699, %s2853
  %v2855 = vpop.permute.xlu0 %2854
  %s2857 = sor.u32 256, 80
  %2858 = vbcast.lane.b32.xlu0 %v2711, %s2857
  %v2859 = vpop.permute.xlu0 %2858
  %s2861 = sor.u32 256, 88
  %2862 = vbcast.lane.b32.xlu0 %v2711, %s2861
  %v2863 = vpop.permute.xlu0 %2862
  %s2865 = sor.u32 256, 80
  %2866 = vbcast.lane.b32.xlu0 %v2723, %s2865
  %v2867 = vpop.permute.xlu0 %2866
  %s2869 = sor.u32 256, 88
  %2870 = vbcast.lane.b32.xlu0 %v2723, %s2869
  %v2871 = vpop.permute.xlu0 %2870
  %s2873 = sor.u32 256, 80
  %2874 = vbcast.lane.b32.xlu0 %v2735, %s2873
  %v2875 = vpop.permute.xlu0 %2874
  %s2877 = sor.u32 256, 88
  %2878 = vbcast.lane.b32.xlu0 %v2735, %s2877
  %v2879 = vpop.permute.xlu0 %2878
  %s2881 = sor.u32 256, 80
  %2882 = vbcast.lane.b32.xlu0 %v2747, %s2881
  %v2883 = vpop.permute.xlu0 %2882
  %s2885 = sor.u32 256, 88
  %2886 = vbcast.lane.b32.xlu0 %v2747, %s2885
  %v2887 = vpop.permute.xlu0 %2886
  %s2889 = sor.u32 256, 80
  %2890 = vbcast.lane.b32.xlu0 %v2759, %s2889
  %v2891 = vpop.permute.xlu0 %2890
  %s2893 = sor.u32 256, 88
  %2894 = vbcast.lane.b32.xlu0 %v2759, %s2893
  %v2895 = vpop.permute.xlu0 %2894
  %s2897 = sor.u32 256, 80
  %2898 = vbcast.lane.b32.xlu0 %v2771, %s2897
  %v2899 = vpop.permute.xlu0 %2898
  %s2901 = sor.u32 256, 88
  %2902 = vbcast.lane.b32.xlu0 %v2771, %s2901
  %v2903 = vpop.permute.xlu0 %2902
  %s2905 = sor.u32 256, 80
  %2906 = vbcast.lane.b32.xlu0 %v2783, %s2905
  %v2907 = vpop.permute.xlu0 %2906
  %s2909 = sor.u32 256, 88
  %2910 = vbcast.lane.b32.xlu0 %v2783, %s2909
  %v2911 = vpop.permute.xlu0 %2910
  %v2912 = vmul.f32 %v2615, 0.0
  %v2913 = vmul.f32 %v2617, 0.0
  %v2914 = vadd.f32 %v2912, %v2832
  %v2915 = vadd.f32 %v2913, %v2833
  %v2916 = vmul.f32 %v2914, %v2851
  %v2917 = vmul.f32 %v2915, %v2855
  %v2918 = vsel %vm375, %v2916, 0.0
  %v2919 = vsel %vm375, %v2917, 0.0
  %v2920 = vadd.f32 %v2918, %v2919
  %v2921 = vrot.slane %v2920, 4
  %v2922 = vadd.f32 %v2920, %v2921
  %v2923 = vrot.slane %v2922, 2
  %v2924 = vadd.f32 %v2922, %v2923
  %v2925 = vrot.slane %v2924, 1
  %v2926 = vadd.f32 %v2924, %v2925
  %v2927 = vmul.f32 %v2619, %v2914
  %v2928 = vmul.f32 %v2621, %v2915
  %v2929 = vadd.f32 %v2927, %v2834
  %v2930 = vadd.f32 %v2928, %v2835
  %v2931 = vmul.f32 %v2929, %v2859
  %v2932 = vmul.f32 %v2930, %v2863
  %v2933 = vsel %vm375, %v2931, 0.0
  %v2934 = vsel %vm375, %v2932, 0.0
  %v2935 = vadd.f32 %v2933, %v2934
  %v2936 = vrot.slane %v2935, 4
  %v2937 = vadd.f32 %v2935, %v2936
  %v2938 = vrot.slane %v2937, 2
  %v2939 = vadd.f32 %v2937, %v2938
  %v2940 = vrot.slane %v2939, 1
  %v2941 = vadd.f32 %v2939, %v2940
  %v2942 = vmul.f32 %v2623, %v2929
  %v2943 = vmul.f32 %v2625, %v2930
  %v2944 = vadd.f32 %v2942, %v2836
  %v2945 = vadd.f32 %v2943, %v2837
  %v2946 = vmul.f32 %v2944, %v2867
  %v2947 = vmul.f32 %v2945, %v2871
  %v2948 = vsel %vm375, %v2946, 0.0
  %v2949 = vsel %vm375, %v2947, 0.0
  %v2950 = vadd.f32 %v2948, %v2949
  %v2951 = vrot.slane %v2950, 4
  %v2952 = vadd.f32 %v2950, %v2951
  %v2953 = vrot.slane %v2952, 2
  %v2954 = vadd.f32 %v2952, %v2953
  %v2955 = vrot.slane %v2954, 1
  %v2956 = vadd.f32 %v2954, %v2955
  %v2957 = vmul.f32 %v2627, %v2944
  %v2958 = vmul.f32 %v2629, %v2945
  %v2959 = vadd.f32 %v2957, %v2838
  %v2960 = vadd.f32 %v2958, %v2839
  %v2961 = vmul.f32 %v2959, %v2875
  %v2962 = vmul.f32 %v2960, %v2879
  %v2963 = vsel %vm375, %v2961, 0.0
  %v2964 = vsel %vm375, %v2962, 0.0
  %v2965 = vadd.f32 %v2963, %v2964
  %v2966 = vrot.slane %v2965, 4
  %v2967 = vadd.f32 %v2965, %v2966
  %v2968 = vrot.slane %v2967, 2
  %v2969 = vadd.f32 %v2967, %v2968
  %v2970 = vrot.slane %v2969, 1
  %v2971 = vadd.f32 %v2969, %v2970
  %v2972 = vmul.f32 %v2631, %v2959
  %v2973 = vmul.f32 %v2633, %v2960
  %v2974 = vadd.f32 %v2972, %v2840
  %v2975 = vadd.f32 %v2973, %v2841
  %v2976 = vmul.f32 %v2974, %v2883
  %v2977 = vmul.f32 %v2975, %v2887
  %v2978 = vsel %vm375, %v2976, 0.0
  %v2979 = vsel %vm375, %v2977, 0.0
  %v2980 = vadd.f32 %v2978, %v2979
  %v2981 = vrot.slane %v2980, 4
  %v2982 = vadd.f32 %v2980, %v2981
  %v2983 = vrot.slane %v2982, 2
  %v2984 = vadd.f32 %v2982, %v2983
  %v2985 = vrot.slane %v2984, 1
  %v2986 = vadd.f32 %v2984, %v2985
  %v2987 = vmul.f32 %v2635, %v2974
  %v2988 = vmul.f32 %v2637, %v2975
  %v2989 = vadd.f32 %v2987, %v2842
  %v2990 = vadd.f32 %v2988, %v2843
  %v2991 = vmul.f32 %v2989, %v2891
  %v2992 = vmul.f32 %v2990, %v2895
  %v2993 = vsel %vm375, %v2991, 0.0
  %v2994 = vsel %vm375, %v2992, 0.0
  %v2995 = vadd.f32 %v2993, %v2994
  %v2996 = vrot.slane %v2995, 4
  %v2997 = vadd.f32 %v2995, %v2996
  %v2998 = vrot.slane %v2997, 2
  %v2999 = vadd.f32 %v2997, %v2998
  %v3000 = vrot.slane %v2999, 1
  %v3001 = vadd.f32 %v2999, %v3000
  %v3002 = vmul.f32 %v2639, %v2989
  %v3003 = vmul.f32 %v2641, %v2990
  %v3004 = vadd.f32 %v3002, %v2844
  %v3005 = vadd.f32 %v3003, %v2845
  %v3006 = vmul.f32 %v3004, %v2899
  %v3007 = vmul.f32 %v3005, %v2903
  %v3008 = vsel %vm375, %v3006, 0.0
  %v3009 = vsel %vm375, %v3007, 0.0
  %v3010 = vadd.f32 %v3008, %v3009
  %v3011 = vrot.slane %v3010, 4
  %v3012 = vadd.f32 %v3010, %v3011
  %v3013 = vrot.slane %v3012, 2
  %v3014 = vadd.f32 %v3012, %v3013
  %v3015 = vrot.slane %v3014, 1
  %v3016 = vadd.f32 %v3014, %v3015
  %v3017 = vmul.f32 %v2643, %v3004
  %v3018 = vmul.f32 %v2645, %v3005
  %v3019 = vadd.f32 %v3017, %v2846
  %v3020 = vadd.f32 %v3018, %v2847
  %v3021 = vmul.f32 %v3019, %v2907
  %v3022 = vmul.f32 %v3020, %v2911
  %v3023 = vsel %vm375, %v3021, 0.0
  %v3024 = vsel %vm375, %v3022, 0.0
  %v3025 = vadd.f32 %v3023, %v3024
  %v3026 = vrot.slane %v3025, 4
  %v3027 = vadd.f32 %v3025, %v3026
  %v3028 = vrot.slane %v3027, 2
  %v3029 = vadd.f32 %v3027, %v3028
  %v3030 = vrot.slane %v3029, 1
  %v3031 = vadd.f32 %v3029, %v3030
  %v3032 = vsel %vm289, %v2926, %v2941
  %v3033 = vsel %vm308, %v3032, %v2956
  %v3034 = vsel %vm327, %v3033, %v2971
  %v3035 = vsel %vm64, %v3034, %v2986
  %v3036 = vsel %vm1012, %v3035, %v3001
  %v3037 = vsel %vm1014, %v3036, %v3016
  %v3038 = vsel %vm1016, %v3037, %v3031
  %v3039 = vld [vmem:[%s10 + $0x1] sm:$0x1]
  %v3040 = vlaneseq
  %v3041 = vshrl.u32 %v3040, 7
  %v3042 = vsub.s32 0, %v3041
  %v3043 = vrot.slane %v3039, %v3042
  %v3044 = vmul.f32 %v3043, %v1857
  %v3045 = vmul.f32 %v3043, %v1858
  %v3046 = vadd.f32 %v2507, %v3044
  %v3047 = vadd.f32 %v3038, %v3045
  %v3048 = vsub.f32 0.0, %v1772
  %v3049 = vsub.f32 0.0, %v1777
  %v3050 = vmul.f32 %v3048, 1.442695
  %v3051 = vpow.pop %v3050
  %v3052 = vmul.f32 %v3049, 1.442695
  %v3053 = vpow.pop %v3052
  %v3054 = vadd.f32 %v3051, 1.0
  %v3055 = vadd.f32 %v3053, 1.0
  %v3056 = vrcp.pop %v3054
  %v3057 = vmul.f32 1.0, %v3056
  %v3058 = vrcp.pop %v3055
  %v3059 = vmul.f32 1.0, %v3058
  %v3060 = vmul.f32 %v1772, %v3057
  %v3061 = vmul.f32 %v1777, %v3059
  %3064 = vrot.lane.b32.xlu0 %v3060, 64
  %v3065 = vpop.permute.xlu0 %3064
  %3066 = vrot.lane.b32.xlu0 %v3061, 64
  %v3067 = vpop.permute.xlu0 %3066
  %v3070 = vmul.f32 %v3046, %v3065
  %v3071 = vmul.f32 %v3047, %v3067
  %s3072 = scalar_lea.vmem %s11, 64
  %v3073 = vld [vmem:[%s3072] sm:$0xff]
  %v3074 = vld [vmem:[%s3072 + $0x8] sm:$0xff]
  %v3075 = vld [vmem:[%s3072 + $0x10] sm:$0xff]
  %v3076 = vld [vmem:[%s3072 + $0x18] sm:$0xff]
  %v3077 = vld [vmem:[%s3072 + $0x20] sm:$0xff]
  %v3078 = vld [vmem:[%s3072 + $0x28] sm:$0xff]
  %v3079 = vld [vmem:[%s3072 + $0x30] sm:$0xff]
  %v3080 = vld [vmem:[%s3072 + $0x38] sm:$0xff]
  %v3082 = vsel %vm375, %v3070, 0
  %v3085 = vsel %vm375, %v3071, 0
  %3087 = vmatprep.subr.mxu0 0.0
  %3088 = vmatpush1.msra.mxu0 %v3073
  %3089 = vmatprep.subr.mxu0 0.0
  %3090 = vmatpush1.msra.mxu0 %v3074
  %3091 = vmatprep.subr.mxu0 0.0
  %3092 = vmatpush1.msra.mxu0 %v3075
  %3093 = vmatprep.subr.mxu0 0.0
  %3094 = vmatpush1.msra.mxu0 %v3076
  %3095 = vmatprep.subr.mxu0 0.0
  %3096 = vmatpush1.msra.mxu0 %v3077
  %3097 = vmatprep.subr.mxu0 0.0
  %3098 = vmatpush1.msra.mxu0 %v3078
  %3099 = vmatprep.subr.mxu0 0.0
  %3100 = vmatpush1.msra.mxu0 %v3079
  %3101 = vmatprep.subr.mxu0 0.0
  %3102 = vmatpush1.msra.mxu0 %v3080
  %3103 = vmatprep.subr.mxu0 0.0
  %3104 = vmatpush1.msra.mxu0 0.0
  %3105 = vmatprep.subr.mxu0 0.0
  %3106 = vmatpush1.msra.mxu0 0.0
  %3107 = vmatprep.subr.mxu0 0.0
  %3108 = vmatpush1.msra.mxu0 0.0
  %3109 = vmatprep.subr.mxu0 0.0
  %3110 = vmatpush1.msra.mxu0 0.0
  %3111 = vmatprep.subr.mxu0 0.0
  %3112 = vmatpush1.msra.mxu0 0.0
  %3113 = vmatprep.subr.mxu0 0.0
  %3114 = vmatpush1.msra.mxu0 0.0
  %3115 = vmatprep.subr.mxu0 0.0
  %3116 = vmatpush1.msra.mxu0 0.0
  %3117 = vmatprep.subr.mxu0 0.0
  %3118 = vmatpush1.msra.mxu0 0.0
  %3119 = vmatprep.subr.mxu0 0.0
  %3120 = vmatpush1.msra.mxu0 0.0
  %3121 = vmatprep.subr.mxu0 0.0
  %3122 = vmatpush1.msra.mxu0 0.0
  %3123 = vmatprep.subr.mxu0 0.0
  %3124 = vmatpush1.msra.mxu0 0.0
  %3125 = vmatprep.subr.mxu0 0.0
  %3126 = vmatpush1.msra.mxu0 0.0
  %3127 = vmatprep.subr.mxu0 0.0
  %3128 = vmatpush1.msra.mxu0 0.0
  %3129 = vmatprep.subr.mxu0 0.0
  %3130 = vmatpush1.msra.mxu0 0.0
  %3131 = vmatprep.subr.mxu0 0.0
  %3132 = vmatpush1.msra.mxu0 0.0
  %3133 = vmatprep.subr.mxu0 0.0
  %3134 = vmatpush1.msra.mxu0 0.0
  %3135 = vmatprep.subr.mxu0 0.0
  %3136 = vmatpush1.msra.mxu0 0.0
  %3137 = vmatprep.subr.mxu0 0.0
  %3138 = vmatpush1.msra.mxu0 0.0
  %3139 = vmatprep.subr.mxu0 0.0
  %3140 = vmatpush1.msra.mxu0 0.0
  %3141 = vmatprep.subr.mxu0 0.0
  %3142 = vmatpush1.msra.mxu0 0.0
  %3143 = vmatprep.subr.mxu0 0.0
  %3144 = vmatpush1.msra.mxu0 0.0
  %3145 = vmatprep.subr.mxu0 0.0
  %3146 = vmatpush1.msra.mxu0 0.0
  %3147 = vmatprep.subr.mxu0 0.0
  %3148 = vmatpush1.msra.mxu0 0.0
  %3149 = vmatprep.subr.mxu0 0.0
  %3150 = vmatpush1.msra.mxu0 0.0
  %3151 = vmatprep.mubr.f32.mxu0 0.0
  %3152 = vmatmul.mubr.f32.gmra.mrb[0].mxu0 %v3082
  %v3153 = vpop.f32.mrb[0].mxu0
  %v3154 = vadd.f32 %v1663, %v3153
  %v3155 = vpop.f32.mrb[0].mxu0
  %3156 = vmatprep.mubr.f32.mxu0 0.0
  %3157 = vmatmul.mubr.f32.gmra.mrb[0].mxu0 %v3085
  %v3158 = vpop.f32.mrb[0].mxu0
  %v3159 = vadd.f32 %v1668, %v3158
  %v3160 = vpop.f32.mrb[0].mxu0
  %3161 = vdwg.mxu0
  %v3162 = vld [vmem:[%s12] sm:$0xff]
  %v3163 = vld [vmem:[%s12 + $0x8] sm:$0xff]
  %v3164 = vld [vmem:[%s12 + $0x10] sm:$0xff]
  %v3165 = vld [vmem:[%s12 + $0x18] sm:$0xff]
  %v3166 = vld [vmem:[%s13] sm:$0x1]
  %v3168 = vlaneseq
  %v3169 = vshrl.u32 %v3168, 7
  %v3170 = vsub.s32 0, %v3169
  %v3171 = vrot.slane %v3166, %v3170
  %v3174 = vsel %vm172, %v3154, 0
  %v3177 = vsel %vm172, %v3159, 0
  %3179 = vmatprep.subr.mxu0 0.0
  %3180 = vmatpush1.msra.mxu0 %v3162
  %3181 = vmatprep.subr.mxu0 0.0
  %3182 = vmatpush1.msra.mxu0 %v3163
  %3183 = vmatprep.subr.mxu0 0.0
  %3184 = vmatpush1.msra.mxu0 %v3164
  %3185 = vmatprep.subr.mxu0 0.0
  %3186 = vmatpush1.msra.mxu0 %v3165
  %3187 = vmatprep.subr.mxu0 0.0
  %3188 = vmatpush1.msra.mxu0 0.0
  %3189 = vmatprep.subr.mxu0 0.0
  %3190 = vmatpush1.msra.mxu0 0.0
  %3191 = vmatprep.subr.mxu0 0.0
  %3192 = vmatpush1.msra.mxu0 0.0
  %3193 = vmatprep.subr.mxu0 0.0
  %3194 = vmatpush1.msra.mxu0 0.0
  %3195 = vmatprep.subr.mxu0 0.0
  %3196 = vmatpush1.msra.mxu0 0.0
  %3197 = vmatprep.subr.mxu0 0.0
  %3198 = vmatpush1.msra.mxu0 0.0
  %3199 = vmatprep.subr.mxu0 0.0
  %3200 = vmatpush1.msra.mxu0 0.0
  %3201 = vmatprep.subr.mxu0 0.0
  %3202 = vmatpush1.msra.mxu0 0.0
  %3203 = vmatprep.subr.mxu0 0.0
  %3204 = vmatpush1.msra.mxu0 0.0
  %3205 = vmatprep.subr.mxu0 0.0
  %3206 = vmatpush1.msra.mxu0 0.0
  %3207 = vmatprep.subr.mxu0 0.0
  %3208 = vmatpush1.msra.mxu0 0.0
  %3209 = vmatprep.subr.mxu0 0.0
  %3210 = vmatpush1.msra.mxu0 0.0
  %3211 = vmatprep.subr.mxu0 0.0
  %3212 = vmatpush1.msra.mxu0 0.0
  %3213 = vmatprep.subr.mxu0 0.0
  %3214 = vmatpush1.msra.mxu0 0.0
  %3215 = vmatprep.subr.mxu0 0.0
  %3216 = vmatpush1.msra.mxu0 0.0
  %3217 = vmatprep.subr.mxu0 0.0
  %3218 = vmatpush1.msra.mxu0 0.0
  %3219 = vmatprep.subr.mxu0 0.0
  %3220 = vmatpush1.msra.mxu0 0.0
  %3221 = vmatprep.subr.mxu0 0.0
  %3222 = vmatpush1.msra.mxu0 0.0
  %3223 = vmatprep.subr.mxu0 0.0
  %3224 = vmatpush1.msra.mxu0 0.0
  %3225 = vmatprep.subr.mxu0 0.0
  %3226 = vmatpush1.msra.mxu0 0.0
  %3227 = vmatprep.subr.mxu0 0.0
  %3228 = vmatpush1.msra.mxu0 0.0
  %3229 = vmatprep.subr.mxu0 0.0
  %3230 = vmatpush1.msra.mxu0 0.0
  %3231 = vmatprep.subr.mxu0 0.0
  %3232 = vmatpush1.msra.mxu0 0.0
  %3233 = vmatprep.subr.mxu0 0.0
  %3234 = vmatpush1.msra.mxu0 0.0
  %3235 = vmatprep.subr.mxu0 0.0
  %3236 = vmatpush1.msra.mxu0 0.0
  %3237 = vmatprep.subr.mxu0 0.0
  %3238 = vmatpush1.msra.mxu0 0.0
  %3239 = vmatprep.subr.mxu0 0.0
  %3240 = vmatpush1.msra.mxu0 0.0
  %3241 = vmatprep.subr.mxu0 0.0
  %3242 = vmatpush1.msra.mxu0 0.0
  %3243 = vmatprep.mubr.f32.mxu0 0.0
  %3244 = vmatmul.mubr.f32.gmra.mrb[0].mxu0 %v3174
  %v3245 = vpop.f32.mrb[0].mxu0
  %v3246 = vadd.f32 %v3171, %v3245
  %v3247 = vpop.f32.mrb[0].mxu0
  %3248 = vmatprep.mubr.f32.mxu0 0.0
  %3249 = vmatmul.mubr.f32.gmra.mrb[0].mxu0 %v3177
  %v3250 = vpop.f32.mrb[0].mxu0
  %v3251 = vadd.f32 %v3171, %v3250
  %v3252 = vpop.f32.mrb[0].mxu0
  %3253 = vdwg.mxu0
  %v3254 = vsub.f32 0.0, %v3246
  %v3255 = vsub.f32 0.0, %v3251
  %v3256 = vmul.f32 %v3254, 1.442695
  %v3257 = vpow.pop %v3256
  %v3258 = vmul.f32 %v3255, 1.442695
  %v3259 = vpow.pop %v3258
  %v3260 = vadd.f32 %v3257, 1.0
  %v3261 = vadd.f32 %v3259, 1.0
  %v3262 = vrcp.pop %v3260
  %v3263 = vmul.f32 1.0, %v3262
  %v3264 = vrcp.pop %v3261
  %v3265 = vmul.f32 1.0, %v3264
  %vm3266 = vcmask 23552
  %3267 = vst.msk [vmem:[%s14] sm:$0xff] %vm3266, %v3263
  %3268 = vst.msk [vmem:[%s14 + $0x8] sm:$0xff] %vm3266, %v3265
  // Predicated region
  $region58: #{net_forward.1} parent=0 // pred_check
    _
  $region59: #{net_forward.1} parent=0 // pred_check_branch
    %3270 = sbr.rel (0) target = $region61
  $region60: #{net_forward.1} parent=0 // pred_region
    _
  $region61: #{net_forward.1} parent=0 // pred_fallthru
    _
  // Predicated region
  $region62: #{net_forward.1} parent=0 // pred_check
    _
  $region63: #{net_forward.1} parent=0 // pred_check_branch
    %3272 = sbr.rel (0) target = $region65
  $region64: #{net_forward.1} parent=0 // pred_region
    _
  $region65: #{net_forward.1} parent=0 // pred_fallthru
    _

</llo_original>
